<compile_context>
chip_gen: v7x
topology: tpu7x:2x2x1
jax: 0.10.0
libtpu: 0.0.40
codegen_flags: <defaults>
</compile_context>

<pallas_src>
import functools

import jax
import jax.numpy as jnp
from jax.experimental import pallas as pl
from jax.experimental.pallas import tpu as pltpu


# ------------------------------ Pallas kernel ------------------------------

def _fused_conv_bn_relu_kernel(p_ref, w_ref, gamma_ref, beta_ref, o_ref,
                               ys_ref, sum_ref, sq_ref, scale_ref, shift_ref,
                               *, inv_m, eps):
    """Two-phase fused conv(+BN-stats) / BN+ReLU layer.

    grid = (2, num_row_tiles); both axes are sequential ("arbitrary").
      phase 0: y_tile = patches_tile @ W (bf16 in, f32 MXU accumulate) stored
               (bf16) into the VMEM-resident `ys` scratch; per-channel
               sum / sum-sq accumulated in f32 via skinny MXU matmuls.
      phase 1: at tile 0 fold the batch-norm into (scale, shift); every tile
               then applies y*scale + shift, ReLU, and writes its bf16 output
               block (lane-dense: coutp is a multiple of 128).
    """
    phase = pl.program_id(0)
    i = pl.program_id(1)

    @pl.when(phase == 0)
    def _matmul_phase():
        @pl.when(i == 0)
        def _init():
            sum_ref[...] = jnp.zeros_like(sum_ref)
            sq_ref[...] = jnp.zeros_like(sq_ref)

        y = jnp.dot(p_ref[...], w_ref[...],
                    preferred_element_type=jnp.float32)
        ys_ref[i] = y.astype(ys_ref.dtype)
        # Channel statistics on the MXU (ones @ y) rather than the XLU/VPU:
        # phase 0 is vector-slot bound (kkc is tiny) and the MXU has slack.
        ones_row = jnp.ones((1, y.shape[0]), jnp.float32)
        sum_ref[...] += jnp.dot(ones_row, y,
                                preferred_element_type=jnp.float32)
        # TODO(synk): E[y^2]-E[y]^2 can cancel catastrophically when
        # |mean| >> std; switch to a mean-subtracted second pass over ys_ref
        # (or Welford-style accumulation) if activations grow large.
        sq_ref[...] += jnp.dot(ones_row, y * y,
                               preferred_element_type=jnp.float32)

    @pl.when(phase == 1)
    def _bn_relu_phase():
        @pl.when(i == 0)
        def _fold():
            mean = sum_ref[...] * inv_m
            var = jnp.maximum(sq_ref[...] * inv_m - mean * mean, 0.0)
            scale = gamma_ref[...] * jax.lax.rsqrt(var + eps)   # EUP rsqrt
            scale_ref[...] = scale
            shift_ref[...] = beta_ref[...] - mean * scale

        y = ys_ref[i].astype(jnp.float32)
        o_ref[...] = jnp.maximum(y * scale_ref[...] + shift_ref[...],
                                 0.0).astype(o_ref.dtype)


# ------------------------------- host glue --------------------------------

def _round_up(x, m):
    return (x + m - 1) // m * m


def _vmem_budget_bytes():
    """Generation-aware scoped-VMEM ceiling (~78% of physical capacity)."""
    cap = None
    try:
        cap = getattr(pltpu.get_tpu_info(), "vmem_capacity_bytes", None)
    except Exception:
        cap = None
    if not cap:
        cap = 128 * 1024 * 1024          # v5e / v6e default
    return int(cap * 0.78)               # ~100 MiB on 128 MiB parts, ~50 MiB on v7x


def _im2col(x_nhwc, k, stride, pad):
    """Lower a KxK conv input to an im2col matrix of shape (N*Ho*Wo, K*K*C)."""
    # TODO(synk): this host-side im2col materializes ~9x the input bytes and is
    # the dominant HBM cost; replace it with in-kernel im2col (manual halo-DMA
    # of padded NHWC row slabs + 9 shifted sub-block copies into a VMEM patch
    # tile, with kkc zero-padded to 128 there for lane-dense / full-depth MXU
    # operands).  Kept host-side in this revision to preserve a known-good
    # lowering path.
    n, h, w, c = x_nhwc.shape
    xp = jnp.pad(x_nhwc, ((0, 0), (pad, pad), (pad, pad), (0, 0)))
    ho = (h + 2 * pad - k) // stride + 1
    wo = (w + 2 * pad - k) // stride + 1
    cols = []
    for kh in range(k):
        for kw in range(k):
            cols.append(xp[:, kh:kh + stride * ho:stride,
                           kw:kw + stride * wo:stride, :])
    patches = jnp.stack(cols, axis=3)              # (N, Ho, Wo, K*K, C)
    return patches.reshape(n * ho * wo, k * k * c), ho, wo


def conv_bn_relu(x_nhwc, w_oihw, bias, gamma, beta, *, stride, padding,
                 eps=1e-5, tm_cap=1024):
    """One fused Conv(kxk) + BatchNorm(batch stats) + ReLU layer via Pallas.

    Returns bf16 NHWC (layers are chained in bf16 to halve inter-layer HBM
    traffic; the caller casts the final block output back to f32).

    `bias` is accepted for API parity with nn.Conv2d but is NOT applied inside
    the kernel: a per-channel constant is exactly cancelled by the batch-stat
    BatchNorm that follows (the reference keeps it; the test checks equality).
    This fold is only valid for batch-statistics BN and because the padded
    zero rows contribute exact zeros to the statistics.
    """
    del bias
    n, h, w, cin = x_nhwc.shape
    cout = w_oihw.shape[0]
    k = w_oihw.shape[2]

    # im2col in bf16 (halves the patch-matrix HBM traffic vs f32).
    patches, ho, wo = _im2col(x_nhwc.astype(jnp.bfloat16), k, stride, padding)
    m, kkc = patches.shape

    # Lane-dense channel padding and cdiv-style row tiling/padding.
    # kkc is deliberately left unpadded: padding the host-materialized patch
    # matrix to 128 lanes would inflate the *dominant* HBM stream ~3.5x; it
    # becomes free once im2col moves in-kernel (see TODO in _im2col).
    # TODO(synk): for Cout >> 128, add a second grid axis over Cout tiles so
    # the weight block / ys column width stay at 128-256 lanes.
    coutp = _round_up(cout, 128)
    tm = min(tm_cap, _round_up(m, 128))     # multiple of 128 (bf16-safe rows)
    mp = _round_up(m, tm)
    nt = mp // tm

    patches = jnp.pad(patches, ((0, mp - m), (0, 0)))
    # (Cout, Cin, Kh, Kw) -> (Kh, Kw, Cin, Cout) -> (K*K*Cin, Coutp), matching
    # the (kh, kw, c) flattening order of the im2col patches.
    w_mat = jnp.transpose(w_oihw, (2, 3, 1, 0)).reshape(kkc, cout)
    w_mat = jnp.pad(w_mat, ((0, 0), (0, coutp - cout))).astype(jnp.bfloat16)
    g_row = jnp.pad(gamma.astype(jnp.float32)[None, :],
                    ((0, 0), (0, coutp - cout)))
    b_row = jnp.pad(beta.astype(jnp.float32)[None, :],
                    ((0, 0), (0, coutp - cout)))

    kernel = functools.partial(_fused_conv_bn_relu_kernel,
                               inv_m=1.0 / m, eps=eps)

    # VMEM budget: resident bf16 activation scratch + double-buffered I/O tiles.
    est = (nt * tm * coutp * 2        # resident ys scratch (bf16)
           + 2 * tm * kkc * 2         # double-buffered bf16 patch tiles
           + 2 * kkc * coutp * 2      # weight block
           + 2 * tm * coutp * 2       # double-buffered bf16 output tiles
           + 16 * coutp * 4)          # per-channel stat / scale / shift rows
    budget = _vmem_budget_bytes()
    if est > budget:
        # TODO(synk): stream ys through HBM (write in phase 0, re-read in
        # phase 1) instead of keeping it VMEM-resident when M is this large.
        raise NotImplementedError(
            f"resident activation scratch needs ~{est >> 20} MiB VMEM, over "
            f"the ~{budget >> 20} MiB budget for this TPU generation")
    vmem_limit = min(max(2 * est, 32 * 1024 * 1024), budget)

    out = pl.pallas_call(
        kernel,
        out_shape=jax.ShapeDtypeStruct((mp, coutp), jnp.bfloat16),
        grid_spec=pltpu.PrefetchScalarGridSpec(
            num_scalar_prefetch=0,
            grid=(2, nt),                              # (phase, row tile)
            in_specs=[
                # patches: stream row tiles in phase 0; park on the LAST
                # visited block in phase 1 so the phase transition issues no
                # spurious DMA.
                # TODO(synk): pipeline_mode=pl.Buffered(3) here if the phase-0
                # patch DMA is still exposed after the larger tm (v5e/v6e).
                pl.BlockSpec((tm, kkc),
                             lambda p, i: (i * (1 - p) + (nt - 1) * p, 0)),
                pl.BlockSpec((kkc, coutp), lambda p, i: (0, 0)),
                pl.BlockSpec((1, coutp), lambda p, i: (0, 0)),   # gamma
                pl.BlockSpec((1, coutp), lambda p, i: (0, 0)),   # beta
            ],
            # Output blocks are only written (and written back) in phase 1.
            out_specs=pl.BlockSpec((tm, coutp), lambda p, i: (i * p, 0)),
            scratch_shapes=[
                pltpu.VMEM((nt, tm, coutp), jnp.bfloat16),  # resident y (bf16)
                pltpu.VMEM((1, coutp), jnp.float32),        # channel sum
                pltpu.VMEM((1, coutp), jnp.float32),        # channel sum-sq
                pltpu.VMEM((1, coutp), jnp.float32),        # folded scale
                pltpu.VMEM((1, coutp), jnp.float32),        # folded shift
            ]),
        compiler_params=pltpu.CompilerParams(
            # Both axes carry sequential state (phase ordering + shared stat
            # accumulators). TODO(synk): on v7x, split the row axis across the
            # 2 TensorCores with per-core partial (sum, sumsq) combined before
            # the fold, and mark it CORE_PARALLEL.
            dimension_semantics=("arbitrary", "arbitrary"),
            vmem_limit_bytes=vmem_limit),
    )(patches, w_mat, g_row, b_row)

    # De-pad on the host.  With cout << 128 the padded-Coutp chained layout
    # would inflate the next layer's im2col ~coutp/cout-fold, which outweighs
    # the saved slice copy; output stays bf16 for the next layer.
    return out[:m, :cout].reshape(n, ho, wo, cout)


def block_forward(x_nchw, params, *, stride=1, padding=1, tm_cap=1024):
    """Equivalent of Block.forward. Input/output are NCHW float32 like PyTorch."""
    x = jnp.transpose(x_nchw, (0, 2, 3, 1))            # NCHW -> NHWC
    w1, b1, g1, be1, w2, b2, g2, be2 = params
    x = conv_bn_relu(x, w1, b1, g1, be1, stride=stride, padding=padding,
                     tm_cap=tm_cap)
    x = conv_bn_relu(x, w2, b2, g2, be2, stride=1, padding=padding,
                     tm_cap=tm_cap)
    # Layers are chained in bf16; present the module output as f32 (PyTorch).
    return jnp.transpose(x, (0, 3, 1, 2)).astype(jnp.float32)   # NHWC -> NCHW


# --------------------------- plain-JAX reference ---------------------------

def _ref_layer(x_nhwc, w_oihw, b, gamma, beta, stride, padding, eps=1e-5):
    # Match the kernel's MXU operand precision (bf16 operands, f32 accumulate);
    # the conv bias is kept here to demonstrate its exact cancellation under BN.
    xr = x_nhwc.astype(jnp.bfloat16).astype(jnp.float32)
    wr = jnp.transpose(w_oihw, (2, 3, 1, 0)).astype(jnp.bfloat16).astype(jnp.float32)
    y = jax.lax.conv_general_dilated(
        xr, wr, window_strides=(stride, stride),
        padding=[(padding, padding), (padding, padding)],
        dimension_numbers=("NHWC", "HWIO", "NHWC"),
        precision=jax.lax.Precision.HIGHEST) + b
    mean = y.mean(axis=(0, 1, 2))
    var = y.var(axis=(0, 1, 2))   # biased, as PyTorch uses for normalization
    yn = (y - mean) / jnp.sqrt(var + eps) * gamma + beta
    return jnp.maximum(yn, 0.0)


def _ref_block(x_nchw, params, stride=1, padding=1):
    x = jnp.transpose(x_nchw, (0, 2, 3, 1))
    w1, b1, g1, be1, w2, b2, g2, be2 = params
    x = _ref_layer(x, w1, b1, g1, be1, stride, padding)
    x = _ref_layer(x, w2, b2, g2, be2, 1, padding)
    return jnp.transpose(x, (0, 3, 1, 2))


# ---------------------------------- main -----------------------------------

if __name__ == "__main__":
    key = jax.random.PRNGKey(0)
    N, Cin, H, W = 2, 4, 16, 16
    Cout, K, S, P = 8, 3, 1, 1

    ks = jax.random.split(key, 10)
    x = jax.random.normal(ks[0], (N, Cin, H, W), dtype=jnp.float32)

    w1 = 0.1 * jax.random.normal(ks[1], (Cout, Cin, K, K), dtype=jnp.float32)
    b1 = 0.05 * jax.random.normal(ks[2], (Cout,), dtype=jnp.float32)
    g1 = 1.0 + 0.1 * jax.random.normal(ks[3], (Cout,), dtype=jnp.float32)
    be1 = 0.1 * jax.random.normal(ks[4], (Cout,), dtype=jnp.float32)
    w2 = 0.1 * jax.random.normal(ks[5], (Cout, Cout, K, K), dtype=jnp.float32)
    b2 = 0.05 * jax.random.normal(ks[6], (Cout,), dtype=jnp.float32)
    g2 = 1.0 + 0.1 * jax.random.normal(ks[7], (Cout,), dtype=jnp.float32)
    be2 = 0.1 * jax.random.normal(ks[8], (Cout,), dtype=jnp.float32)
    params = (w1, b1, g1, be1, w2, b2, g2, be2)

    fwd = jax.jit(functools.partial(block_forward, stride=S, padding=P))

    # Tolerance budget: bf16 rounding of (a) MXU operands (shared with the
    # reference), (b) the bf16 VMEM-resident pre-BN activations, and (c) the
    # bf16 inter-layer / output activations.  (b)+(c) are kernel-only and
    # bound the worst-case pointwise error at roughly 1-2e-2 for O(1) outputs.
    ATOL, RTOL = 3e-2, 2e-2

    out = jax.block_until_ready(fwd(x, params))
    ref = _ref_block(x, params, stride=S, padding=P)
    assert out.shape == (N, Cout, H, W)
    assert out.dtype == jnp.float32
    assert jnp.allclose(out, ref, atol=ATOL, rtol=RTOL), (
        "mismatch vs reference, max abs diff = %e"
        % float(jnp.max(jnp.abs(out - ref))))

    # Second shape: M = 2*20*20 = 800 is not a multiple of 128, exercising the
    # row zero-padding path (zero rows contribute nothing to the BN stats).
    x2 = jax.random.normal(ks[9], (N, Cin, 20, 20), dtype=jnp.float32)
    out2 = jax.block_until_ready(fwd(x2, params))
    ref2 = _ref_block(x2, params, stride=S, padding=P)
    assert out2.shape == (N, Cout, 20, 20)
    assert jnp.allclose(out2, ref2, atol=ATOL, rtol=RTOL), (
        "mismatch vs reference (padded case), max abs diff = %e"
        % float(jnp.max(jnp.abs(out2 - ref2))))

    # Third run forces a small row tile (tm=256 -> nt=4) to exercise multi-tile
    # stat accumulation and the phase-1 block walk.
    fwd_small_tile = jax.jit(
        functools.partial(block_forward, stride=S, padding=P, tm_cap=256))
    out3 = jax.block_until_ready(fwd_small_tile(x2, params))
    assert jnp.allclose(out3, ref2, atol=ATOL, rtol=RTOL), (
        "mismatch vs reference (multi-tile case), max abs diff = %e"
        % float(jnp.max(jnp.abs(out3 - ref2))))

    # TODO(synk): BatchNorm running-stat updates (module state mutation) are
    # not reproduced; forward uses batch statistics as in PyTorch training mode.
    print("KERNEL_OK")
</pallas_src>

<mosaic_0001>
module attributes {stable_mosaic.version = 11 : i64} {
  func.func @_fused_conv_bn_relu_kernel(%arg0: i32, %arg1: i32, %arg2: memref<512x36xbf16, #tpu.memory_space<vmem>>, %arg3: memref<36x128xbf16, #tpu.memory_space<vmem>>, %arg4: memref<1x128xf32, #tpu.memory_space<vmem>>, %arg5: memref<1x128xf32, #tpu.memory_space<vmem>>, %arg6: memref<512x128xbf16, #tpu.memory_space<vmem>>, %arg7: memref<1x512x128xbf16, #tpu.memory_space<vmem>>, %arg8: memref<1x128xf32, #tpu.memory_space<vmem>>, %arg9: memref<1x128xf32, #tpu.memory_space<vmem>>, %arg10: memref<1x128xf32, #tpu.memory_space<vmem>>, %arg11: memref<1x128xf32, #tpu.memory_space<vmem>>) attributes {dimension_semantics = [#tpu.dimension_semantics<arbitrary>, #tpu.dimension_semantics<arbitrary>], iteration_bounds = array<i64: 2, 1>, scalar_prefetch = 0 : i64, scratch_operands = 5 : i64, tpu.core_type = #tpu.core_type<tc>, window_params = [{transform_indices = @transform_0, window_bounds = array<i64: 512, 36>}, {pipeline_mode = #tpu.pipeline_mode<synchronous>, transform_indices = @transform_1, window_bounds = array<i64: 36, 128>}, {pipeline_mode = #tpu.pipeline_mode<synchronous>, transform_indices = @transform_2, window_bounds = array<i64: 1, 128>}, {pipeline_mode = #tpu.pipeline_mode<synchronous>, transform_indices = @transform_3, window_bounds = array<i64: 1, 128>}, {transform_indices = @transform_4, window_bounds = array<i64: 512, 128>}]} {
    %c0_i32 = arith.constant 0 : i32
    %0 = arith.cmpi eq, %arg0, %c0_i32 : i32
    %1 = arith.extui %0 : i1 to i32
    %c0_i32_0 = arith.constant 0 : i32
    %2 = arith.cmpi ne, %1, %c0_i32_0 : i32
    scf.if %2 {
      %c0_i32_2 = arith.constant 0 : i32
      %6 = arith.cmpi eq, %arg1, %c0_i32_2 : i32
      %7 = arith.extui %6 : i1 to i32
      %c0_i32_3 = arith.constant 0 : i32
      %8 = arith.cmpi ne, %7, %c0_i32_3 : i32
      scf.if %8 {
        %cst_20 = arith.constant 0.000000e+00 : f32
        %27 = vector.broadcast %cst_20 : f32 to vector<1x128xf32>
        %c0_21 = arith.constant 0 : index
        %c0_22 = arith.constant 0 : index
        %28 = vector.load %arg8[%c0_21, %c0_22] : memref<1x128xf32, #tpu.memory_space<vmem>>, vector<1x128xf32>
        tpu.vector_store %arg8[%c0_21, %c0_22], %27 {strides = array<i32>} : memref<1x128xf32, #tpu.memory_space<vmem>>, vector<1x128xf32>,
        %cst_23 = arith.constant 0.000000e+00 : f32
        %29 = vector.broadcast %cst_23 : f32 to vector<1x128xf32>
        %c0_24 = arith.constant 0 : index
        %c0_25 = arith.constant 0 : index
        %30 = vector.load %arg9[%c0_24, %c0_25] : memref<1x128xf32, #tpu.memory_space<vmem>>, vector<1x128xf32>
        tpu.vector_store %arg9[%c0_24, %c0_25], %29 {strides = array<i32>} : memref<1x128xf32, #tpu.memory_space<vmem>>, vector<1x128xf32>,
      } else {
      }
      %c0 = arith.constant 0 : index
      %c0_4 = arith.constant 0 : index
      %9 = vector.load %arg2[%c0, %c0_4] : memref<512x36xbf16, #tpu.memory_space<vmem>>, vector<512x36xbf16>
      %c0_5 = arith.constant 0 : index
      %c0_6 = arith.constant 0 : index
      %10 = vector.load %arg3[%c0_5, %c0_6] : memref<36x128xbf16, #tpu.memory_space<vmem>>, vector<36x128xbf16>
      %cst = arith.constant dense<0.000000e+00> : vector<512x128xf32>
      %11 = tpu.matmul %9, %10, %cst {dimension_numbers = #tpu.dot_dimension_numbers<[1], [0], [0], [1], [0, 0, 1, 1], [], []>} : vector<512x36xbf16>, vector<36x128xbf16>, vector<512x128xf32> -> vector<512x128xf32>
      %12 = arith.truncf %11 : vector<512x128xf32> to vector<512x128xbf16>
      %13 = arith.index_cast %arg1 : i32 to index
      %c0_7 = arith.constant 0 : index
      %c0_8 = arith.constant 0 : index
      %14 = vector.load %arg7[%13, %c0_7, %c0_8] : memref<1x512x128xbf16, #tpu.memory_space<vmem>>, vector<1x512x128xbf16>
      %15 = vector.shape_cast %14 : vector<1x512x128xbf16> to vector<512x128xbf16>
      %16 = vector.shape_cast %12 : vector<512x128xbf16> to vector<1x512x128xbf16>
      tpu.vector_store %arg7[%13, %c0_7, %c0_8], %16 {strides = array<i32>} : memref<1x512x128xbf16, #tpu.memory_space<vmem>>, vector<1x512x128xbf16>,
      %cst_9 = arith.constant 1.000000e+00 : f32
      %17 = vector.broadcast %cst_9 : f32 to vector<1x512xf32>
      %c0_10 = arith.constant 0 : index
      %c0_11 = arith.constant 0 : index
      %18 = vector.load %arg8[%c0_10, %c0_11] : memref<1x128xf32, #tpu.memory_space<vmem>>, vector<1x128xf32>
      %cst_12 = arith.constant dense<0.000000e+00> : vector<1x128xf32>
      %19 = tpu.matmul %17, %11, %cst_12 {dimension_numbers = #tpu.dot_dimension_numbers<[1], [0], [0], [1], [0, 0, 1, 1], [], []>} : vector<1x512xf32>, vector<512x128xf32>, vector<1x128xf32> -> vector<1x128xf32>
      %20 = arith.addf %18, %19 : vector<1x128xf32>
      %c0_13 = arith.constant 0 : index
      %c0_14 = arith.constant 0 : index
      %21 = vector.load %arg8[%c0_13, %c0_14] : memref<1x128xf32, #tpu.memory_space<vmem>>, vector<1x128xf32>
      tpu.vector_store %arg8[%c0_13, %c0_14], %20 {strides = array<i32>} : memref<1x128xf32, #tpu.memory_space<vmem>>, vector<1x128xf32>,
      %c0_15 = arith.constant 0 : index
      %c0_16 = arith.constant 0 : index
      %22 = vector.load %arg9[%c0_15, %c0_16] : memref<1x128xf32, #tpu.memory_space<vmem>>, vector<1x128xf32>
      %23 = arith.mulf %11, %11 : vector<512x128xf32>
      %cst_17 = arith.constant dense<0.000000e+00> : vector<1x128xf32>
      %24 = tpu.matmul %17, %23, %cst_17 {dimension_numbers = #tpu.dot_dimension_numbers<[1], [0], [0], [1], [0, 0, 1, 1], [], []>} : vector<1x512xf32>, vector<512x128xf32>, vector<1x128xf32> -> vector<1x128xf32>
      %25 = arith.addf %22, %24 : vector<1x128xf32>
      %c0_18 = arith.constant 0 : index
      %c0_19 = arith.constant 0 : index
      %26 = vector.load %arg9[%c0_18, %c0_19] : memref<1x128xf32, #tpu.memory_space<vmem>>, vector<1x128xf32>
      tpu.vector_store %arg9[%c0_18, %c0_19], %25 {strides = array<i32>} : memref<1x128xf32, #tpu.memory_space<vmem>>, vector<1x128xf32>,
    } else {
    }
    %c1_i32 = arith.constant 1 : i32
    %3 = arith.cmpi eq, %arg0, %c1_i32 : i32
    %4 = arith.extui %3 : i1 to i32
    %c0_i32_1 = arith.constant 0 : i32
    %5 = arith.cmpi ne, %4, %c0_i32_1 : i32
    scf.if %5 {
      %c0_i32_2 = arith.constant 0 : i32
      %6 = arith.cmpi eq, %arg1, %c0_i32_2 : i32
      %7 = arith.extui %6 : i1 to i32
      %c0_i32_3 = arith.constant 0 : i32
      %8 = arith.cmpi ne, %7, %c0_i32_3 : i32
      scf.if %8 {
        %c0_11 = arith.constant 0 : index
        %c0_12 = arith.constant 0 : index
        %23 = vector.load %arg8[%c0_11, %c0_12] : memref<1x128xf32, #tpu.memory_space<vmem>>, vector<1x128xf32>
        %cst_13 = arith.constant 0.001953125 : f32
        %24 = vector.broadcast %cst_13 : f32 to vector<1x128xf32>
        %25 = arith.mulf %23, %24 : vector<1x128xf32>
        %c0_14 = arith.constant 0 : index
        %c0_15 = arith.constant 0 : index
        %26 = vector.load %arg9[%c0_14, %c0_15] : memref<1x128xf32, #tpu.memory_space<vmem>>, vector<1x128xf32>
        %cst_16 = arith.constant 0.001953125 : f32
        %27 = vector.broadcast %cst_16 : f32 to vector<1x128xf32>
        %28 = arith.mulf %26, %27 : vector<1x128xf32>
        %29 = arith.mulf %25, %25 : vector<1x128xf32>
        %30 = arith.subf %28, %29 : vector<1x128xf32>
        %cst_17 = arith.constant 0.000000e+00 : f32
        %31 = vector.broadcast %cst_17 : f32 to vector<1x128xf32>
        %32 = arith.maximumf %30, %31 : vector<1x128xf32>
        %c0_18 = arith.constant 0 : index
        %c0_19 = arith.constant 0 : index
        %33 = vector.load %arg4[%c0_18, %c0_19] : memref<1x128xf32, #tpu.memory_space<vmem>>, vector<1x128xf32>
        %cst_20 = arith.constant 9.99999974E-6 : f32
        %34 = vector.broadcast %cst_20 : f32 to vector<1x128xf32>
        %35 = arith.addf %32, %34 : vector<1x128xf32>
        %36 = math.rsqrt %35 : vector<1x128xf32>
        %37 = arith.mulf %33, %36 : vector<1x128xf32>
        %c0_21 = arith.constant 0 : index
        %c0_22 = arith.constant 0 : index
        %38 = vector.load %arg10[%c0_21, %c0_22] : memref<1x128xf32, #tpu.memory_space<vmem>>, vector<1x128xf32>
        tpu.vector_store %arg10[%c0_21, %c0_22], %37 {strides = array<i32>} : memref<1x128xf32, #tpu.memory_space<vmem>>, vector<1x128xf32>,
        %c0_23 = arith.constant 0 : index
        %c0_24 = arith.constant 0 : index
        %39 = vector.load %arg5[%c0_23, %c0_24] : memref<1x128xf32, #tpu.memory_space<vmem>>, vector<1x128xf32>
        %40 = arith.mulf %25, %37 : vector<1x128xf32>
        %41 = arith.subf %39, %40 : vector<1x128xf32>
        %c0_25 = arith.constant 0 : index
        %c0_26 = arith.constant 0 : index
        %42 = vector.load %arg11[%c0_25, %c0_26] : memref<1x128xf32, #tpu.memory_space<vmem>>, vector<1x128xf32>
        tpu.vector_store %arg11[%c0_25, %c0_26], %41 {strides = array<i32>} : memref<1x128xf32, #tpu.memory_space<vmem>>, vector<1x128xf32>,
      } else {
      }
      %9 = arith.index_cast %arg1 : i32 to index
      %c0 = arith.constant 0 : index
      %c0_4 = arith.constant 0 : index
      %10 = vector.load %arg7[%9, %c0, %c0_4] : memref<1x512x128xbf16, #tpu.memory_space<vmem>>, vector<1x512x128xbf16>
      %11 = vector.shape_cast %10 : vector<1x512x128xbf16> to vector<512x128xbf16>
      %12 = arith.extf %11 : vector<512x128xbf16> to vector<512x128xf32>
      %c0_5 = arith.constant 0 : index
      %c0_6 = arith.constant 0 : index
      %13 = vector.load %arg10[%c0_5, %c0_6] : memref<1x128xf32, #tpu.memory_space<vmem>>, vector<1x128xf32>
      %14 = vector.broadcast %13 : vector<1x128xf32> to vector<512x128xf32>
      %15 = arith.mulf %12, %14 : vector<512x128xf32>
      %c0_7 = arith.constant 0 : index
      %c0_8 = arith.constant 0 : index
      %16 = vector.load %arg11[%c0_7, %c0_8] : memref<1x128xf32, #tpu.memory_space<vmem>>, vector<1x128xf32>
      %17 = vector.broadcast %16 : vector<1x128xf32> to vector<512x128xf32>
      %18 = arith.addf %15, %17 : vector<512x128xf32>
      %cst = arith.constant 0.000000e+00 : f32
      %19 = vector.broadcast %cst : f32 to vector<512x128xf32>
      %20 = arith.maximumf %18, %19 : vector<512x128xf32>
      %21 = arith.truncf %20 : vector<512x128xf32> to vector<512x128xbf16>
      %c0_9 = arith.constant 0 : index
      %c0_10 = arith.constant 0 : index
      %22 = vector.load %arg6[%c0_9, %c0_10] : memref<512x128xbf16, #tpu.memory_space<vmem>>, vector<512x128xbf16>
      tpu.vector_store %arg6[%c0_9, %c0_10], %21 {strides = array<i32>} : memref<512x128xbf16, #tpu.memory_space<vmem>>, vector<512x128xbf16>,
    } else {
    }
    return
  }
  func.func @transform_0(%arg0: i32, %arg1: i32) -> (i32, i32) {
    %c1_i32 = arith.constant 1 : i32
    %0 = arith.subi %c1_i32, %arg0 : i32
    %1 = arith.muli %arg1, %0 : i32
    %c0_i32 = arith.constant 0 : i32
    %2 = arith.muli %c0_i32, %arg0 : i32
    %3 = arith.addi %1, %2 : i32
    %c0_i32_0 = arith.constant 0 : i32
    %c0_i32_1 = arith.constant 0 : i32
    return %3, %c0_i32_0 : i32, i32
  }
  func.func @transform_1(%arg0: i32, %arg1: i32) -> (i32, i32) {
    %c0_i32 = arith.constant 0 : i32
    %c0_i32_0 = arith.constant 0 : i32
    %c0_i32_1 = arith.constant 0 : i32
    return %c0_i32, %c0_i32_0 : i32, i32
  }
  func.func @transform_2(%arg0: i32, %arg1: i32) -> (i32, i32) {
    %c0_i32 = arith.constant 0 : i32
    %c0_i32_0 = arith.constant 0 : i32
    %c0_i32_1 = arith.constant 0 : i32
    return %c0_i32, %c0_i32_0 : i32, i32
  }
  func.func @transform_3(%arg0: i32, %arg1: i32) -> (i32, i32) {
    %c0_i32 = arith.constant 0 : i32
    %c0_i32_0 = arith.constant 0 : i32
    %c0_i32_1 = arith.constant 0 : i32
    return %c0_i32, %c0_i32_0 : i32, i32
  }
  func.func @transform_4(%arg0: i32, %arg1: i32) -> (i32, i32) {
    %0 = arith.muli %arg1, %arg0 : i32
    %c0_i32 = arith.constant 0 : i32
    %c0_i32_0 = arith.constant 0 : i32
    return %0, %c0_i32 : i32, i32
  }
}

module attributes {stable_mosaic.version = 11 : i64} {
  func.func @_fused_conv_bn_relu_kernel(%arg0: i32, %arg1: i32, %arg2: memref<512x72xbf16, #tpu.memory_space<vmem>>, %arg3: memref<72x128xbf16, #tpu.memory_space<vmem>>, %arg4: memref<1x128xf32, #tpu.memory_space<vmem>>, %arg5: memref<1x128xf32, #tpu.memory_space<vmem>>, %arg6: memref<512x128xbf16, #tpu.memory_space<vmem>>, %arg7: memref<1x512x128xbf16, #tpu.memory_space<vmem>>, %arg8: memref<1x128xf32, #tpu.memory_space<vmem>>, %arg9: memref<1x128xf32, #tpu.memory_space<vmem>>, %arg10: memref<1x128xf32, #tpu.memory_space<vmem>>, %arg11: memref<1x128xf32, #tpu.memory_space<vmem>>) attributes {dimension_semantics = [#tpu.dimension_semantics<arbitrary>, #tpu.dimension_semantics<arbitrary>], iteration_bounds = array<i64: 2, 1>, scalar_prefetch = 0 : i64, scratch_operands = 5 : i64, tpu.core_type = #tpu.core_type<tc>, window_params = [{transform_indices = @transform_0, window_bounds = array<i64: 512, 72>}, {pipeline_mode = #tpu.pipeline_mode<synchronous>, transform_indices = @transform_1, window_bounds = array<i64: 72, 128>}, {pipeline_mode = #tpu.pipeline_mode<synchronous>, transform_indices = @transform_2, window_bounds = array<i64: 1, 128>}, {pipeline_mode = #tpu.pipeline_mode<synchronous>, transform_indices = @transform_3, window_bounds = array<i64: 1, 128>}, {transform_indices = @transform_4, window_bounds = array<i64: 512, 128>}]} {
    %c0_i32 = arith.constant 0 : i32
    %0 = arith.cmpi eq, %arg0, %c0_i32 : i32
    %1 = arith.extui %0 : i1 to i32
    %c0_i32_0 = arith.constant 0 : i32
    %2 = arith.cmpi ne, %1, %c0_i32_0 : i32
    scf.if %2 {
      %c0_i32_2 = arith.constant 0 : i32
      %6 = arith.cmpi eq, %arg1, %c0_i32_2 : i32
      %7 = arith.extui %6 : i1 to i32
      %c0_i32_3 = arith.constant 0 : i32
      %8 = arith.cmpi ne, %7, %c0_i32_3 : i32
      scf.if %8 {
        %cst_20 = arith.constant 0.000000e+00 : f32
        %27 = vector.broadcast %cst_20 : f32 to vector<1x128xf32>
        %c0_21 = arith.constant 0 : index
        %c0_22 = arith.constant 0 : index
        %28 = vector.load %arg8[%c0_21, %c0_22] : memref<1x128xf32, #tpu.memory_space<vmem>>, vector<1x128xf32>
        tpu.vector_store %arg8[%c0_21, %c0_22], %27 {strides = array<i32>} : memref<1x128xf32, #tpu.memory_space<vmem>>, vector<1x128xf32>,
        %cst_23 = arith.constant 0.000000e+00 : f32
        %29 = vector.broadcast %cst_23 : f32 to vector<1x128xf32>
        %c0_24 = arith.constant 0 : index
        %c0_25 = arith.constant 0 : index
        %30 = vector.load %arg9[%c0_24, %c0_25] : memref<1x128xf32, #tpu.memory_space<vmem>>, vector<1x128xf32>
        tpu.vector_store %arg9[%c0_24, %c0_25], %29 {strides = array<i32>} : memref<1x128xf32, #tpu.memory_space<vmem>>, vector<1x128xf32>,
      } else {
      }
      %c0 = arith.constant 0 : index
      %c0_4 = arith.constant 0 : index
      %9 = vector.load %arg2[%c0, %c0_4] : memref<512x72xbf16, #tpu.memory_space<vmem>>, vector<512x72xbf16>
      %c0_5 = arith.constant 0 : index
      %c0_6 = arith.constant 0 : index
      %10 = vector.load %arg3[%c0_5, %c0_6] : memref<72x128xbf16, #tpu.memory_space<vmem>>, vector<72x128xbf16>
      %cst = arith.constant dense<0.000000e+00> : vector<512x128xf32>
      %11 = tpu.matmul %9, %10, %cst {dimension_numbers = #tpu.dot_dimension_numbers<[1], [0], [0], [1], [0, 0, 1, 1], [], []>} : vector<512x72xbf16>, vector<72x128xbf16>, vector<512x128xf32> -> vector<512x128xf32>
      %12 = arith.truncf %11 : vector<512x128xf32> to vector<512x128xbf16>
      %13 = arith.index_cast %arg1 : i32 to index
      %c0_7 = arith.constant 0 : index
      %c0_8 = arith.constant 0 : index
      %14 = vector.load %arg7[%13, %c0_7, %c0_8] : memref<1x512x128xbf16, #tpu.memory_space<vmem>>, vector<1x512x128xbf16>
      %15 = vector.shape_cast %14 : vector<1x512x128xbf16> to vector<512x128xbf16>
      %16 = vector.shape_cast %12 : vector<512x128xbf16> to vector<1x512x128xbf16>
      tpu.vector_store %arg7[%13, %c0_7, %c0_8], %16 {strides = array<i32>} : memref<1x512x128xbf16, #tpu.memory_space<vmem>>, vector<1x512x128xbf16>,
      %cst_9 = arith.constant 1.000000e+00 : f32
      %17 = vector.broadcast %cst_9 : f32 to vector<1x512xf32>
      %c0_10 = arith.constant 0 : index
      %c0_11 = arith.constant 0 : index
      %18 = vector.load %arg8[%c0_10, %c0_11] : memref<1x128xf32, #tpu.memory_space<vmem>>, vector<1x128xf32>
      %cst_12 = arith.constant dense<0.000000e+00> : vector<1x128xf32>
      %19 = tpu.matmul %17, %11, %cst_12 {dimension_numbers = #tpu.dot_dimension_numbers<[1], [0], [0], [1], [0, 0, 1, 1], [], []>} : vector<1x512xf32>, vector<512x128xf32>, vector<1x128xf32> -> vector<1x128xf32>
      %20 = arith.addf %18, %19 : vector<1x128xf32>
      %c0_13 = arith.constant 0 : index
      %c0_14 = arith.constant 0 : index
      %21 = vector.load %arg8[%c0_13, %c0_14] : memref<1x128xf32, #tpu.memory_space<vmem>>, vector<1x128xf32>
      tpu.vector_store %arg8[%c0_13, %c0_14], %20 {strides = array<i32>} : memref<1x128xf32, #tpu.memory_space<vmem>>, vector<1x128xf32>,
      %c0_15 = arith.constant 0 : index
      %c0_16 = arith.constant 0 : index
      %22 = vector.load %arg9[%c0_15, %c0_16] : memref<1x128xf32, #tpu.memory_space<vmem>>, vector<1x128xf32>
      %23 = arith.mulf %11, %11 : vector<512x128xf32>
      %cst_17 = arith.constant dense<0.000000e+00> : vector<1x128xf32>
      %24 = tpu.matmul %17, %23, %cst_17 {dimension_numbers = #tpu.dot_dimension_numbers<[1], [0], [0], [1], [0, 0, 1, 1], [], []>} : vector<1x512xf32>, vector<512x128xf32>, vector<1x128xf32> -> vector<1x128xf32>
      %25 = arith.addf %22, %24 : vector<1x128xf32>
      %c0_18 = arith.constant 0 : index
      %c0_19 = arith.constant 0 : index
      %26 = vector.load %arg9[%c0_18, %c0_19] : memref<1x128xf32, #tpu.memory_space<vmem>>, vector<1x128xf32>
      tpu.vector_store %arg9[%c0_18, %c0_19], %25 {strides = array<i32>} : memref<1x128xf32, #tpu.memory_space<vmem>>, vector<1x128xf32>,
    } else {
    }
    %c1_i32 = arith.constant 1 : i32
    %3 = arith.cmpi eq, %arg0, %c1_i32 : i32
    %4 = arith.extui %3 : i1 to i32
    %c0_i32_1 = arith.constant 0 : i32
    %5 = arith.cmpi ne, %4, %c0_i32_1 : i32
    scf.if %5 {
      %c0_i32_2 = arith.constant 0 : i32
      %6 = arith.cmpi eq, %arg1, %c0_i32_2 : i32
      %7 = arith.extui %6 : i1 to i32
      %c0_i32_3 = arith.constant 0 : i32
      %8 = arith.cmpi ne, %7, %c0_i32_3 : i32
      scf.if %8 {
        %c0_11 = arith.constant 0 : index
        %c0_12 = arith.constant 0 : index
        %23 = vector.load %arg8[%c0_11, %c0_12] : memref<1x128xf32, #tpu.memory_space<vmem>>, vector<1x128xf32>
        %cst_13 = arith.constant 0.001953125 : f32
        %24 = vector.broadcast %cst_13 : f32 to vector<1x128xf32>
        %25 = arith.mulf %23, %24 : vector<1x128xf32>
        %c0_14 = arith.constant 0 : index
        %c0_15 = arith.constant 0 : index
        %26 = vector.load %arg9[%c0_14, %c0_15] : memref<1x128xf32, #tpu.memory_space<vmem>>, vector<1x128xf32>
        %cst_16 = arith.constant 0.001953125 : f32
        %27 = vector.broadcast %cst_16 : f32 to vector<1x128xf32>
        %28 = arith.mulf %26, %27 : vector<1x128xf32>
        %29 = arith.mulf %25, %25 : vector<1x128xf32>
        %30 = arith.subf %28, %29 : vector<1x128xf32>
        %cst_17 = arith.constant 0.000000e+00 : f32
        %31 = vector.broadcast %cst_17 : f32 to vector<1x128xf32>
        %32 = arith.maximumf %30, %31 : vector<1x128xf32>
        %c0_18 = arith.constant 0 : index
        %c0_19 = arith.constant 0 : index
        %33 = vector.load %arg4[%c0_18, %c0_19] : memref<1x128xf32, #tpu.memory_space<vmem>>, vector<1x128xf32>
        %cst_20 = arith.constant 9.99999974E-6 : f32
        %34 = vector.broadcast %cst_20 : f32 to vector<1x128xf32>
        %35 = arith.addf %32, %34 : vector<1x128xf32>
        %36 = math.rsqrt %35 : vector<1x128xf32>
        %37 = arith.mulf %33, %36 : vector<1x128xf32>
        %c0_21 = arith.constant 0 : index
        %c0_22 = arith.constant 0 : index
        %38 = vector.load %arg10[%c0_21, %c0_22] : memref<1x128xf32, #tpu.memory_space<vmem>>, vector<1x128xf32>
        tpu.vector_store %arg10[%c0_21, %c0_22], %37 {strides = array<i32>} : memref<1x128xf32, #tpu.memory_space<vmem>>, vector<1x128xf32>,
        %c0_23 = arith.constant 0 : index
        %c0_24 = arith.constant 0 : index
        %39 = vector.load %arg5[%c0_23, %c0_24] : memref<1x128xf32, #tpu.memory_space<vmem>>, vector<1x128xf32>
        %40 = arith.mulf %25, %37 : vector<1x128xf32>
        %41 = arith.subf %39, %40 : vector<1x128xf32>
        %c0_25 = arith.constant 0 : index
        %c0_26 = arith.constant 0 : index
        %42 = vector.load %arg11[%c0_25, %c0_26] : memref<1x128xf32, #tpu.memory_space<vmem>>, vector<1x128xf32>
        tpu.vector_store %arg11[%c0_25, %c0_26], %41 {strides = array<i32>} : memref<1x128xf32, #tpu.memory_space<vmem>>, vector<1x128xf32>,
      } else {
      }
      %9 = arith.index_cast %arg1 : i32 to index
      %c0 = arith.constant 0 : index
      %c0_4 = arith.constant 0 : index
      %10 = vector.load %arg7[%9, %c0, %c0_4] : memref<1x512x128xbf16, #tpu.memory_space<vmem>>, vector<1x512x128xbf16>
      %11 = vector.shape_cast %10 : vector<1x512x128xbf16> to vector<512x128xbf16>
      %12 = arith.extf %11 : vector<512x128xbf16> to vector<512x128xf32>
      %c0_5 = arith.constant 0 : index
      %c0_6 = arith.constant 0 : index
      %13 = vector.load %arg10[%c0_5, %c0_6] : memref<1x128xf32, #tpu.memory_space<vmem>>, vector<1x128xf32>
      %14 = vector.broadcast %13 : vector<1x128xf32> to vector<512x128xf32>
      %15 = arith.mulf %12, %14 : vector<512x128xf32>
      %c0_7 = arith.constant 0 : index
      %c0_8 = arith.constant 0 : index
      %16 = vector.load %arg11[%c0_7, %c0_8] : memref<1x128xf32, #tpu.memory_space<vmem>>, vector<1x128xf32>
      %17 = vector.broadcast %16 : vector<1x128xf32> to vector<512x128xf32>
      %18 = arith.addf %15, %17 : vector<512x128xf32>
      %cst = arith.constant 0.000000e+00 : f32
      %19 = vector.broadcast %cst : f32 to vector<512x128xf32>
      %20 = arith.maximumf %18, %19 : vector<512x128xf32>
      %21 = arith.truncf %20 : vector<512x128xf32> to vector<512x128xbf16>
      %c0_9 = arith.constant 0 : index
      %c0_10 = arith.constant 0 : index
      %22 = vector.load %arg6[%c0_9, %c0_10] : memref<512x128xbf16, #tpu.memory_space<vmem>>, vector<512x128xbf16>
      tpu.vector_store %arg6[%c0_9, %c0_10], %21 {strides = array<i32>} : memref<512x128xbf16, #tpu.memory_space<vmem>>, vector<512x128xbf16>,
    } else {
    }
    return
  }
  func.func @transform_0(%arg0: i32, %arg1: i32) -> (i32, i32) {
    %c1_i32 = arith.constant 1 : i32
    %0 = arith.subi %c1_i32, %arg0 : i32
    %1 = arith.muli %arg1, %0 : i32
    %c0_i32 = arith.constant 0 : i32
    %2 = arith.muli %c0_i32, %arg0 : i32
    %3 = arith.addi %1, %2 : i32
    %c0_i32_0 = arith.constant 0 : i32
    %c0_i32_1 = arith.constant 0 : i32
    return %3, %c0_i32_0 : i32, i32
  }
  func.func @transform_1(%arg0: i32, %arg1: i32) -> (i32, i32) {
    %c0_i32 = arith.constant 0 : i32
    %c0_i32_0 = arith.constant 0 : i32
    %c0_i32_1 = arith.constant 0 : i32
    return %c0_i32, %c0_i32_0 : i32, i32
  }
  func.func @transform_2(%arg0: i32, %arg1: i32) -> (i32, i32) {
    %c0_i32 = arith.constant 0 : i32
    %c0_i32_0 = arith.constant 0 : i32
    %c0_i32_1 = arith.constant 0 : i32
    return %c0_i32, %c0_i32_0 : i32, i32
  }
  func.func @transform_3(%arg0: i32, %arg1: i32) -> (i32, i32) {
    %c0_i32 = arith.constant 0 : i32
    %c0_i32_0 = arith.constant 0 : i32
    %c0_i32_1 = arith.constant 0 : i32
    return %c0_i32, %c0_i32_0 : i32, i32
  }
  func.func @transform_4(%arg0: i32, %arg1: i32) -> (i32, i32) {
    %0 = arith.muli %arg1, %arg0 : i32
    %c0_i32 = arith.constant 0 : i32
    %c0_i32_0 = arith.constant 0 : i32
    return %0, %c0_i32 : i32, i32
  }
}

</mosaic_0001>

<llo_original>
// kernel: block_forward.2
$region0: #{block_forward.2}
  #allocation0 [shape = 'u32[]', space=smem, size = 0x4, offset = 0x4, fixed_abs, tag = 'smem constant byte address 0x4 - core index']
  #allocation1 [shape = 'u32[144,128]{1,0:T(1,128)}', space=vmem, size = 0x12000, scoped, tag = 'internal scratch']
  #allocation2 [shape = 'bf16[1,512,128]{2,1,0:T(16,128)(2,1)}', space=vmem, size = 0x20000, scoped, tag = 'scratch operand']
  #allocation3 [shape = 'f32[1,128]{1,0:T(1,128)}', space=vmem, size = 0x200, scoped, tag = 'scratch operand']
  #allocation4 [shape = 'f32[1,128]{1,0:T(1,128)}', space=vmem, size = 0x200, scoped, tag = 'scratch operand']
  #allocation5 [shape = 'f32[1,128]{1,0:T(1,128)}', space=vmem, size = 0x200, scoped, tag = 'scratch operand']
  #allocation6 [shape = 'f32[1,128]{1,0:T(1,128)}', space=vmem, size = 0x200, scoped, tag = 'scratch operand']
  %s0 = inlined_call_operand.vmem [shape: bf16[512,36], index: 0, kind: input, shape index: {}]
  %s1 = inlined_call_operand.vmem [shape: bf16[36,128], index: 1, kind: input, shape index: {}]
  %s2 = inlined_call_operand.vmem [shape: f32[1,128], index: 2, kind: input, shape index: {}]
  %s3 = inlined_call_operand.vmem [shape: f32[1,128], index: 3, kind: input, shape index: {}]
  %s4 = inlined_call_operand.vmem [shape: bf16[512,128], index: 4, kind: output, shape index: {}]
  %s5 = sld [smem:[#allocation0]]
  $region65: #{block_forward.2} parent=0
    _
  %s7 = ssub.s32 1, %s5
  %s8 = scalar_select 0, %s7, %s5
  loop: start=0, step=1, limit=4
  $region2: #{block_forward.2} parent=0 // loop_pre_header
    _
  $region3: #{block_forward.2} parent=0 // loop_header
    %s10 = sphi 0, %s14
    %p11 = scmp.ge.s32.totalorder %s10, 4
    %s17 = sphi 0, %s29
    %s18 = sphi 0, %s25
    %s19 = sphi 0, %s17
    %s20 = sphi 0, %s18
    %s21 = sphi 0, %s19
    %s22 = sphi 0, %s20
    %s36 = sphi 0, %s38
    %s39 = sphi 0, %s36
    %s40 = sphi 0, %s39
    %s56 = sphi 0, %s40
    %s60 = sphi 0, %s60
    %s62 = sphi 0, %s60
    %s63 = sphi 0, %s62
    %s77 = sphi 0, %s63
    %s81 = sphi 0, %s81
    %s83 = sphi 0, %s81
    %s84 = sphi 0, %s83
    %s98 = sphi 0, %s84
    %s102 = sphi 0, %s102
    %s104 = sphi 0, %s102
    %s105 = sphi 0, %s104
    %s119 = sphi 0, %s105
    %s127 = sphi 0, %s129
    %s130 = sphi 0, %s127
    %s131 = sphi 0, %s130
    %s147 = sphi 0, %s131
  $region4: #{block_forward.2} parent=0 // loop_header_branch
    %13 = sbr.rel (%p11) target = $region8
  $region5: #{block_forward.2} parent=0 // loop_body
    %s15 = ssub.s32 %s10, 1
    %s16 = ssub.s32 %s10, 2
    %s23 = sadd.s32 1, %s18
    %p24 = scmp.ge.s32.totalorder %s23, 1
    %s25 = scalar_select %p24, 0, %s23
    %s26 = sadd.s32 1, %s17
    %s27 = scalar_select %p24, %s26, %s17
    %p28 = scmp.ge.s32.totalorder %s27, 2
    %s29 = scalar_select %p28, 0, %s27
    %s30 = ssub.s32 1, %s17
    %s31 = smul.u32 %s18, %s30
    %s32 = ssub.s32 1, %s29
    %s33 = smul.u32 %s25, %s32
    %s34 = ssub.s32 %s31, %s33
    %p35 = scmp.eq.s32.totalorder %s34, 0
    %s37 = sadd.s32 %s36, 1
    %s38 = scalar_select %p35, %s36, %s37
    %p41 = pneg %p35
    %p42 = scmp.eq.s32.totalorder %s10, 1
    %p43 = por %p41, %p42
    %p44 = scmp.ne.s32.totalorder %s36, %s39
    %p45 = scmp.eq.s32.totalorder %s10, 0
    %p46 = por %p44, %p45
    %p47 = scmp.ne.s32.totalorder %s36, %s39
    %p48 = scmp.eq.s32.totalorder %s15, 1
    %p49 = por %p47, %p48
    %p50 = scmp.ne.s32.totalorder %s39, %s40
    %p51 = scmp.eq.s32.totalorder %s15, 0
    %p52 = por %p50, %p51
    %p53 = scmp.ne.s32.totalorder %s39, %s40
    %p54 = scmp.eq.s32.totalorder %s16, 1
    %p55 = por %p53, %p54
    %p57 = scmp.ne.s32.totalorder %s40, %s56
    %p58 = scmp.eq.s32.totalorder %s16, 0
    %p59 = por %p57, %p58
    %s61 = sadd.s32 %s60, 1
    %p64 = scmp.eq.s32.totalorder %s10, 1
    %p65 = scmp.ne.s32.totalorder %s60, %s62
    %p66 = scmp.eq.s32.totalorder %s10, 0
    %p67 = por %p65, %p66
    %p68 = scmp.ne.s32.totalorder %s60, %s62
    %p69 = scmp.eq.s32.totalorder %s15, 1
    %p70 = por %p68, %p69
    %p71 = scmp.ne.s32.totalorder %s62, %s63
    %p72 = scmp.eq.s32.totalorder %s15, 0
    %p73 = por %p71, %p72
    %p74 = scmp.ne.s32.totalorder %s62, %s63
    %p75 = scmp.eq.s32.totalorder %s16, 1
    %p76 = por %p74, %p75
    %p78 = scmp.ne.s32.totalorder %s63, %s77
    %p79 = scmp.eq.s32.totalorder %s16, 0
    %p80 = por %p78, %p79
    %s82 = sadd.s32 %s81, 1
    %p85 = scmp.eq.s32.totalorder %s10, 1
    %p86 = scmp.ne.s32.totalorder %s81, %s83
    %p87 = scmp.eq.s32.totalorder %s10, 0
    %p88 = por %p86, %p87
    %p89 = scmp.ne.s32.totalorder %s81, %s83
    %p90 = scmp.eq.s32.totalorder %s15, 1
    %p91 = por %p89, %p90
    %p92 = scmp.ne.s32.totalorder %s83, %s84
    %p93 = scmp.eq.s32.totalorder %s15, 0
    %p94 = por %p92, %p93
    %p95 = scmp.ne.s32.totalorder %s83, %s84
    %p96 = scmp.eq.s32.totalorder %s16, 1
    %p97 = por %p95, %p96
    %p99 = scmp.ne.s32.totalorder %s84, %s98
    %p100 = scmp.eq.s32.totalorder %s16, 0
    %p101 = por %p99, %p100
    %s103 = sadd.s32 %s102, 1
    %p106 = scmp.eq.s32.totalorder %s10, 1
    %p107 = scmp.ne.s32.totalorder %s102, %s104
    %p108 = scmp.eq.s32.totalorder %s10, 0
    %p109 = por %p107, %p108
    %p110 = scmp.ne.s32.totalorder %s102, %s104
    %p111 = scmp.eq.s32.totalorder %s15, 1
    %p112 = por %p110, %p111
    %p113 = scmp.ne.s32.totalorder %s104, %s105
    %p114 = scmp.eq.s32.totalorder %s15, 0
    %p115 = por %p113, %p114
    %p116 = scmp.ne.s32.totalorder %s104, %s105
    %p117 = scmp.eq.s32.totalorder %s16, 1
    %p118 = por %p116, %p117
    %p120 = scmp.ne.s32.totalorder %s105, %s119
    %p121 = scmp.eq.s32.totalorder %s16, 0
    %p122 = por %p120, %p121
    %s123 = smul.u32 %s18, %s17
    %s124 = smul.u32 %s25, %s29
    %s125 = ssub.s32 %s123, %s124
    %p126 = scmp.eq.s32.totalorder %s125, 0
    %s128 = sadd.s32 %s127, 1
    %s129 = scalar_select %p126, %s127, %s128
    %p132 = pneg %p126
    %p133 = scmp.eq.s32.totalorder %s10, 1
    %p134 = por %p132, %p133
    %p135 = scmp.ne.s32.totalorder %s127, %s130
    %p136 = scmp.eq.s32.totalorder %s10, 0
    %p137 = por %p135, %p136
    %p138 = scmp.ne.s32.totalorder %s127, %s130
    %p139 = scmp.eq.s32.totalorder %s15, 1
    %p140 = por %p138, %p139
    %p141 = scmp.ne.s32.totalorder %s130, %s131
    %p142 = scmp.eq.s32.totalorder %s15, 0
    %p143 = por %p141, %p142
    %p144 = scmp.ne.s32.totalorder %s130, %s131
    %p145 = scmp.eq.s32.totalorder %s16, 1
    %p146 = por %p144, %p145
    %p148 = scmp.ne.s32.totalorder %s131, %s147
    %p149 = scmp.eq.s32.totalorder %s16, 0
    %p150 = por %p148, %p149
    %p151 = scmp.le.s32.totalorder 1, %s10
    %p152 = scmp.lt.s32.totalorder %s10, 3
    %p153 = pnand %p151, %p152
    %p154 = pneg %p153
    // Predicated region
    $region9: #{block_forward.2} parent=5 // pred_check
      _
    $region10: #{block_forward.2} parent=5 // pred_check_branch
      %156 = sbr.rel (%p153) target = $region12
    $region11: #{block_forward.2} parent=5 // pred_region
      %s157 = ssub.s32 %s10, 1
      // Predicated region
      $region13: #{block_forward.2} parent=11 // pred_check
        %p158 = pneg %p73
      $region14: #{block_forward.2} parent=11 // pred_check_branch
        %160 = sbr.rel (%p158) target = $region16
      $region15: #{block_forward.2} parent=11 // pred_region
        _
      $region16: #{block_forward.2} parent=11 // pred_fallthru
        _
      // Predicated region
      $region17: #{block_forward.2} parent=11 // pred_check
        %p161 = pneg %p94
      $region18: #{block_forward.2} parent=11 // pred_check_branch
        %163 = sbr.rel (%p161) target = $region20
      $region19: #{block_forward.2} parent=11 // pred_region
        _
      $region20: #{block_forward.2} parent=11 // pred_fallthru
        _
      // Predicated region
      $region21: #{block_forward.2} parent=11 // pred_check
        %p164 = pneg %p115
      $region22: #{block_forward.2} parent=11 // pred_check_branch
        %166 = sbr.rel (%p164) target = $region24
      $region23: #{block_forward.2} parent=11 // pred_region
        _
      $region24: #{block_forward.2} parent=11 // pred_fallthru
        _
    $region12: #{block_forward.2} parent=5 // pred_fallthru
      _
    %p167 = scmp.lt.s32.totalorder %s10, 2
    // Predicated region
    $region25: #{block_forward.2} parent=5 // pred_check
      %p168 = pneg %p167
    $region26: #{block_forward.2} parent=5 // pred_check_branch
      %170 = sbr.rel (%p168) target = $region28
    $region27: #{block_forward.2} parent=5 // pred_region
      // Predicated region
      $region29: #{block_forward.2} parent=27 // pred_check
        %p171 = pneg %p46
      $region30: #{block_forward.2} parent=27 // pred_check_branch
        %173 = sbr.rel (%p171) target = $region32
      $region31: #{block_forward.2} parent=27 // pred_region
        %s174 = ssub.s32 1, %s17
        %s175 = smul.u32 %s18, %s174
        %s176 = smul.u32 64, %s175
        %p177 = scmp.lt.s32.totalorder %s176, 63
        %s178 = scalar_select %p177, %s176, 63
        %s179 = smul.addr %s178, 4
        %s180 = scalar_lea.vmem %s0, %s179
        %s181 = ssub.s32 1, %s17
        %s182 = smul.u32 %s18, %s181
        %s183 = smul.u32 64, %s182
      $region32: #{block_forward.2} parent=27 // pred_fallthru
        _
    $region28: #{block_forward.2} parent=5 // pred_fallthru
      _
    %p184 = scmp.le.s32.totalorder 1, %s10
    %p185 = scmp.lt.s32.totalorder %s10, 3
    %p186 = pnand %p184, %p185
    %p187 = pneg %p186
    // Predicated region
    $region33: #{block_forward.2} parent=5 // pred_check
      _
    $region34: #{block_forward.2} parent=5 // pred_check_branch
      %189 = sbr.rel (%p186) target = $region36
    $region35: #{block_forward.2} parent=5 // pred_region
      %s190 = ssub.s32 %s10, 1
      %s191 = ssub.s32 1, %s19
      %s192 = smul.u32 %s20, %s191
      %s193 = smul.u32 64, %s192
      %p194 = scmp.lt.s32.totalorder %s193, 63
      %s195 = scalar_select %p194, %s193, 63
      %s196 = smul.addr %s195, 4
      %s197 = scalar_lea.vmem %s0, %s196
      %p198 = pneg %p52
      %p199 = pneg %p49
      %p200 = pneg %p73
      %p201 = pneg %p70
      %p202 = pneg %p94
      %p203 = pneg %p91
      %p204 = pneg %p115
      %p205 = pneg %p112
      %p206 = pneg %p143
      %p207 = pneg %p140
      %s208 = smul.u32 %s20, %s19
      %s209 = smul.u32 64, %s208
      %p210 = scmp.lt.s32.totalorder %s209, 63
      %s211 = scalar_select %p210, %s209, 63
      %s212 = smul.addr %s211, 4
      %s213 = scalar_lea.vmem %s4, %s212
      %s214 = ssub.s32 1, %s19
      %s215 = smul.u32 %s20, %s214
      %s216 = smul.u32 64, %s215
      %p217 = scmp.lt.s32.totalorder %s216, 63
      %s218 = scalar_select %p217, %s216, 63
      %s219 = smul.addr %s218, 4
      %s220 = scalar_lea.vmem %s0, %s219
      %s221 = ssub.s32 1, %s19
      %s222 = smul.u32 %s20, %s221
      %s223 = smul.u32 64, %s222
      %s224 = smul.u32 %s20, %s19
      %s225 = smul.u32 64, %s224
      %p226 = scmp.lt.s32.totalorder %s225, 63
      %s227 = scalar_select %p226, %s225, 63
      %s228 = smul.addr %s227, 4
      %s229 = scalar_lea.vmem %s4, %s228
      %s230 = smul.u32 %s20, %s19
      %s231 = smul.u32 64, %s230
      %p233 = scmp.eq.s32.totalorder %s19, 0
      // Predicated region
      $region37: #{block_forward.2} parent=35 // pred_check
        %p234 = pneg %p233
      $region38: #{block_forward.2} parent=35 // pred_check_branch
        %236 = sbr.rel (%p234) target = $region40
      $region39: #{block_forward.2} parent=35 // pred_region
        %p237 = scmp.eq.s32.totalorder %s20, 0
        // Predicated region
        $region41: #{block_forward.2} parent=39 // pred_check
          %p238 = pneg %p237
        $region42: #{block_forward.2} parent=39 // pred_check_branch
          %240 = sbr.rel (%p238) target = $region44
        $region43: #{block_forward.2} parent=39 // pred_region
          %241 = vst [vmem:[#allocation3] sm:$0x1] 0.0
          %242 = vst [vmem:[#allocation4] sm:$0x1] 0.0
        $region44: #{block_forward.2} parent=39 // pred_fallthru
          _
        %v243 = vld [vmem:[%s220] sm:$0xf]
        %v244 = vld [vmem:[%s220 + $0x4] sm:$0xf]
        %v245 = vld [vmem:[%s220 + $0x8] sm:$0xf]
        %v246 = vld [vmem:[%s220 + $0xc] sm:$0xf]
        %v247 = vld [vmem:[%s220 + $0x10] sm:$0xf]
        %v248 = vld [vmem:[%s220 + $0x14] sm:$0xf]
        %v249 = vld [vmem:[%s220 + $0x18] sm:$0xf]
        %v250 = vld [vmem:[%s220 + $0x1c] sm:$0xf]
        %v251 = vld [vmem:[%s220 + $0x20] sm:$0xf]
        %v252 = vld [vmem:[%s220 + $0x24] sm:$0xf]
        %v253 = vld [vmem:[%s220 + $0x28] sm:$0xf]
        %v254 = vld [vmem:[%s220 + $0x2c] sm:$0xf]
        %v255 = vld [vmem:[%s220 + $0x30] sm:$0xf]
        %v256 = vld [vmem:[%s220 + $0x34] sm:$0xf]
        %v257 = vld [vmem:[%s220 + $0x38] sm:$0xf]
        %v258 = vld [vmem:[%s220 + $0x3c] sm:$0xf]
        %v259 = vld [vmem:[%s220 + $0x40] sm:$0xf]
        %v260 = vld [vmem:[%s220 + $0x44] sm:$0xf]
        %v261 = vld [vmem:[%s220 + $0x48] sm:$0xf]
        %v262 = vld [vmem:[%s220 + $0x4c] sm:$0xf]
        %v263 = vld [vmem:[%s220 + $0x50] sm:$0xf]
        %v264 = vld [vmem:[%s220 + $0x54] sm:$0xf]
        %v265 = vld [vmem:[%s220 + $0x58] sm:$0xf]
        %v266 = vld [vmem:[%s220 + $0x5c] sm:$0xf]
        %v267 = vld [vmem:[%s220 + $0x60] sm:$0xf]
        %v268 = vld [vmem:[%s220 + $0x64] sm:$0xf]
        %v269 = vld [vmem:[%s220 + $0x68] sm:$0xf]
        %v270 = vld [vmem:[%s220 + $0x6c] sm:$0xf]
        %v271 = vld [vmem:[%s220 + $0x70] sm:$0xf]
        %v272 = vld [vmem:[%s220 + $0x74] sm:$0xf]
        %v273 = vld [vmem:[%s220 + $0x78] sm:$0xf]
        %v274 = vld [vmem:[%s220 + $0x7c] sm:$0xf]
        %v275 = vld [vmem:[%s220 + $0x80] sm:$0xf]
        %v276 = vld [vmem:[%s220 + $0x84] sm:$0xf]
        %v277 = vld [vmem:[%s220 + $0x88] sm:$0xf]
        %v278 = vld [vmem:[%s220 + $0x8c] sm:$0xf]
        %v279 = vld [vmem:[%s220 + $0x90] sm:$0xf]
        %v280 = vld [vmem:[%s220 + $0x94] sm:$0xf]
        %v281 = vld [vmem:[%s220 + $0x98] sm:$0xf]
        %v282 = vld [vmem:[%s220 + $0x9c] sm:$0xf]
        %v283 = vld [vmem:[%s220 + $0xa0] sm:$0xf]
        %v284 = vld [vmem:[%s220 + $0xa4] sm:$0xf]
        %v285 = vld [vmem:[%s220 + $0xa8] sm:$0xf]
        %v286 = vld [vmem:[%s220 + $0xac] sm:$0xf]
        %v287 = vld [vmem:[%s220 + $0xb0] sm:$0xf]
        %v288 = vld [vmem:[%s220 + $0xb4] sm:$0xf]
        %v289 = vld [vmem:[%s220 + $0xb8] sm:$0xf]
        %v290 = vld [vmem:[%s220 + $0xbc] sm:$0xf]
        %v291 = vld [vmem:[%s220 + $0xc0] sm:$0xf]
        %v292 = vld [vmem:[%s220 + $0xc4] sm:$0xf]
        %v293 = vld [vmem:[%s220 + $0xc8] sm:$0xf]
        %v294 = vld [vmem:[%s220 + $0xcc] sm:$0xf]
        %v295 = vld [vmem:[%s220 + $0xd0] sm:$0xf]
        %v296 = vld [vmem:[%s220 + $0xd4] sm:$0xf]
        %v297 = vld [vmem:[%s220 + $0xd8] sm:$0xf]
        %v298 = vld [vmem:[%s220 + $0xdc] sm:$0xf]
        %v299 = vld [vmem:[%s220 + $0xe0] sm:$0xf]
        %v300 = vld [vmem:[%s220 + $0xe4] sm:$0xf]
        %v301 = vld [vmem:[%s220 + $0xe8] sm:$0xf]
        %v302 = vld [vmem:[%s220 + $0xec] sm:$0xf]
        %v303 = vld [vmem:[%s220 + $0xf0] sm:$0xf]
        %v304 = vld [vmem:[%s220 + $0xf4] sm:$0xf]
        %v305 = vld [vmem:[%s220 + $0xf8] sm:$0xf]
        %v306 = vld [vmem:[%s220 + $0xfc] sm:$0xf]
        %v307 = vld [vmem:[%s1] sm:$0xf]
        %v308 = vld [vmem:[%s1 + $0x4] sm:$0xf]
        %v309 = vld [vmem:[%s1 + $0x8] sm:$0xf]
        %v310 = vld [vmem:[%s1 + $0xc] sm:$0xf]
        %v311 = vld [vmem:[%s1 + $0x10] sm:$0x3]
        %v376 = vunpack.c.l.b16 %v243
        %v377 = vunpack.c.l.b16 %v244
        %v378 = vunpack.c.l.b16 %v245
        %v379 = vunpack.c.l.b16 %v246
        %v380 = vunpack.c.l.b16 %v247
        %v381 = vunpack.c.l.b16 %v248
        %v382 = vunpack.c.l.b16 %v249
        %v383 = vunpack.c.l.b16 %v250
        %v384 = vunpack.c.l.b16 %v251
        %v385 = vunpack.c.l.b16 %v252
        %v386 = vunpack.c.l.b16 %v253
        %v387 = vunpack.c.l.b16 %v254
        %v388 = vunpack.c.l.b16 %v255
        %v389 = vunpack.c.l.b16 %v256
        %v390 = vunpack.c.l.b16 %v257
        %v391 = vunpack.c.l.b16 %v258
        %v392 = vunpack.c.l.b16 %v259
        %v393 = vunpack.c.l.b16 %v260
        %v394 = vunpack.c.l.b16 %v261
        %v395 = vunpack.c.l.b16 %v262
        %v396 = vunpack.c.l.b16 %v263
        %v397 = vunpack.c.l.b16 %v264
        %v398 = vunpack.c.l.b16 %v265
        %v399 = vunpack.c.l.b16 %v266
        %v400 = vunpack.c.l.b16 %v267
        %v401 = vunpack.c.l.b16 %v268
        %v402 = vunpack.c.l.b16 %v269
        %v403 = vunpack.c.l.b16 %v270
        %v404 = vunpack.c.l.b16 %v271
        %v405 = vunpack.c.l.b16 %v272
        %v406 = vunpack.c.l.b16 %v273
        %v407 = vunpack.c.l.b16 %v274
        %v408 = vunpack.c.l.b16 %v275
        %v409 = vunpack.c.l.b16 %v276
        %v410 = vunpack.c.l.b16 %v277
        %v411 = vunpack.c.l.b16 %v278
        %v412 = vunpack.c.l.b16 %v279
        %v413 = vunpack.c.l.b16 %v280
        %v414 = vunpack.c.l.b16 %v281
        %v415 = vunpack.c.l.b16 %v282
        %v416 = vunpack.c.l.b16 %v283
        %v417 = vunpack.c.l.b16 %v284
        %v418 = vunpack.c.l.b16 %v285
        %v419 = vunpack.c.l.b16 %v286
        %v420 = vunpack.c.l.b16 %v287
        %v421 = vunpack.c.l.b16 %v288
        %v422 = vunpack.c.l.b16 %v289
        %v423 = vunpack.c.l.b16 %v290
        %v424 = vunpack.c.l.b16 %v291
        %v425 = vunpack.c.l.b16 %v292
        %v426 = vunpack.c.l.b16 %v293
        %v427 = vunpack.c.l.b16 %v294
        %v428 = vunpack.c.l.b16 %v295
        %v429 = vunpack.c.l.b16 %v296
        %v430 = vunpack.c.l.b16 %v297
        %v431 = vunpack.c.l.b16 %v298
        %v432 = vunpack.c.l.b16 %v299
        %v433 = vunpack.c.l.b16 %v300
        %v434 = vunpack.c.l.b16 %v301
        %v435 = vunpack.c.l.b16 %v302
        %v436 = vunpack.c.l.b16 %v303
        %v437 = vunpack.c.l.b16 %v304
        %v438 = vunpack.c.l.b16 %v305
        %v439 = vunpack.c.l.b16 %v306
        %v440 = vpack.c.b16 %v377, %v376
        %v441 = vpack.c.b16 %v379, %v378
        %v442 = vpack.c.b16 %v381, %v380
        %v443 = vpack.c.b16 %v383, %v382
        %v444 = vpack.c.b16 %v385, %v384
        %v445 = vpack.c.b16 %v387, %v386
        %v446 = vpack.c.b16 %v389, %v388
        %v447 = vpack.c.b16 %v391, %v390
        %v448 = vpack.c.b16 %v393, %v392
        %v449 = vpack.c.b16 %v395, %v394
        %v450 = vpack.c.b16 %v397, %v396
        %v451 = vpack.c.b16 %v399, %v398
        %v452 = vpack.c.b16 %v401, %v400
        %v453 = vpack.c.b16 %v403, %v402
        %v454 = vpack.c.b16 %v405, %v404
        %v455 = vpack.c.b16 %v407, %v406
        %v456 = vpack.c.b16 %v409, %v408
        %v457 = vpack.c.b16 %v411, %v410
        %v458 = vpack.c.b16 %v413, %v412
        %v459 = vpack.c.b16 %v415, %v414
        %v460 = vpack.c.b16 %v417, %v416
        %v461 = vpack.c.b16 %v419, %v418
        %v462 = vpack.c.b16 %v421, %v420
        %v463 = vpack.c.b16 %v423, %v422
        %v464 = vpack.c.b16 %v425, %v424
        %v465 = vpack.c.b16 %v427, %v426
        %v466 = vpack.c.b16 %v429, %v428
        %v467 = vpack.c.b16 %v431, %v430
        %v468 = vpack.c.b16 %v433, %v432
        %v469 = vpack.c.b16 %v435, %v434
        %v470 = vpack.c.b16 %v437, %v436
        %v471 = vpack.c.b16 %v439, %v438
        %v477 = vunpack.c.l.b16 %v307
        %v478 = vunpack.c.l.b16 %v308
        %v479 = vunpack.c.l.b16 %v309
        %v480 = vunpack.c.l.b16 %v310
        %v481 = vunpack.c.l.b16 %v311
        %v482 = vpack.c.b16 %v478, %v477
        %v483 = vpack.c.b16 %v480, %v479
        %v484 = vpack.c.b16 %v481, %v481
        %vm487 = vcmask 293888
        %v489 = vsel %vm487, %v440, 0
        %v492 = vsel %vm487, %v441, 0
        %v495 = vsel %vm487, %v442, 0
        %v498 = vsel %vm487, %v443, 0
        %v501 = vsel %vm487, %v444, 0
        %v504 = vsel %vm487, %v445, 0
        %v507 = vsel %vm487, %v446, 0
        %v510 = vsel %vm487, %v447, 0
        %v513 = vsel %vm487, %v448, 0
        %v516 = vsel %vm487, %v449, 0
        %v519 = vsel %vm487, %v450, 0
        %v522 = vsel %vm487, %v451, 0
        %v525 = vsel %vm487, %v452, 0
        %v528 = vsel %vm487, %v453, 0
        %v531 = vsel %vm487, %v454, 0
        %v534 = vsel %vm487, %v455, 0
        %v537 = vsel %vm487, %v456, 0
        %v540 = vsel %vm487, %v457, 0
        %v543 = vsel %vm487, %v458, 0
        %v546 = vsel %vm487, %v459, 0
        %v549 = vsel %vm487, %v460, 0
        %v552 = vsel %vm487, %v461, 0
        %v555 = vsel %vm487, %v462, 0
        %v558 = vsel %vm487, %v463, 0
        %v561 = vsel %vm487, %v464, 0
        %v564 = vsel %vm487, %v465, 0
        %v567 = vsel %vm487, %v466, 0
        %v570 = vsel %vm487, %v467, 0
        %v573 = vsel %vm487, %v468, 0
        %v576 = vsel %vm487, %v469, 0
        %v579 = vsel %vm487, %v470, 0
        %v582 = vsel %vm487, %v471, 0
        %vm584 = vcmask 1041408
        %v586 = vsel %vm584, %v484, 0
        %588 = vmatprep.subr.bf16.mxu0 0
        %589 = vmatpush1.bf16.msra.mxu0 %v482
        %590 = vmatprep.subr.bf16.mxu0 0
        %591 = vmatpush1.bf16.msra.mxu0 %v483
        %592 = vmatprep.subr.bf16.mxu0 0
        %593 = vmatpush1.bf16.msra.mxu0 %v586
        %594 = vmatprep.subr.bf16.mxu0 0
        %595 = vmatpush1.bf16.msra.mxu0 0
        %596 = vmatprep.subr.bf16.mxu0 0
        %597 = vmatpush1.bf16.msra.mxu0 0
        %598 = vmatprep.subr.bf16.mxu0 0
        %599 = vmatpush1.bf16.msra.mxu0 0
        %600 = vmatprep.subr.bf16.mxu0 0
        %601 = vmatpush1.bf16.msra.mxu0 0
        %602 = vmatprep.subr.bf16.mxu0 0
        %603 = vmatpush1.bf16.msra.mxu0 0
        %604 = vmatprep.subr.bf16.mxu0 0
        %605 = vmatpush1.bf16.msra.mxu0 0
        %606 = vmatprep.subr.bf16.mxu0 0
        %607 = vmatpush1.bf16.msra.mxu0 0
        %608 = vmatprep.subr.bf16.mxu0 0
        %609 = vmatpush1.bf16.msra.mxu0 0
        %610 = vmatprep.subr.bf16.mxu0 0
        %611 = vmatpush1.bf16.msra.mxu0 0
        %612 = vmatprep.subr.bf16.mxu0 0
        %613 = vmatpush1.bf16.msra.mxu0 0
        %614 = vmatprep.subr.bf16.mxu0 0
        %615 = vmatpush1.bf16.msra.mxu0 0
        %616 = vmatprep.subr.bf16.mxu0 0
        %617 = vmatpush1.bf16.msra.mxu0 0
        %618 = vmatprep.subr.bf16.mxu0 0
        %619 = vmatpush1.bf16.msra.mxu0 0
        %620 = vmatprep.mubr.bf16.mxu0 0
        %621 = vmatmul.mubr.bf16.gmra.mrb[0].mxu0 %v489
        %v622 = vpop.f32.mrb[0].mxu0
        %v623 = vadd.f32 0.0, %v622
        %v624 = vpop.f32.mrb[0].mxu0
        %v625 = vpop.f32.mrb[0].mxu0
        %v626 = vadd.f32 0.0, %v625
        %v627 = vpop.f32.mrb[0].mxu0
        %628 = vmatprep.mubr.bf16.mxu0 0
        %629 = vmatmul.mubr.bf16.gmra.mrb[0].mxu0 %v492
        %v630 = vpop.f32.mrb[0].mxu0
        %v631 = vadd.f32 0.0, %v630
        %v632 = vpop.f32.mrb[0].mxu0
        %v633 = vpop.f32.mrb[0].mxu0
        %v634 = vadd.f32 0.0, %v633
        %v635 = vpop.f32.mrb[0].mxu0
        %636 = vmatprep.mubr.bf16.mxu0 0
        %637 = vmatmul.mubr.bf16.gmra.mrb[0].mxu0 %v495
        %v638 = vpop.f32.mrb[0].mxu0
        %v639 = vadd.f32 0.0, %v638
        %v640 = vpop.f32.mrb[0].mxu0
        %v641 = vpop.f32.mrb[0].mxu0
        %v642 = vadd.f32 0.0, %v641
        %v643 = vpop.f32.mrb[0].mxu0
        %644 = vmatprep.mubr.bf16.mxu0 0
        %645 = vmatmul.mubr.bf16.gmra.mrb[0].mxu0 %v498
        %v646 = vpop.f32.mrb[0].mxu0
        %v647 = vadd.f32 0.0, %v646
        %v648 = vpop.f32.mrb[0].mxu0
        %v649 = vpop.f32.mrb[0].mxu0
        %v650 = vadd.f32 0.0, %v649
        %v651 = vpop.f32.mrb[0].mxu0
        %652 = vmatprep.mubr.bf16.mxu0 0
        %653 = vmatmul.mubr.bf16.gmra.mrb[0].mxu0 %v501
        %v654 = vpop.f32.mrb[0].mxu0
        %v655 = vadd.f32 0.0, %v654
        %v656 = vpop.f32.mrb[0].mxu0
        %v657 = vpop.f32.mrb[0].mxu0
        %v658 = vadd.f32 0.0, %v657
        %v659 = vpop.f32.mrb[0].mxu0
        %660 = vmatprep.mubr.bf16.mxu0 0
        %661 = vmatmul.mubr.bf16.gmra.mrb[0].mxu0 %v504
        %v662 = vpop.f32.mrb[0].mxu0
        %v663 = vadd.f32 0.0, %v662
        %v664 = vpop.f32.mrb[0].mxu0
        %v665 = vpop.f32.mrb[0].mxu0
        %v666 = vadd.f32 0.0, %v665
        %v667 = vpop.f32.mrb[0].mxu0
        %668 = vmatprep.mubr.bf16.mxu0 0
        %669 = vmatmul.mubr.bf16.gmra.mrb[0].mxu0 %v507
        %v670 = vpop.f32.mrb[0].mxu0
        %v671 = vadd.f32 0.0, %v670
        %v672 = vpop.f32.mrb[0].mxu0
        %v673 = vpop.f32.mrb[0].mxu0
        %v674 = vadd.f32 0.0, %v673
        %v675 = vpop.f32.mrb[0].mxu0
        %676 = vmatprep.mubr.bf16.mxu0 0
        %677 = vmatmul.mubr.bf16.gmra.mrb[0].mxu0 %v510
        %v678 = vpop.f32.mrb[0].mxu0
        %v679 = vadd.f32 0.0, %v678
        %v680 = vpop.f32.mrb[0].mxu0
        %v681 = vpop.f32.mrb[0].mxu0
        %v682 = vadd.f32 0.0, %v681
        %v683 = vpop.f32.mrb[0].mxu0
        %684 = vmatprep.mubr.bf16.mxu0 0
        %685 = vmatmul.mubr.bf16.gmra.mrb[0].mxu0 %v513
        %v686 = vpop.f32.mrb[0].mxu0
        %v687 = vadd.f32 0.0, %v686
        %v688 = vpop.f32.mrb[0].mxu0
        %v689 = vpop.f32.mrb[0].mxu0
        %v690 = vadd.f32 0.0, %v689
        %v691 = vpop.f32.mrb[0].mxu0
        %692 = vmatprep.mubr.bf16.mxu0 0
        %693 = vmatmul.mubr.bf16.gmra.mrb[0].mxu0 %v516
        %v694 = vpop.f32.mrb[0].mxu0
        %v695 = vadd.f32 0.0, %v694
        %v696 = vpop.f32.mrb[0].mxu0
        %v697 = vpop.f32.mrb[0].mxu0
        %v698 = vadd.f32 0.0, %v697
        %v699 = vpop.f32.mrb[0].mxu0
        %700 = vmatprep.mubr.bf16.mxu0 0
        %701 = vmatmul.mubr.bf16.gmra.mrb[0].mxu0 %v519
        %v702 = vpop.f32.mrb[0].mxu0
        %v703 = vadd.f32 0.0, %v702
        %v704 = vpop.f32.mrb[0].mxu0
        %v705 = vpop.f32.mrb[0].mxu0
        %v706 = vadd.f32 0.0, %v705
        %v707 = vpop.f32.mrb[0].mxu0
        %708 = vmatprep.mubr.bf16.mxu0 0
        %709 = vmatmul.mubr.bf16.gmra.mrb[0].mxu0 %v522
        %v710 = vpop.f32.mrb[0].mxu0
        %v711 = vadd.f32 0.0, %v710
        %v712 = vpop.f32.mrb[0].mxu0
        %v713 = vpop.f32.mrb[0].mxu0
        %v714 = vadd.f32 0.0, %v713
        %v715 = vpop.f32.mrb[0].mxu0
        %716 = vmatprep.mubr.bf16.mxu0 0
        %717 = vmatmul.mubr.bf16.gmra.mrb[0].mxu0 %v525
        %v718 = vpop.f32.mrb[0].mxu0
        %v719 = vadd.f32 0.0, %v718
        %v720 = vpop.f32.mrb[0].mxu0
        %v721 = vpop.f32.mrb[0].mxu0
        %v722 = vadd.f32 0.0, %v721
        %v723 = vpop.f32.mrb[0].mxu0
        %724 = vmatprep.mubr.bf16.mxu0 0
        %725 = vmatmul.mubr.bf16.gmra.mrb[0].mxu0 %v528
        %v726 = vpop.f32.mrb[0].mxu0
        %v727 = vadd.f32 0.0, %v726
        %v728 = vpop.f32.mrb[0].mxu0
        %v729 = vpop.f32.mrb[0].mxu0
        %v730 = vadd.f32 0.0, %v729
        %v731 = vpop.f32.mrb[0].mxu0
        %732 = vmatprep.mubr.bf16.mxu0 0
        %733 = vmatmul.mubr.bf16.gmra.mrb[0].mxu0 %v531
        %v734 = vpop.f32.mrb[0].mxu0
        %v735 = vadd.f32 0.0, %v734
        %v736 = vpop.f32.mrb[0].mxu0
        %v737 = vpop.f32.mrb[0].mxu0
        %v738 = vadd.f32 0.0, %v737
        %v739 = vpop.f32.mrb[0].mxu0
        %740 = vmatprep.mubr.bf16.mxu0 0
        %741 = vmatmul.mubr.bf16.gmra.mrb[0].mxu0 %v534
        %v742 = vpop.f32.mrb[0].mxu0
        %v743 = vadd.f32 0.0, %v742
        %v744 = vpop.f32.mrb[0].mxu0
        %v745 = vpop.f32.mrb[0].mxu0
        %v746 = vadd.f32 0.0, %v745
        %v747 = vpop.f32.mrb[0].mxu0
        %748 = vmatprep.mubr.bf16.mxu0 0
        %749 = vmatmul.mubr.bf16.gmra.mrb[0].mxu0 %v537
        %v750 = vpop.f32.mrb[0].mxu0
        %v751 = vadd.f32 0.0, %v750
        %v752 = vpop.f32.mrb[0].mxu0
        %v753 = vpop.f32.mrb[0].mxu0
        %v754 = vadd.f32 0.0, %v753
        %v755 = vpop.f32.mrb[0].mxu0
        %756 = vmatprep.mubr.bf16.mxu0 0
        %757 = vmatmul.mubr.bf16.gmra.mrb[0].mxu0 %v540
        %v758 = vpop.f32.mrb[0].mxu0
        %v759 = vadd.f32 0.0, %v758
        %v760 = vpop.f32.mrb[0].mxu0
        %v761 = vpop.f32.mrb[0].mxu0
        %v762 = vadd.f32 0.0, %v761
        %v763 = vpop.f32.mrb[0].mxu0
        %764 = vmatprep.mubr.bf16.mxu0 0
        %765 = vmatmul.mubr.bf16.gmra.mrb[0].mxu0 %v543
        %v766 = vpop.f32.mrb[0].mxu0
        %v767 = vadd.f32 0.0, %v766
        %v768 = vpop.f32.mrb[0].mxu0
        %v769 = vpop.f32.mrb[0].mxu0
        %v770 = vadd.f32 0.0, %v769
        %v771 = vpop.f32.mrb[0].mxu0
        %772 = vmatprep.mubr.bf16.mxu0 0
        %773 = vmatmul.mubr.bf16.gmra.mrb[0].mxu0 %v546
        %v774 = vpop.f32.mrb[0].mxu0
        %v775 = vadd.f32 0.0, %v774
        %v776 = vpop.f32.mrb[0].mxu0
        %v777 = vpop.f32.mrb[0].mxu0
        %v778 = vadd.f32 0.0, %v777
        %v779 = vpop.f32.mrb[0].mxu0
        %780 = vmatprep.mubr.bf16.mxu0 0
        %781 = vmatmul.mubr.bf16.gmra.mrb[0].mxu0 %v549
        %v782 = vpop.f32.mrb[0].mxu0
        %v783 = vadd.f32 0.0, %v782
        %v784 = vpop.f32.mrb[0].mxu0
        %v785 = vpop.f32.mrb[0].mxu0
        %v786 = vadd.f32 0.0, %v785
        %v787 = vpop.f32.mrb[0].mxu0
        %788 = vmatprep.mubr.bf16.mxu0 0
        %789 = vmatmul.mubr.bf16.gmra.mrb[0].mxu0 %v552
        %v790 = vpop.f32.mrb[0].mxu0
        %v791 = vadd.f32 0.0, %v790
        %v792 = vpop.f32.mrb[0].mxu0
        %v793 = vpop.f32.mrb[0].mxu0
        %v794 = vadd.f32 0.0, %v793
        %v795 = vpop.f32.mrb[0].mxu0
        %796 = vmatprep.mubr.bf16.mxu0 0
        %797 = vmatmul.mubr.bf16.gmra.mrb[0].mxu0 %v555
        %v798 = vpop.f32.mrb[0].mxu0
        %v799 = vadd.f32 0.0, %v798
        %v800 = vpop.f32.mrb[0].mxu0
        %v801 = vpop.f32.mrb[0].mxu0
        %v802 = vadd.f32 0.0, %v801
        %v803 = vpop.f32.mrb[0].mxu0
        %804 = vmatprep.mubr.bf16.mxu0 0
        %805 = vmatmul.mubr.bf16.gmra.mrb[0].mxu0 %v558
        %v806 = vpop.f32.mrb[0].mxu0
        %v807 = vadd.f32 0.0, %v806
        %v808 = vpop.f32.mrb[0].mxu0
        %v809 = vpop.f32.mrb[0].mxu0
        %v810 = vadd.f32 0.0, %v809
        %v811 = vpop.f32.mrb[0].mxu0
        %812 = vmatprep.mubr.bf16.mxu0 0
        %813 = vmatmul.mubr.bf16.gmra.mrb[0].mxu0 %v561
        %v814 = vpop.f32.mrb[0].mxu0
        %v815 = vadd.f32 0.0, %v814
        %v816 = vpop.f32.mrb[0].mxu0
        %v817 = vpop.f32.mrb[0].mxu0
        %v818 = vadd.f32 0.0, %v817
        %v819 = vpop.f32.mrb[0].mxu0
        %820 = vmatprep.mubr.bf16.mxu0 0
        %821 = vmatmul.mubr.bf16.gmra.mrb[0].mxu0 %v564
        %v822 = vpop.f32.mrb[0].mxu0
        %v823 = vadd.f32 0.0, %v822
        %v824 = vpop.f32.mrb[0].mxu0
        %v825 = vpop.f32.mrb[0].mxu0
        %v826 = vadd.f32 0.0, %v825
        %v827 = vpop.f32.mrb[0].mxu0
        %828 = vmatprep.mubr.bf16.mxu0 0
        %829 = vmatmul.mubr.bf16.gmra.mrb[0].mxu0 %v567
        %v830 = vpop.f32.mrb[0].mxu0
        %v831 = vadd.f32 0.0, %v830
        %v832 = vpop.f32.mrb[0].mxu0
        %v833 = vpop.f32.mrb[0].mxu0
        %v834 = vadd.f32 0.0, %v833
        %v835 = vpop.f32.mrb[0].mxu0
        %836 = vmatprep.mubr.bf16.mxu0 0
        %837 = vmatmul.mubr.bf16.gmra.mrb[0].mxu0 %v570
        %v838 = vpop.f32.mrb[0].mxu0
        %v839 = vadd.f32 0.0, %v838
        %v840 = vpop.f32.mrb[0].mxu0
        %v841 = vpop.f32.mrb[0].mxu0
        %v842 = vadd.f32 0.0, %v841
        %v843 = vpop.f32.mrb[0].mxu0
        %844 = vmatprep.mubr.bf16.mxu0 0
        %845 = vmatmul.mubr.bf16.gmra.mrb[0].mxu0 %v573
        %v846 = vpop.f32.mrb[0].mxu0
        %v847 = vadd.f32 0.0, %v846
        %v848 = vpop.f32.mrb[0].mxu0
        %v849 = vpop.f32.mrb[0].mxu0
        %v850 = vadd.f32 0.0, %v849
        %v851 = vpop.f32.mrb[0].mxu0
        %852 = vmatprep.mubr.bf16.mxu0 0
        %853 = vmatmul.mubr.bf16.gmra.mrb[0].mxu0 %v576
        %v854 = vpop.f32.mrb[0].mxu0
        %v855 = vadd.f32 0.0, %v854
        %v856 = vpop.f32.mrb[0].mxu0
        %v857 = vpop.f32.mrb[0].mxu0
        %v858 = vadd.f32 0.0, %v857
        %v859 = vpop.f32.mrb[0].mxu0
        %860 = vmatprep.mubr.bf16.mxu0 0
        %861 = vmatmul.mubr.bf16.gmra.mrb[0].mxu0 %v579
        %v862 = vpop.f32.mrb[0].mxu0
        %v863 = vadd.f32 0.0, %v862
        %v864 = vpop.f32.mrb[0].mxu0
        %v865 = vpop.f32.mrb[0].mxu0
        %v866 = vadd.f32 0.0, %v865
        %v867 = vpop.f32.mrb[0].mxu0
        %868 = vmatprep.mubr.bf16.mxu0 0
        %869 = vmatmul.mubr.bf16.gmra.mrb[0].mxu0 %v582
        %v870 = vpop.f32.mrb[0].mxu0
        %v871 = vadd.f32 0.0, %v870
        %v872 = vpop.f32.mrb[0].mxu0
        %v873 = vpop.f32.mrb[0].mxu0
        %v874 = vadd.f32 0.0, %v873
        %v875 = vpop.f32.mrb[0].mxu0
        %876 = vdwg.mxu0
        %v877 = vpack.c.bf16 %v626, %v623
        %v878 = vpack.c.bf16 %v634, %v631
        %v879 = vpack.c.bf16 %v642, %v639
        %v880 = vpack.c.bf16 %v650, %v647
        %v881 = vpack.c.bf16 %v658, %v655
        %v882 = vpack.c.bf16 %v666, %v663
        %v883 = vpack.c.bf16 %v674, %v671
        %v884 = vpack.c.bf16 %v682, %v679
        %v885 = vpack.c.bf16 %v690, %v687
        %v886 = vpack.c.bf16 %v698, %v695
        %v887 = vpack.c.bf16 %v706, %v703
        %v888 = vpack.c.bf16 %v714, %v711
        %v889 = vpack.c.bf16 %v722, %v719
        %v890 = vpack.c.bf16 %v730, %v727
        %v891 = vpack.c.bf16 %v738, %v735
        %v892 = vpack.c.bf16 %v746, %v743
        %v893 = vpack.c.bf16 %v754, %v751
        %v894 = vpack.c.bf16 %v762, %v759
        %v895 = vpack.c.bf16 %v770, %v767
        %v896 = vpack.c.bf16 %v778, %v775
        %v897 = vpack.c.bf16 %v786, %v783
        %v898 = vpack.c.bf16 %v794, %v791
        %v899 = vpack.c.bf16 %v802, %v799
        %v900 = vpack.c.bf16 %v810, %v807
        %v901 = vpack.c.bf16 %v818, %v815
        %v902 = vpack.c.bf16 %v826, %v823
        %v903 = vpack.c.bf16 %v834, %v831
        %v904 = vpack.c.bf16 %v842, %v839
        %v905 = vpack.c.bf16 %v850, %v847
        %v906 = vpack.c.bf16 %v858, %v855
        %v907 = vpack.c.bf16 %v866, %v863
        %v908 = vpack.c.bf16 %v874, %v871
        %s909 = smul.u32 %s20, 32
        %s910 = smul.addr %s909, 8
        %s911 = scalar_lea.vmem [#allocation2], %s910
        %912 = vst [vmem:[%s911] sm:$0xff] %v877
        %913 = vst [vmem:[%s911 + $0x8] sm:$0xff] %v878
        %914 = vst [vmem:[%s911 + $0x10] sm:$0xff] %v879
        %915 = vst [vmem:[%s911 + $0x18] sm:$0xff] %v880
        %916 = vst [vmem:[%s911 + $0x20] sm:$0xff] %v881
        %917 = vst [vmem:[%s911 + $0x28] sm:$0xff] %v882
        %918 = vst [vmem:[%s911 + $0x30] sm:$0xff] %v883
        %919 = vst [vmem:[%s911 + $0x38] sm:$0xff] %v884
        %920 = vst [vmem:[%s911 + $0x40] sm:$0xff] %v885
        %921 = vst [vmem:[%s911 + $0x48] sm:$0xff] %v886
        %922 = vst [vmem:[%s911 + $0x50] sm:$0xff] %v887
        %923 = vst [vmem:[%s911 + $0x58] sm:$0xff] %v888
        %924 = vst [vmem:[%s911 + $0x60] sm:$0xff] %v889
        %925 = vst [vmem:[%s911 + $0x68] sm:$0xff] %v890
        %926 = vst [vmem:[%s911 + $0x70] sm:$0xff] %v891
        %927 = vst [vmem:[%s911 + $0x78] sm:$0xff] %v892
        %928 = vst [vmem:[%s911 + $0x80] sm:$0xff] %v893
        %929 = vst [vmem:[%s911 + $0x88] sm:$0xff] %v894
        %930 = vst [vmem:[%s911 + $0x90] sm:$0xff] %v895
        %931 = vst [vmem:[%s911 + $0x98] sm:$0xff] %v896
        %932 = vst [vmem:[%s911 + $0xa0] sm:$0xff] %v897
        %933 = vst [vmem:[%s911 + $0xa8] sm:$0xff] %v898
        %934 = vst [vmem:[%s911 + $0xb0] sm:$0xff] %v899
        %935 = vst [vmem:[%s911 + $0xb8] sm:$0xff] %v900
        %936 = vst [vmem:[%s911 + $0xc0] sm:$0xff] %v901
        %937 = vst [vmem:[%s911 + $0xc8] sm:$0xff] %v902
        %938 = vst [vmem:[%s911 + $0xd0] sm:$0xff] %v903
        %939 = vst [vmem:[%s911 + $0xd8] sm:$0xff] %v904
        %940 = vst [vmem:[%s911 + $0xe0] sm:$0xff] %v905
        %941 = vst [vmem:[%s911 + $0xe8] sm:$0xff] %v906
        %942 = vst [vmem:[%s911 + $0xf0] sm:$0xff] %v907
        %943 = vst [vmem:[%s911 + $0xf8] sm:$0xff] %v908
        %v944 = vld [vmem:[#allocation3] sm:$0x1]
        %945 = vmatprep.subr.mxu0 0.0
        %946 = vmatpush1.msra.mxu0 %v623
        %947 = vmatprep.subr.mxu0 0.0
        %948 = vmatpush1.msra.mxu0 %v626
        %949 = vmatprep.subr.mxu0 0.0
        %950 = vmatpush1.msra.mxu0 %v631
        %951 = vmatprep.subr.mxu0 0.0
        %952 = vmatpush1.msra.mxu0 %v634
        %953 = vmatprep.subr.mxu0 0.0
        %954 = vmatpush1.msra.mxu0 %v639
        %955 = vmatprep.subr.mxu0 0.0
        %956 = vmatpush1.msra.mxu0 %v642
        %957 = vmatprep.subr.mxu0 0.0
        %958 = vmatpush1.msra.mxu0 %v647
        %959 = vmatprep.subr.mxu0 0.0
        %960 = vmatpush1.msra.mxu0 %v650
        %961 = vmatprep.subr.mxu0 0.0
        %962 = vmatpush1.msra.mxu0 %v655
        %963 = vmatprep.subr.mxu0 0.0
        %964 = vmatpush1.msra.mxu0 %v658
        %965 = vmatprep.subr.mxu0 0.0
        %966 = vmatpush1.msra.mxu0 %v663
        %967 = vmatprep.subr.mxu0 0.0
        %968 = vmatpush1.msra.mxu0 %v666
        %969 = vmatprep.subr.mxu0 0.0
        %970 = vmatpush1.msra.mxu0 %v671
        %971 = vmatprep.subr.mxu0 0.0
        %972 = vmatpush1.msra.mxu0 %v674
        %973 = vmatprep.subr.mxu0 0.0
        %974 = vmatpush1.msra.mxu0 %v679
        %975 = vmatprep.subr.mxu0 0.0
        %976 = vmatpush1.msra.mxu0 %v682
        %977 = vmatprep.subr.mxu0 0.0
        %978 = vmatpush1.msra.mxu0 %v687
        %979 = vmatprep.subr.mxu0 0.0
        %980 = vmatpush1.msra.mxu0 %v690
        %981 = vmatprep.subr.mxu0 0.0
        %982 = vmatpush1.msra.mxu0 %v695
        %983 = vmatprep.subr.mxu0 0.0
        %984 = vmatpush1.msra.mxu0 %v698
        %985 = vmatprep.subr.mxu0 0.0
        %986 = vmatpush1.msra.mxu0 %v703
        %987 = vmatprep.subr.mxu0 0.0
        %988 = vmatpush1.msra.mxu0 %v706
        %989 = vmatprep.subr.mxu0 0.0
        %990 = vmatpush1.msra.mxu0 %v711
        %991 = vmatprep.subr.mxu0 0.0
        %992 = vmatpush1.msra.mxu0 %v714
        %993 = vmatprep.subr.mxu0 0.0
        %994 = vmatpush1.msra.mxu0 %v719
        %995 = vmatprep.subr.mxu0 0.0
        %996 = vmatpush1.msra.mxu0 %v722
        %997 = vmatprep.subr.mxu0 0.0
        %998 = vmatpush1.msra.mxu0 %v727
        %999 = vmatprep.subr.mxu0 0.0
        %1000 = vmatpush1.msra.mxu0 %v730
        %1001 = vmatprep.subr.mxu0 0.0
        %1002 = vmatpush1.msra.mxu0 %v735
        %1003 = vmatprep.subr.mxu0 0.0
        %1004 = vmatpush1.msra.mxu0 %v738
        %1005 = vmatprep.subr.mxu0 0.0
        %1006 = vmatpush1.msra.mxu0 %v743
        %1007 = vmatprep.subr.mxu0 0.0
        %1008 = vmatpush1.msra.mxu0 %v746
        %1009 = vmatprep.mubr.f32.mxu0 1.0
        %1010 = vmatmul.mubr.f32.gmra.mrb[0].mxu0 1.0
        %v1011 = vpop.f32.mrb[0].mxu0
        %v1012 = vadd.f32 0.0, %v1011
        %v1013 = vpop.f32.mrb[0].mxu0
        %1014 = vdwg.mxu0
        %1015 = vmatprep.subr.mxu0 0.0
        %1016 = vmatpush1.msra.mxu0 %v751
        %1017 = vmatprep.subr.mxu0 0.0
        %1018 = vmatpush1.msra.mxu0 %v754
        %1019 = vmatprep.subr.mxu0 0.0
        %1020 = vmatpush1.msra.mxu0 %v759
        %1021 = vmatprep.subr.mxu0 0.0
        %1022 = vmatpush1.msra.mxu0 %v762
        %1023 = vmatprep.subr.mxu0 0.0
        %1024 = vmatpush1.msra.mxu0 %v767
        %1025 = vmatprep.subr.mxu0 0.0
        %1026 = vmatpush1.msra.mxu0 %v770
        %1027 = vmatprep.subr.mxu0 0.0
        %1028 = vmatpush1.msra.mxu0 %v775
        %1029 = vmatprep.subr.mxu0 0.0
        %1030 = vmatpush1.msra.mxu0 %v778
        %1031 = vmatprep.subr.mxu0 0.0
        %1032 = vmatpush1.msra.mxu0 %v783
        %1033 = vmatprep.subr.mxu0 0.0
        %1034 = vmatpush1.msra.mxu0 %v786
        %1035 = vmatprep.subr.mxu0 0.0
        %1036 = vmatpush1.msra.mxu0 %v791
        %1037 = vmatprep.subr.mxu0 0.0
        %1038 = vmatpush1.msra.mxu0 %v794
        %1039 = vmatprep.subr.mxu0 0.0
        %1040 = vmatpush1.msra.mxu0 %v799
        %1041 = vmatprep.subr.mxu0 0.0
        %1042 = vmatpush1.msra.mxu0 %v802
        %1043 = vmatprep.subr.mxu0 0.0
        %1044 = vmatpush1.msra.mxu0 %v807
        %1045 = vmatprep.subr.mxu0 0.0
        %1046 = vmatpush1.msra.mxu0 %v810
        %1047 = vmatprep.subr.mxu0 0.0
        %1048 = vmatpush1.msra.mxu0 %v815
        %1049 = vmatprep.subr.mxu0 0.0
        %1050 = vmatpush1.msra.mxu0 %v818
        %1051 = vmatprep.subr.mxu0 0.0
        %1052 = vmatpush1.msra.mxu0 %v823
        %1053 = vmatprep.subr.mxu0 0.0
        %1054 = vmatpush1.msra.mxu0 %v826
        %1055 = vmatprep.subr.mxu0 0.0
        %1056 = vmatpush1.msra.mxu0 %v831
        %1057 = vmatprep.subr.mxu0 0.0
        %1058 = vmatpush1.msra.mxu0 %v834
        %1059 = vmatprep.subr.mxu0 0.0
        %1060 = vmatpush1.msra.mxu0 %v839
        %1061 = vmatprep.subr.mxu0 0.0
        %1062 = vmatpush1.msra.mxu0 %v842
        %1063 = vmatprep.subr.mxu0 0.0
        %1064 = vmatpush1.msra.mxu0 %v847
        %1065 = vmatprep.subr.mxu0 0.0
        %1066 = vmatpush1.msra.mxu0 %v850
        %1067 = vmatprep.subr.mxu0 0.0
        %1068 = vmatpush1.msra.mxu0 %v855
        %1069 = vmatprep.subr.mxu0 0.0
        %1070 = vmatpush1.msra.mxu0 %v858
        %1071 = vmatprep.subr.mxu0 0.0
        %1072 = vmatpush1.msra.mxu0 %v863
        %1073 = vmatprep.subr.mxu0 0.0
        %1074 = vmatpush1.msra.mxu0 %v866
        %1075 = vmatprep.subr.mxu0 0.0
        %1076 = vmatpush1.msra.mxu0 %v871
        %1077 = vmatprep.subr.mxu0 0.0
        %1078 = vmatpush1.msra.mxu0 %v874
        %1079 = vmatprep.mubr.f32.mxu0 1.0
        %1080 = vmatmul.mubr.f32.gmra.mrb[0].mxu0 1.0
        %v1081 = vpop.f32.mrb[0].mxu0
        %v1082 = vadd.f32 %v1012, %v1081
        %v1083 = vpop.f32.mrb[0].mxu0
        %1084 = vdwg.mxu0
        %v1085 = vadd.f32 %v944, %v1082
        %1086 = vst [vmem:[#allocation3] sm:$0x1] %v1085
        %v1087 = vld [vmem:[#allocation4] sm:$0x1]
        %v1088 = vmul.f32 %v623, %v623
        %v1089 = vmul.f32 %v626, %v626
        %v1090 = vmul.f32 %v631, %v631
        %v1091 = vmul.f32 %v634, %v634
        %v1092 = vmul.f32 %v639, %v639
        %v1093 = vmul.f32 %v642, %v642
        %v1094 = vmul.f32 %v647, %v647
        %v1095 = vmul.f32 %v650, %v650
        %v1096 = vmul.f32 %v655, %v655
        %v1097 = vmul.f32 %v658, %v658
        %v1098 = vmul.f32 %v663, %v663
        %v1099 = vmul.f32 %v666, %v666
        %v1100 = vmul.f32 %v671, %v671
        %v1101 = vmul.f32 %v674, %v674
        %v1102 = vmul.f32 %v679, %v679
        %v1103 = vmul.f32 %v682, %v682
        %v1104 = vmul.f32 %v687, %v687
        %v1105 = vmul.f32 %v690, %v690
        %v1106 = vmul.f32 %v695, %v695
        %v1107 = vmul.f32 %v698, %v698
        %v1108 = vmul.f32 %v703, %v703
        %v1109 = vmul.f32 %v706, %v706
        %v1110 = vmul.f32 %v711, %v711
        %v1111 = vmul.f32 %v714, %v714
        %v1112 = vmul.f32 %v719, %v719
        %v1113 = vmul.f32 %v722, %v722
        %v1114 = vmul.f32 %v727, %v727
        %v1115 = vmul.f32 %v730, %v730
        %v1116 = vmul.f32 %v735, %v735
        %v1117 = vmul.f32 %v738, %v738
        %v1118 = vmul.f32 %v743, %v743
        %v1119 = vmul.f32 %v746, %v746
        %v1120 = vmul.f32 %v751, %v751
        %v1121 = vmul.f32 %v754, %v754
        %v1122 = vmul.f32 %v759, %v759
        %v1123 = vmul.f32 %v762, %v762
        %v1124 = vmul.f32 %v767, %v767
        %v1125 = vmul.f32 %v770, %v770
        %v1126 = vmul.f32 %v775, %v775
        %v1127 = vmul.f32 %v778, %v778
        %v1128 = vmul.f32 %v783, %v783
        %v1129 = vmul.f32 %v786, %v786
        %v1130 = vmul.f32 %v791, %v791
        %v1131 = vmul.f32 %v794, %v794
        %v1132 = vmul.f32 %v799, %v799
        %v1133 = vmul.f32 %v802, %v802
        %v1134 = vmul.f32 %v807, %v807
        %v1135 = vmul.f32 %v810, %v810
        %v1136 = vmul.f32 %v815, %v815
        %v1137 = vmul.f32 %v818, %v818
        %v1138 = vmul.f32 %v823, %v823
        %v1139 = vmul.f32 %v826, %v826
        %v1140 = vmul.f32 %v831, %v831
        %v1141 = vmul.f32 %v834, %v834
        %v1142 = vmul.f32 %v839, %v839
        %v1143 = vmul.f32 %v842, %v842
        %v1144 = vmul.f32 %v847, %v847
        %v1145 = vmul.f32 %v850, %v850
        %v1146 = vmul.f32 %v855, %v855
        %v1147 = vmul.f32 %v858, %v858
        %v1148 = vmul.f32 %v863, %v863
        %v1149 = vmul.f32 %v866, %v866
        %v1150 = vmul.f32 %v871, %v871
        %v1151 = vmul.f32 %v874, %v874
        %1152 = vmatprep.subr.mxu0 0.0
        %1153 = vmatpush1.msra.mxu0 %v1088
        %1154 = vmatprep.subr.mxu0 0.0
        %1155 = vmatpush1.msra.mxu0 %v1089
        %1156 = vmatprep.subr.mxu0 0.0
        %1157 = vmatpush1.msra.mxu0 %v1090
        %1158 = vmatprep.subr.mxu0 0.0
        %1159 = vmatpush1.msra.mxu0 %v1091
        %1160 = vmatprep.subr.mxu0 0.0
        %1161 = vmatpush1.msra.mxu0 %v1092
        %1162 = vmatprep.subr.mxu0 0.0
        %1163 = vmatpush1.msra.mxu0 %v1093
        %1164 = vmatprep.subr.mxu0 0.0
        %1165 = vmatpush1.msra.mxu0 %v1094
        %1166 = vmatprep.subr.mxu0 0.0
        %1167 = vmatpush1.msra.mxu0 %v1095
        %1168 = vmatprep.subr.mxu0 0.0
        %1169 = vmatpush1.msra.mxu0 %v1096
        %1170 = vmatprep.subr.mxu0 0.0
        %1171 = vmatpush1.msra.mxu0 %v1097
        %1172 = vmatprep.subr.mxu0 0.0
        %1173 = vmatpush1.msra.mxu0 %v1098
        %1174 = vmatprep.subr.mxu0 0.0
        %1175 = vmatpush1.msra.mxu0 %v1099
        %1176 = vmatprep.subr.mxu0 0.0
        %1177 = vmatpush1.msra.mxu0 %v1100
        %1178 = vmatprep.subr.mxu0 0.0
        %1179 = vmatpush1.msra.mxu0 %v1101
        %1180 = vmatprep.subr.mxu0 0.0
        %1181 = vmatpush1.msra.mxu0 %v1102
        %1182 = vmatprep.subr.mxu0 0.0
        %1183 = vmatpush1.msra.mxu0 %v1103
        %1184 = vmatprep.subr.mxu0 0.0
        %1185 = vmatpush1.msra.mxu0 %v1104
        %1186 = vmatprep.subr.mxu0 0.0
        %1187 = vmatpush1.msra.mxu0 %v1105
        %1188 = vmatprep.subr.mxu0 0.0
        %1189 = vmatpush1.msra.mxu0 %v1106
        %1190 = vmatprep.subr.mxu0 0.0
        %1191 = vmatpush1.msra.mxu0 %v1107
        %1192 = vmatprep.subr.mxu0 0.0
        %1193 = vmatpush1.msra.mxu0 %v1108
        %1194 = vmatprep.subr.mxu0 0.0
        %1195 = vmatpush1.msra.mxu0 %v1109
        %1196 = vmatprep.subr.mxu0 0.0
        %1197 = vmatpush1.msra.mxu0 %v1110
        %1198 = vmatprep.subr.mxu0 0.0
        %1199 = vmatpush1.msra.mxu0 %v1111
        %1200 = vmatprep.subr.mxu0 0.0
        %1201 = vmatpush1.msra.mxu0 %v1112
        %1202 = vmatprep.subr.mxu0 0.0
        %1203 = vmatpush1.msra.mxu0 %v1113
        %1204 = vmatprep.subr.mxu0 0.0
        %1205 = vmatpush1.msra.mxu0 %v1114
        %1206 = vmatprep.subr.mxu0 0.0
        %1207 = vmatpush1.msra.mxu0 %v1115
        %1208 = vmatprep.subr.mxu0 0.0
        %1209 = vmatpush1.msra.mxu0 %v1116
        %1210 = vmatprep.subr.mxu0 0.0
        %1211 = vmatpush1.msra.mxu0 %v1117
        %1212 = vmatprep.subr.mxu0 0.0
        %1213 = vmatpush1.msra.mxu0 %v1118
        %1214 = vmatprep.subr.mxu0 0.0
        %1215 = vmatpush1.msra.mxu0 %v1119
        %1216 = vmatprep.mubr.f32.mxu0 1.0
        %1217 = vmatmul.mubr.f32.gmra.mrb[0].mxu0 1.0
        %v1218 = vpop.f32.mrb[0].mxu0
        %v1219 = vadd.f32 0.0, %v1218
        %v1220 = vpop.f32.mrb[0].mxu0
        %1221 = vdwg.mxu0
        %1222 = vmatprep.subr.mxu0 0.0
        %1223 = vmatpush1.msra.mxu0 %v1120
        %1224 = vmatprep.subr.mxu0 0.0
        %1225 = vmatpush1.msra.mxu0 %v1121
        %1226 = vmatprep.subr.mxu0 0.0
        %1227 = vmatpush1.msra.mxu0 %v1122
        %1228 = vmatprep.subr.mxu0 0.0
        %1229 = vmatpush1.msra.mxu0 %v1123
        %1230 = vmatprep.subr.mxu0 0.0
        %1231 = vmatpush1.msra.mxu0 %v1124
        %1232 = vmatprep.subr.mxu0 0.0
        %1233 = vmatpush1.msra.mxu0 %v1125
        %1234 = vmatprep.subr.mxu0 0.0
        %1235 = vmatpush1.msra.mxu0 %v1126
        %1236 = vmatprep.subr.mxu0 0.0
        %1237 = vmatpush1.msra.mxu0 %v1127
        %1238 = vmatprep.subr.mxu0 0.0
        %1239 = vmatpush1.msra.mxu0 %v1128
        %1240 = vmatprep.subr.mxu0 0.0
        %1241 = vmatpush1.msra.mxu0 %v1129
        %1242 = vmatprep.subr.mxu0 0.0
        %1243 = vmatpush1.msra.mxu0 %v1130
        %1244 = vmatprep.subr.mxu0 0.0
        %1245 = vmatpush1.msra.mxu0 %v1131
        %1246 = vmatprep.subr.mxu0 0.0
        %1247 = vmatpush1.msra.mxu0 %v1132
        %1248 = vmatprep.subr.mxu0 0.0
        %1249 = vmatpush1.msra.mxu0 %v1133
        %1250 = vmatprep.subr.mxu0 0.0
        %1251 = vmatpush1.msra.mxu0 %v1134
        %1252 = vmatprep.subr.mxu0 0.0
        %1253 = vmatpush1.msra.mxu0 %v1135
        %1254 = vmatprep.subr.mxu0 0.0
        %1255 = vmatpush1.msra.mxu0 %v1136
        %1256 = vmatprep.subr.mxu0 0.0
        %1257 = vmatpush1.msra.mxu0 %v1137
        %1258 = vmatprep.subr.mxu0 0.0
        %1259 = vmatpush1.msra.mxu0 %v1138
        %1260 = vmatprep.subr.mxu0 0.0
        %1261 = vmatpush1.msra.mxu0 %v1139
        %1262 = vmatprep.subr.mxu0 0.0
        %1263 = vmatpush1.msra.mxu0 %v1140
        %1264 = vmatprep.subr.mxu0 0.0
        %1265 = vmatpush1.msra.mxu0 %v1141
        %1266 = vmatprep.subr.mxu0 0.0
        %1267 = vmatpush1.msra.mxu0 %v1142
        %1268 = vmatprep.subr.mxu0 0.0
        %1269 = vmatpush1.msra.mxu0 %v1143
        %1270 = vmatprep.subr.mxu0 0.0
        %1271 = vmatpush1.msra.mxu0 %v1144
        %1272 = vmatprep.subr.mxu0 0.0
        %1273 = vmatpush1.msra.mxu0 %v1145
        %1274 = vmatprep.subr.mxu0 0.0
        %1275 = vmatpush1.msra.mxu0 %v1146
        %1276 = vmatprep.subr.mxu0 0.0
        %1277 = vmatpush1.msra.mxu0 %v1147
        %1278 = vmatprep.subr.mxu0 0.0
        %1279 = vmatpush1.msra.mxu0 %v1148
        %1280 = vmatprep.subr.mxu0 0.0
        %1281 = vmatpush1.msra.mxu0 %v1149
        %1282 = vmatprep.subr.mxu0 0.0
        %1283 = vmatpush1.msra.mxu0 %v1150
        %1284 = vmatprep.subr.mxu0 0.0
        %1285 = vmatpush1.msra.mxu0 %v1151
        %1286 = vmatprep.mubr.f32.mxu0 1.0
        %1287 = vmatmul.mubr.f32.gmra.mrb[0].mxu0 1.0
        %v1288 = vpop.f32.mrb[0].mxu0
        %v1289 = vadd.f32 %v1219, %v1288
        %v1290 = vpop.f32.mrb[0].mxu0
        %1291 = vdwg.mxu0
        %v1292 = vadd.f32 %v1087, %v1289
        %1293 = vst [vmem:[#allocation4] sm:$0x1] %v1292
      $region40: #{block_forward.2} parent=35 // pred_fallthru
        _
      %p1294 = scmp.eq.s32.totalorder %s19, 1
      // Predicated region
      $region45: #{block_forward.2} parent=35 // pred_check
        %p1295 = pneg %p1294
      $region46: #{block_forward.2} parent=35 // pred_check_branch
        %1297 = sbr.rel (%p1295) target = $region48
      $region47: #{block_forward.2} parent=35 // pred_region
        %p1298 = scmp.eq.s32.totalorder %s20, 0
        // Predicated region
        $region49: #{block_forward.2} parent=47 // pred_check
          %p1299 = pneg %p1298
        $region50: #{block_forward.2} parent=47 // pred_check_branch
          %1301 = sbr.rel (%p1299) target = $region52
        $region51: #{block_forward.2} parent=47 // pred_region
          %v1302 = vld [vmem:[#allocation3] sm:$0x1]
          %v1303 = vmul.f32 %v1302, 0.001953125
          %v1304 = vld [vmem:[#allocation4] sm:$0x1]
          %v1305 = vmul.f32 %v1304, 0.001953125
          %v1306 = vmul.f32 %v1303, %v1303
          %v1307 = vsub.f32 %v1305, %v1306
          %v1308 = vmax.f32 %v1307, 0.0
          %v1309 = vld [vmem:[%s2] sm:$0x1]
          %v1310 = vadd.f32 %v1308, 1e-05
          %v1311 = vrsqrt.pop %v1310
          %v1312 = vmul.f32 %v1309, %v1311
          %1313 = vst [vmem:[#allocation5] sm:$0x1] %v1312
          %v1314 = vld [vmem:[%s3] sm:$0x1]
          %v1315 = vmul.f32 %v1303, %v1312
          %v1316 = vsub.f32 %v1314, %v1315
          %1317 = vst [vmem:[#allocation6] sm:$0x1] %v1316
        $region52: #{block_forward.2} parent=47 // pred_fallthru
          _
        %s1318 = smul.u32 %s20, 32
        %s1319 = smul.addr %s1318, 8
        %s1320 = scalar_lea.vmem [#allocation2], %s1319
        %v1321 = vld [vmem:[%s1320] sm:$0xff]
        %v1322 = vld [vmem:[%s1320 + $0x8] sm:$0xff]
        %v1323 = vld [vmem:[%s1320 + $0x10] sm:$0xff]
        %v1324 = vld [vmem:[%s1320 + $0x18] sm:$0xff]
        %v1325 = vld [vmem:[%s1320 + $0x20] sm:$0xff]
        %v1326 = vld [vmem:[%s1320 + $0x28] sm:$0xff]
        %v1327 = vld [vmem:[%s1320 + $0x30] sm:$0xff]
        %v1328 = vld [vmem:[%s1320 + $0x38] sm:$0xff]
        %v1329 = vld [vmem:[%s1320 + $0x40] sm:$0xff]
        %v1330 = vld [vmem:[%s1320 + $0x48] sm:$0xff]
        %v1331 = vld [vmem:[%s1320 + $0x50] sm:$0xff]
        %v1332 = vld [vmem:[%s1320 + $0x58] sm:$0xff]
        %v1333 = vld [vmem:[%s1320 + $0x60] sm:$0xff]
        %v1334 = vld [vmem:[%s1320 + $0x68] sm:$0xff]
        %v1335 = vld [vmem:[%s1320 + $0x70] sm:$0xff]
        %v1336 = vld [vmem:[%s1320 + $0x78] sm:$0xff]
        %v1337 = vld [vmem:[%s1320 + $0x80] sm:$0xff]
        %v1338 = vld [vmem:[%s1320 + $0x88] sm:$0xff]
        %v1339 = vld [vmem:[%s1320 + $0x90] sm:$0xff]
        %v1340 = vld [vmem:[%s1320 + $0x98] sm:$0xff]
        %v1341 = vld [vmem:[%s1320 + $0xa0] sm:$0xff]
        %v1342 = vld [vmem:[%s1320 + $0xa8] sm:$0xff]
        %v1343 = vld [vmem:[%s1320 + $0xb0] sm:$0xff]
        %v1344 = vld [vmem:[%s1320 + $0xb8] sm:$0xff]
        %v1345 = vld [vmem:[%s1320 + $0xc0] sm:$0xff]
        %v1346 = vld [vmem:[%s1320 + $0xc8] sm:$0xff]
        %v1347 = vld [vmem:[%s1320 + $0xd0] sm:$0xff]
        %v1348 = vld [vmem:[%s1320 + $0xd8] sm:$0xff]
        %v1349 = vld [vmem:[%s1320 + $0xe0] sm:$0xff]
        %v1350 = vld [vmem:[%s1320 + $0xe8] sm:$0xff]
        %v1351 = vld [vmem:[%s1320 + $0xf0] sm:$0xff]
        %v1352 = vld [vmem:[%s1320 + $0xf8] sm:$0xff]
        %v1353 = vunpack.c.l.bf16 %v1321
        %v1354 = vunpack.c.h.bf16 %v1321
        %v1355 = vunpack.c.l.bf16 %v1322
        %v1356 = vunpack.c.h.bf16 %v1322
        %v1357 = vunpack.c.l.bf16 %v1323
        %v1358 = vunpack.c.h.bf16 %v1323
        %v1359 = vunpack.c.l.bf16 %v1324
        %v1360 = vunpack.c.h.bf16 %v1324
        %v1361 = vunpack.c.l.bf16 %v1325
        %v1362 = vunpack.c.h.bf16 %v1325
        %v1363 = vunpack.c.l.bf16 %v1326
        %v1364 = vunpack.c.h.bf16 %v1326
        %v1365 = vunpack.c.l.bf16 %v1327
        %v1366 = vunpack.c.h.bf16 %v1327
        %v1367 = vunpack.c.l.bf16 %v1328
        %v1368 = vunpack.c.h.bf16 %v1328
        %v1369 = vunpack.c.l.bf16 %v1329
        %v1370 = vunpack.c.h.bf16 %v1329
        %v1371 = vunpack.c.l.bf16 %v1330
        %v1372 = vunpack.c.h.bf16 %v1330
        %v1373 = vunpack.c.l.bf16 %v1331
        %v1374 = vunpack.c.h.bf16 %v1331
        %v1375 = vunpack.c.l.bf16 %v1332
        %v1376 = vunpack.c.h.bf16 %v1332
        %v1377 = vunpack.c.l.bf16 %v1333
        %v1378 = vunpack.c.h.bf16 %v1333
        %v1379 = vunpack.c.l.bf16 %v1334
        %v1380 = vunpack.c.h.bf16 %v1334
        %v1381 = vunpack.c.l.bf16 %v1335
        %v1382 = vunpack.c.h.bf16 %v1335
        %v1383 = vunpack.c.l.bf16 %v1336
        %v1384 = vunpack.c.h.bf16 %v1336
        %v1385 = vunpack.c.l.bf16 %v1337
        %v1386 = vunpack.c.h.bf16 %v1337
        %v1387 = vunpack.c.l.bf16 %v1338
        %v1388 = vunpack.c.h.bf16 %v1338
        %v1389 = vunpack.c.l.bf16 %v1339
        %v1390 = vunpack.c.h.bf16 %v1339
        %v1391 = vunpack.c.l.bf16 %v1340
        %v1392 = vunpack.c.h.bf16 %v1340
        %v1393 = vunpack.c.l.bf16 %v1341
        %v1394 = vunpack.c.h.bf16 %v1341
        %v1395 = vunpack.c.l.bf16 %v1342
        %v1396 = vunpack.c.h.bf16 %v1342
        %v1397 = vunpack.c.l.bf16 %v1343
        %v1398 = vunpack.c.h.bf16 %v1343
        %v1399 = vunpack.c.l.bf16 %v1344
        %v1400 = vunpack.c.h.bf16 %v1344
        %v1401 = vunpack.c.l.bf16 %v1345
        %v1402 = vunpack.c.h.bf16 %v1345
        %v1403 = vunpack.c.l.bf16 %v1346
        %v1404 = vunpack.c.h.bf16 %v1346
        %v1405 = vunpack.c.l.bf16 %v1347
        %v1406 = vunpack.c.h.bf16 %v1347
        %v1407 = vunpack.c.l.bf16 %v1348
        %v1408 = vunpack.c.h.bf16 %v1348
        %v1409 = vunpack.c.l.bf16 %v1349
        %v1410 = vunpack.c.h.bf16 %v1349
        %v1411 = vunpack.c.l.bf16 %v1350
        %v1412 = vunpack.c.h.bf16 %v1350
        %v1413 = vunpack.c.l.bf16 %v1351
        %v1414 = vunpack.c.h.bf16 %v1351
        %v1415 = vunpack.c.l.bf16 %v1352
        %v1416 = vunpack.c.h.bf16 %v1352
        %v1417 = vld [vmem:[#allocation5] sm:$0x1]
        %v1419 = vlaneseq
        %v1420 = vshrl.u32 %v1419, 7
        %v1421 = vsub.s32 0, %v1420
        %v1422 = vrot.slane %v1417, %v1421
        %v1424 = vmul.f32 %v1353, %v1422
        %v1425 = vmul.f32 %v1354, %v1422
        %v1426 = vmul.f32 %v1355, %v1422
        %v1427 = vmul.f32 %v1356, %v1422
        %v1428 = vmul.f32 %v1357, %v1422
        %v1429 = vmul.f32 %v1358, %v1422
        %v1430 = vmul.f32 %v1359, %v1422
        %v1431 = vmul.f32 %v1360, %v1422
        %v1432 = vmul.f32 %v1361, %v1422
        %v1433 = vmul.f32 %v1362, %v1422
        %v1434 = vmul.f32 %v1363, %v1422
        %v1435 = vmul.f32 %v1364, %v1422
        %v1436 = vmul.f32 %v1365, %v1422
        %v1437 = vmul.f32 %v1366, %v1422
        %v1438 = vmul.f32 %v1367, %v1422
        %v1439 = vmul.f32 %v1368, %v1422
        %v1440 = vmul.f32 %v1369, %v1422
        %v1441 = vmul.f32 %v1370, %v1422
        %v1442 = vmul.f32 %v1371, %v1422
        %v1443 = vmul.f32 %v1372, %v1422
        %v1444 = vmul.f32 %v1373, %v1422
        %v1445 = vmul.f32 %v1374, %v1422
        %v1446 = vmul.f32 %v1375, %v1422
        %v1447 = vmul.f32 %v1376, %v1422
        %v1448 = vmul.f32 %v1377, %v1422
        %v1449 = vmul.f32 %v1378, %v1422
        %v1450 = vmul.f32 %v1379, %v1422
        %v1451 = vmul.f32 %v1380, %v1422
        %v1452 = vmul.f32 %v1381, %v1422
        %v1453 = vmul.f32 %v1382, %v1422
        %v1454 = vmul.f32 %v1383, %v1422
        %v1455 = vmul.f32 %v1384, %v1422
        %v1456 = vmul.f32 %v1385, %v1422
        %v1457 = vmul.f32 %v1386, %v1422
        %v1458 = vmul.f32 %v1387, %v1422
        %v1459 = vmul.f32 %v1388, %v1422
        %v1460 = vmul.f32 %v1389, %v1422
        %v1461 = vmul.f32 %v1390, %v1422
        %v1462 = vmul.f32 %v1391, %v1422
        %v1463 = vmul.f32 %v1392, %v1422
        %v1464 = vmul.f32 %v1393, %v1422
        %v1465 = vmul.f32 %v1394, %v1422
        %v1466 = vmul.f32 %v1395, %v1422
        %v1467 = vmul.f32 %v1396, %v1422
        %v1468 = vmul.f32 %v1397, %v1422
        %v1469 = vmul.f32 %v1398, %v1422
        %v1470 = vmul.f32 %v1399, %v1422
        %v1471 = vmul.f32 %v1400, %v1422
        %v1472 = vmul.f32 %v1401, %v1422
        %v1473 = vmul.f32 %v1402, %v1422
        %v1474 = vmul.f32 %v1403, %v1422
        %v1475 = vmul.f32 %v1404, %v1422
        %v1476 = vmul.f32 %v1405, %v1422
        %v1477 = vmul.f32 %v1406, %v1422
        %v1478 = vmul.f32 %v1407, %v1422
        %v1479 = vmul.f32 %v1408, %v1422
        %v1480 = vmul.f32 %v1409, %v1422
        %v1481 = vmul.f32 %v1410, %v1422
        %v1482 = vmul.f32 %v1411, %v1422
        %v1483 = vmul.f32 %v1412, %v1422
        %v1484 = vmul.f32 %v1413, %v1422
        %v1485 = vmul.f32 %v1414, %v1422
        %v1486 = vmul.f32 %v1415, %v1422
        %v1487 = vmul.f32 %v1416, %v1422
        %v1488 = vld [vmem:[#allocation6] sm:$0x1]
        %v1490 = vlaneseq
        %v1491 = vshrl.u32 %v1490, 7
        %v1492 = vsub.s32 0, %v1491
        %v1493 = vrot.slane %v1488, %v1492
        %v1495 = vadd.f32 %v1424, %v1493
        %v1496 = vadd.f32 %v1425, %v1493
        %v1497 = vadd.f32 %v1426, %v1493
        %v1498 = vadd.f32 %v1427, %v1493
        %v1499 = vadd.f32 %v1428, %v1493
        %v1500 = vadd.f32 %v1429, %v1493
        %v1501 = vadd.f32 %v1430, %v1493
        %v1502 = vadd.f32 %v1431, %v1493
        %v1503 = vadd.f32 %v1432, %v1493
        %v1504 = vadd.f32 %v1433, %v1493
        %v1505 = vadd.f32 %v1434, %v1493
        %v1506 = vadd.f32 %v1435, %v1493
        %v1507 = vadd.f32 %v1436, %v1493
        %v1508 = vadd.f32 %v1437, %v1493
        %v1509 = vadd.f32 %v1438, %v1493
        %v1510 = vadd.f32 %v1439, %v1493
        %v1511 = vadd.f32 %v1440, %v1493
        %v1512 = vadd.f32 %v1441, %v1493
        %v1513 = vadd.f32 %v1442, %v1493
        %v1514 = vadd.f32 %v1443, %v1493
        %v1515 = vadd.f32 %v1444, %v1493
        %v1516 = vadd.f32 %v1445, %v1493
        %v1517 = vadd.f32 %v1446, %v1493
        %v1518 = vadd.f32 %v1447, %v1493
        %v1519 = vadd.f32 %v1448, %v1493
        %v1520 = vadd.f32 %v1449, %v1493
        %v1521 = vadd.f32 %v1450, %v1493
        %v1522 = vadd.f32 %v1451, %v1493
        %v1523 = vadd.f32 %v1452, %v1493
        %v1524 = vadd.f32 %v1453, %v1493
        %v1525 = vadd.f32 %v1454, %v1493
        %v1526 = vadd.f32 %v1455, %v1493
        %v1527 = vadd.f32 %v1456, %v1493
        %v1528 = vadd.f32 %v1457, %v1493
        %v1529 = vadd.f32 %v1458, %v1493
        %v1530 = vadd.f32 %v1459, %v1493
        %v1531 = vadd.f32 %v1460, %v1493
        %v1532 = vadd.f32 %v1461, %v1493
        %v1533 = vadd.f32 %v1462, %v1493
        %v1534 = vadd.f32 %v1463, %v1493
        %v1535 = vadd.f32 %v1464, %v1493
        %v1536 = vadd.f32 %v1465, %v1493
        %v1537 = vadd.f32 %v1466, %v1493
        %v1538 = vadd.f32 %v1467, %v1493
        %v1539 = vadd.f32 %v1468, %v1493
        %v1540 = vadd.f32 %v1469, %v1493
        %v1541 = vadd.f32 %v1470, %v1493
        %v1542 = vadd.f32 %v1471, %v1493
        %v1543 = vadd.f32 %v1472, %v1493
        %v1544 = vadd.f32 %v1473, %v1493
        %v1545 = vadd.f32 %v1474, %v1493
        %v1546 = vadd.f32 %v1475, %v1493
        %v1547 = vadd.f32 %v1476, %v1493
        %v1548 = vadd.f32 %v1477, %v1493
        %v1549 = vadd.f32 %v1478, %v1493
        %v1550 = vadd.f32 %v1479, %v1493
        %v1551 = vadd.f32 %v1480, %v1493
        %v1552 = vadd.f32 %v1481, %v1493
        %v1553 = vadd.f32 %v1482, %v1493
        %v1554 = vadd.f32 %v1483, %v1493
        %v1555 = vadd.f32 %v1484, %v1493
        %v1556 = vadd.f32 %v1485, %v1493
        %v1557 = vadd.f32 %v1486, %v1493
        %v1558 = vadd.f32 %v1487, %v1493
        %v1559 = vmax.f32 %v1495, 0.0
        %v1560 = vmax.f32 %v1496, 0.0
        %v1561 = vmax.f32 %v1497, 0.0
        %v1562 = vmax.f32 %v1498, 0.0
        %v1563 = vmax.f32 %v1499, 0.0
        %v1564 = vmax.f32 %v1500, 0.0
        %v1565 = vmax.f32 %v1501, 0.0
        %v1566 = vmax.f32 %v1502, 0.0
        %v1567 = vmax.f32 %v1503, 0.0
        %v1568 = vmax.f32 %v1504, 0.0
        %v1569 = vmax.f32 %v1505, 0.0
        %v1570 = vmax.f32 %v1506, 0.0
        %v1571 = vmax.f32 %v1507, 0.0
        %v1572 = vmax.f32 %v1508, 0.0
        %v1573 = vmax.f32 %v1509, 0.0
        %v1574 = vmax.f32 %v1510, 0.0
        %v1575 = vmax.f32 %v1511, 0.0
        %v1576 = vmax.f32 %v1512, 0.0
        %v1577 = vmax.f32 %v1513, 0.0
        %v1578 = vmax.f32 %v1514, 0.0
        %v1579 = vmax.f32 %v1515, 0.0
        %v1580 = vmax.f32 %v1516, 0.0
        %v1581 = vmax.f32 %v1517, 0.0
        %v1582 = vmax.f32 %v1518, 0.0
        %v1583 = vmax.f32 %v1519, 0.0
        %v1584 = vmax.f32 %v1520, 0.0
        %v1585 = vmax.f32 %v1521, 0.0
        %v1586 = vmax.f32 %v1522, 0.0
        %v1587 = vmax.f32 %v1523, 0.0
        %v1588 = vmax.f32 %v1524, 0.0
        %v1589 = vmax.f32 %v1525, 0.0
        %v1590 = vmax.f32 %v1526, 0.0
        %v1591 = vmax.f32 %v1527, 0.0
        %v1592 = vmax.f32 %v1528, 0.0
        %v1593 = vmax.f32 %v1529, 0.0
        %v1594 = vmax.f32 %v1530, 0.0
        %v1595 = vmax.f32 %v1531, 0.0
        %v1596 = vmax.f32 %v1532, 0.0
        %v1597 = vmax.f32 %v1533, 0.0
        %v1598 = vmax.f32 %v1534, 0.0
        %v1599 = vmax.f32 %v1535, 0.0
        %v1600 = vmax.f32 %v1536, 0.0
        %v1601 = vmax.f32 %v1537, 0.0
        %v1602 = vmax.f32 %v1538, 0.0
        %v1603 = vmax.f32 %v1539, 0.0
        %v1604 = vmax.f32 %v1540, 0.0
        %v1605 = vmax.f32 %v1541, 0.0
        %v1606 = vmax.f32 %v1542, 0.0
        %v1607 = vmax.f32 %v1543, 0.0
        %v1608 = vmax.f32 %v1544, 0.0
        %v1609 = vmax.f32 %v1545, 0.0
        %v1610 = vmax.f32 %v1546, 0.0
        %v1611 = vmax.f32 %v1547, 0.0
        %v1612 = vmax.f32 %v1548, 0.0
        %v1613 = vmax.f32 %v1549, 0.0
        %v1614 = vmax.f32 %v1550, 0.0
        %v1615 = vmax.f32 %v1551, 0.0
        %v1616 = vmax.f32 %v1552, 0.0
        %v1617 = vmax.f32 %v1553, 0.0
        %v1618 = vmax.f32 %v1554, 0.0
        %v1619 = vmax.f32 %v1555, 0.0
        %v1620 = vmax.f32 %v1556, 0.0
        %v1621 = vmax.f32 %v1557, 0.0
        %v1622 = vmax.f32 %v1558, 0.0
        %v1623 = vpack.c.bf16 %v1560, %v1559
        %v1624 = vpack.c.bf16 %v1562, %v1561
        %v1625 = vpack.c.bf16 %v1564, %v1563
        %v1626 = vpack.c.bf16 %v1566, %v1565
        %v1627 = vpack.c.bf16 %v1568, %v1567
        %v1628 = vpack.c.bf16 %v1570, %v1569
        %v1629 = vpack.c.bf16 %v1572, %v1571
        %v1630 = vpack.c.bf16 %v1574, %v1573
        %v1631 = vpack.c.bf16 %v1576, %v1575
        %v1632 = vpack.c.bf16 %v1578, %v1577
        %v1633 = vpack.c.bf16 %v1580, %v1579
        %v1634 = vpack.c.bf16 %v1582, %v1581
        %v1635 = vpack.c.bf16 %v1584, %v1583
        %v1636 = vpack.c.bf16 %v1586, %v1585
        %v1637 = vpack.c.bf16 %v1588, %v1587
        %v1638 = vpack.c.bf16 %v1590, %v1589
        %v1639 = vpack.c.bf16 %v1592, %v1591
        %v1640 = vpack.c.bf16 %v1594, %v1593
        %v1641 = vpack.c.bf16 %v1596, %v1595
        %v1642 = vpack.c.bf16 %v1598, %v1597
        %v1643 = vpack.c.bf16 %v1600, %v1599
        %v1644 = vpack.c.bf16 %v1602, %v1601
        %v1645 = vpack.c.bf16 %v1604, %v1603
        %v1646 = vpack.c.bf16 %v1606, %v1605
        %v1647 = vpack.c.bf16 %v1608, %v1607
        %v1648 = vpack.c.bf16 %v1610, %v1609
        %v1649 = vpack.c.bf16 %v1612, %v1611
        %v1650 = vpack.c.bf16 %v1614, %v1613
        %v1651 = vpack.c.bf16 %v1616, %v1615
        %v1652 = vpack.c.bf16 %v1618, %v1617
        %v1653 = vpack.c.bf16 %v1620, %v1619
        %v1654 = vpack.c.bf16 %v1622, %v1621
        %v1687 = vunpack.c.l.b16 %v1623
        %v1688 = vunpack.c.h.b16 %v1623
        %v1689 = vunpack.c.l.b16 %v1624
        %v1690 = vunpack.c.h.b16 %v1624
        %v1691 = vunpack.c.l.b16 %v1625
        %v1692 = vunpack.c.h.b16 %v1625
        %v1693 = vunpack.c.l.b16 %v1626
        %v1694 = vunpack.c.h.b16 %v1626
        %v1695 = vunpack.c.l.b16 %v1627
        %v1696 = vunpack.c.h.b16 %v1627
        %v1697 = vunpack.c.l.b16 %v1628
        %v1698 = vunpack.c.h.b16 %v1628
        %v1699 = vunpack.c.l.b16 %v1629
        %v1700 = vunpack.c.h.b16 %v1629
        %v1701 = vunpack.c.l.b16 %v1630
        %v1702 = vunpack.c.h.b16 %v1630
        %v1703 = vunpack.c.l.b16 %v1631
        %v1704 = vunpack.c.h.b16 %v1631
        %v1705 = vunpack.c.l.b16 %v1632
        %v1706 = vunpack.c.h.b16 %v1632
        %v1707 = vunpack.c.l.b16 %v1633
        %v1708 = vunpack.c.h.b16 %v1633
        %v1709 = vunpack.c.l.b16 %v1634
        %v1710 = vunpack.c.h.b16 %v1634
        %v1711 = vunpack.c.l.b16 %v1635
        %v1712 = vunpack.c.h.b16 %v1635
        %v1713 = vunpack.c.l.b16 %v1636
        %v1714 = vunpack.c.h.b16 %v1636
        %v1715 = vunpack.c.l.b16 %v1637
        %v1716 = vunpack.c.h.b16 %v1637
        %v1717 = vunpack.c.l.b16 %v1638
        %v1718 = vunpack.c.h.b16 %v1638
        %v1719 = vunpack.c.l.b16 %v1639
        %v1720 = vunpack.c.h.b16 %v1639
        %v1721 = vunpack.c.l.b16 %v1640
        %v1722 = vunpack.c.h.b16 %v1640
        %v1723 = vunpack.c.l.b16 %v1641
        %v1724 = vunpack.c.h.b16 %v1641
        %v1725 = vunpack.c.l.b16 %v1642
        %v1726 = vunpack.c.h.b16 %v1642
        %v1727 = vunpack.c.l.b16 %v1643
        %v1728 = vunpack.c.h.b16 %v1643
        %v1729 = vunpack.c.l.b16 %v1644
        %v1730 = vunpack.c.h.b16 %v1644
        %v1731 = vunpack.c.l.b16 %v1645
        %v1732 = vunpack.c.h.b16 %v1645
        %v1733 = vunpack.c.l.b16 %v1646
        %v1734 = vunpack.c.h.b16 %v1646
        %v1735 = vunpack.c.l.b16 %v1647
        %v1736 = vunpack.c.h.b16 %v1647
        %v1737 = vunpack.c.l.b16 %v1648
        %v1738 = vunpack.c.h.b16 %v1648
        %v1739 = vunpack.c.l.b16 %v1649
        %v1740 = vunpack.c.h.b16 %v1649
        %v1741 = vunpack.c.l.b16 %v1650
        %v1742 = vunpack.c.h.b16 %v1650
        %v1743 = vunpack.c.l.b16 %v1651
        %v1744 = vunpack.c.h.b16 %v1651
        %v1745 = vunpack.c.l.b16 %v1652
        %v1746 = vunpack.c.h.b16 %v1652
        %v1747 = vunpack.c.l.b16 %v1653
        %v1748 = vunpack.c.h.b16 %v1653
        %v1749 = vunpack.c.l.b16 %v1654
        %v1750 = vunpack.c.h.b16 %v1654
        %v1751 = vpack.c.b16 %v1687, %v1687
        %v1752 = vpack.c.b16 %v1688, %v1688
        %v1753 = vpack.c.b16 %v1689, %v1689
        %v1754 = vpack.c.b16 %v1690, %v1690
        %v1755 = vpack.c.b16 %v1691, %v1691
        %v1756 = vpack.c.b16 %v1692, %v1692
        %v1757 = vpack.c.b16 %v1693, %v1693
        %v1758 = vpack.c.b16 %v1694, %v1694
        %v1759 = vpack.c.b16 %v1695, %v1695
        %v1760 = vpack.c.b16 %v1696, %v1696
        %v1761 = vpack.c.b16 %v1697, %v1697
        %v1762 = vpack.c.b16 %v1698, %v1698
        %v1763 = vpack.c.b16 %v1699, %v1699
        %v1764 = vpack.c.b16 %v1700, %v1700
        %v1765 = vpack.c.b16 %v1701, %v1701
        %v1766 = vpack.c.b16 %v1702, %v1702
        %v1767 = vpack.c.b16 %v1703, %v1703
        %v1768 = vpack.c.b16 %v1704, %v1704
        %v1769 = vpack.c.b16 %v1705, %v1705
        %v1770 = vpack.c.b16 %v1706, %v1706
        %v1771 = vpack.c.b16 %v1707, %v1707
        %v1772 = vpack.c.b16 %v1708, %v1708
        %v1773 = vpack.c.b16 %v1709, %v1709
        %v1774 = vpack.c.b16 %v1710, %v1710
        %v1775 = vpack.c.b16 %v1711, %v1711
        %v1776 = vpack.c.b16 %v1712, %v1712
        %v1777 = vpack.c.b16 %v1713, %v1713
        %v1778 = vpack.c.b16 %v1714, %v1714
        %v1779 = vpack.c.b16 %v1715, %v1715
        %v1780 = vpack.c.b16 %v1716, %v1716
        %v1781 = vpack.c.b16 %v1717, %v1717
        %v1782 = vpack.c.b16 %v1718, %v1718
        %v1783 = vpack.c.b16 %v1719, %v1719
        %v1784 = vpack.c.b16 %v1720, %v1720
        %v1785 = vpack.c.b16 %v1721, %v1721
        %v1786 = vpack.c.b16 %v1722, %v1722
        %v1787 = vpack.c.b16 %v1723, %v1723
        %v1788 = vpack.c.b16 %v1724, %v1724
        %v1789 = vpack.c.b16 %v1725, %v1725
        %v1790 = vpack.c.b16 %v1726, %v1726
        %v1791 = vpack.c.b16 %v1727, %v1727
        %v1792 = vpack.c.b16 %v1728, %v1728
        %v1793 = vpack.c.b16 %v1729, %v1729
        %v1794 = vpack.c.b16 %v1730, %v1730
        %v1795 = vpack.c.b16 %v1731, %v1731
        %v1796 = vpack.c.b16 %v1732, %v1732
        %v1797 = vpack.c.b16 %v1733, %v1733
        %v1798 = vpack.c.b16 %v1734, %v1734
        %v1799 = vpack.c.b16 %v1735, %v1735
        %v1800 = vpack.c.b16 %v1736, %v1736
        %v1801 = vpack.c.b16 %v1737, %v1737
        %v1802 = vpack.c.b16 %v1738, %v1738
        %v1803 = vpack.c.b16 %v1739, %v1739
        %v1804 = vpack.c.b16 %v1740, %v1740
        %v1805 = vpack.c.b16 %v1741, %v1741
        %v1806 = vpack.c.b16 %v1742, %v1742
        %v1807 = vpack.c.b16 %v1743, %v1743
        %v1808 = vpack.c.b16 %v1744, %v1744
        %v1809 = vpack.c.b16 %v1745, %v1745
        %v1810 = vpack.c.b16 %v1746, %v1746
        %v1811 = vpack.c.b16 %v1747, %v1747
        %v1812 = vpack.c.b16 %v1748, %v1748
        %v1813 = vpack.c.b16 %v1749, %v1749
        %v1814 = vpack.c.b16 %v1750, %v1750
        %1879 = vst [vmem:[%s229] sm:$0xf] %v1751
        %1880 = vst [vmem:[%s229 + $0x4] sm:$0xf] %v1752
        %1881 = vst [vmem:[%s229 + $0x8] sm:$0xf] %v1753
        %1882 = vst [vmem:[%s229 + $0xc] sm:$0xf] %v1754
        %1883 = vst [vmem:[%s229 + $0x10] sm:$0xf] %v1755
        %1884 = vst [vmem:[%s229 + $0x14] sm:$0xf] %v1756
        %1885 = vst [vmem:[%s229 + $0x18] sm:$0xf] %v1757
        %1886 = vst [vmem:[%s229 + $0x1c] sm:$0xf] %v1758
        %1887 = vst [vmem:[%s229 + $0x20] sm:$0xf] %v1759
        %1888 = vst [vmem:[%s229 + $0x24] sm:$0xf] %v1760
        %1889 = vst [vmem:[%s229 + $0x28] sm:$0xf] %v1761
        %1890 = vst [vmem:[%s229 + $0x2c] sm:$0xf] %v1762
        %1891 = vst [vmem:[%s229 + $0x30] sm:$0xf] %v1763
        %1892 = vst [vmem:[%s229 + $0x34] sm:$0xf] %v1764
        %1893 = vst [vmem:[%s229 + $0x38] sm:$0xf] %v1765
        %1894 = vst [vmem:[%s229 + $0x3c] sm:$0xf] %v1766
        %1895 = vst [vmem:[%s229 + $0x40] sm:$0xf] %v1767
        %1896 = vst [vmem:[%s229 + $0x44] sm:$0xf] %v1768
        %1897 = vst [vmem:[%s229 + $0x48] sm:$0xf] %v1769
        %1898 = vst [vmem:[%s229 + $0x4c] sm:$0xf] %v1770
        %1899 = vst [vmem:[%s229 + $0x50] sm:$0xf] %v1771
        %1900 = vst [vmem:[%s229 + $0x54] sm:$0xf] %v1772
        %1901 = vst [vmem:[%s229 + $0x58] sm:$0xf] %v1773
        %1902 = vst [vmem:[%s229 + $0x5c] sm:$0xf] %v1774
        %1903 = vst [vmem:[%s229 + $0x60] sm:$0xf] %v1775
        %1904 = vst [vmem:[%s229 + $0x64] sm:$0xf] %v1776
        %1905 = vst [vmem:[%s229 + $0x68] sm:$0xf] %v1777
        %1906 = vst [vmem:[%s229 + $0x6c] sm:$0xf] %v1778
        %1907 = vst [vmem:[%s229 + $0x70] sm:$0xf] %v1779
        %1908 = vst [vmem:[%s229 + $0x74] sm:$0xf] %v1780
        %1909 = vst [vmem:[%s229 + $0x78] sm:$0xf] %v1781
        %1910 = vst [vmem:[%s229 + $0x7c] sm:$0xf] %v1782
        %1911 = vst [vmem:[%s229 + $0x80] sm:$0xf] %v1783
        %1912 = vst [vmem:[%s229 + $0x84] sm:$0xf] %v1784
        %1913 = vst [vmem:[%s229 + $0x88] sm:$0xf] %v1785
        %1914 = vst [vmem:[%s229 + $0x8c] sm:$0xf] %v1786
        %1915 = vst [vmem:[%s229 + $0x90] sm:$0xf] %v1787
        %1916 = vst [vmem:[%s229 + $0x94] sm:$0xf] %v1788
        %1917 = vst [vmem:[%s229 + $0x98] sm:$0xf] %v1789
        %1918 = vst [vmem:[%s229 + $0x9c] sm:$0xf] %v1790
        %1919 = vst [vmem:[%s229 + $0xa0] sm:$0xf] %v1791
        %1920 = vst [vmem:[%s229 + $0xa4] sm:$0xf] %v1792
        %1921 = vst [vmem:[%s229 + $0xa8] sm:$0xf] %v1793
        %1922 = vst [vmem:[%s229 + $0xac] sm:$0xf] %v1794
        %1923 = vst [vmem:[%s229 + $0xb0] sm:$0xf] %v1795
        %1924 = vst [vmem:[%s229 + $0xb4] sm:$0xf] %v1796
        %1925 = vst [vmem:[%s229 + $0xb8] sm:$0xf] %v1797
        %1926 = vst [vmem:[%s229 + $0xbc] sm:$0xf] %v1798
        %1927 = vst [vmem:[%s229 + $0xc0] sm:$0xf] %v1799
        %1928 = vst [vmem:[%s229 + $0xc4] sm:$0xf] %v1800
        %1929 = vst [vmem:[%s229 + $0xc8] sm:$0xf] %v1801
        %1930 = vst [vmem:[%s229 + $0xcc] sm:$0xf] %v1802
        %1931 = vst [vmem:[%s229 + $0xd0] sm:$0xf] %v1803
        %1932 = vst [vmem:[%s229 + $0xd4] sm:$0xf] %v1804
        %1933 = vst [vmem:[%s229 + $0xd8] sm:$0xf] %v1805
        %1934 = vst [vmem:[%s229 + $0xdc] sm:$0xf] %v1806
        %1935 = vst [vmem:[%s229 + $0xe0] sm:$0xf] %v1807
        %1936 = vst [vmem:[%s229 + $0xe4] sm:$0xf] %v1808
        %1937 = vst [vmem:[%s229 + $0xe8] sm:$0xf] %v1809
        %1938 = vst [vmem:[%s229 + $0xec] sm:$0xf] %v1810
        %1939 = vst [vmem:[%s229 + $0xf0] sm:$0xf] %v1811
        %1940 = vst [vmem:[%s229 + $0xf4] sm:$0xf] %v1812
        %1941 = vst [vmem:[%s229 + $0xf8] sm:$0xf] %v1813
        %1942 = vst [vmem:[%s229 + $0xfc] sm:$0xf] %v1814
      $region48: #{block_forward.2} parent=35 // pred_fallthru
        _
      %s1943 = smul.u32 %s20, %s19
      %s1944 = smul.u32 64, %s1943
      %p1945 = scmp.lt.s32.totalorder %s1944, 63
      %s1946 = scalar_select %p1945, %s1944, 63
      %s1947 = smul.addr %s1946, 4
      %s1948 = scalar_lea.vmem %s4, %s1947
      // Predicated region
      $region53: #{block_forward.2} parent=35 // pred_check
        %p1949 = pneg %p140
      $region54: #{block_forward.2} parent=35 // pred_check_branch
        %1951 = sbr.rel (%p1949) target = $region56
      $region55: #{block_forward.2} parent=35 // pred_region
        %s1952 = smul.u32 %s20, %s19
        %s1953 = smul.u32 64, %s1952
      $region56: #{block_forward.2} parent=35 // pred_fallthru
        _
    $region36: #{block_forward.2} parent=5 // pred_fallthru
      _
    %p1954 = scmp.le.s32.totalorder 2, %s10
    // Predicated region
    $region57: #{block_forward.2} parent=5 // pred_check
      %p1955 = pneg %p1954
    $region58: #{block_forward.2} parent=5 // pred_check_branch
      %1957 = sbr.rel (%p1955) target = $region60
    $region59: #{block_forward.2} parent=5 // pred_region
      %s1958 = ssub.s32 %s10, 2
      // Predicated region
      $region61: #{block_forward.2} parent=59 // pred_check
        %p1959 = pneg %p146
      $region62: #{block_forward.2} parent=59 // pred_check_branch
        %1961 = sbr.rel (%p1959) target = $region64
      $region63: #{block_forward.2} parent=59 // pred_region
        %s1962 = smul.u32 %s22, %s21
        %s1963 = smul.u32 64, %s1962
        %p1964 = scmp.lt.s32.totalorder %s1963, 63
        %s1965 = scalar_select %p1964, %s1963, 63
        %s1966 = smul.addr %s1965, 4
        %s1967 = scalar_lea.vmem %s4, %s1966
      $region64: #{block_forward.2} parent=59 // pred_fallthru
        _
    $region60: #{block_forward.2} parent=5 // pred_fallthru
      _
  $region6: #{block_forward.2} parent=0 // loop_footer
    %s14 = sadd.s32 1, %s10
  $region7: #{block_forward.2} parent=0 // loop_footer_branch
    %9 = sbr.rel target = $region3
  $region8: #{block_forward.2} parent=0 // loop_exit
    _

// kernel: block_forward.3
$region0: #{block_forward.3}
  #allocation0 [shape = 'u32[]', space=smem, size = 0x4, offset = 0x4, fixed_abs, tag = 'smem constant byte address 0x4 - core index']
  #allocation1 [shape = 'u32[144,128]{1,0:T(1,128)}', space=vmem, size = 0x12000, scoped, tag = 'internal scratch']
  #allocation2 [shape = 'bf16[1,512,128]{2,1,0:T(16,128)(2,1)}', space=vmem, size = 0x20000, scoped, tag = 'scratch operand']
  #allocation3 [shape = 'f32[1,128]{1,0:T(1,128)}', space=vmem, size = 0x200, scoped, tag = 'scratch operand']
  #allocation4 [shape = 'f32[1,128]{1,0:T(1,128)}', space=vmem, size = 0x200, scoped, tag = 'scratch operand']
  #allocation5 [shape = 'f32[1,128]{1,0:T(1,128)}', space=vmem, size = 0x200, scoped, tag = 'scratch operand']
  #allocation6 [shape = 'f32[1,128]{1,0:T(1,128)}', space=vmem, size = 0x200, scoped, tag = 'scratch operand']
  %s0 = inlined_call_operand.vmem [shape: bf16[512,72], index: 0, kind: input, shape index: {}]
  %s1 = inlined_call_operand.vmem [shape: bf16[72,128], index: 1, kind: input, shape index: {}]
  %s2 = inlined_call_operand.vmem [shape: f32[1,128], index: 2, kind: input, shape index: {}]
  %s3 = inlined_call_operand.vmem [shape: f32[1,128], index: 3, kind: input, shape index: {}]
  %s4 = inlined_call_operand.vmem [shape: bf16[512,128], index: 4, kind: output, shape index: {}]
  %s5 = sld [smem:[#allocation0]]
  $region65: #{block_forward.3} parent=0
    _
  %s7 = ssub.s32 1, %s5
  %s8 = scalar_select 0, %s7, %s5
  loop: start=0, step=1, limit=4
  $region2: #{block_forward.3} parent=0 // loop_pre_header
    _
  $region3: #{block_forward.3} parent=0 // loop_header
    %s10 = sphi 0, %s14
    %p11 = scmp.ge.s32.totalorder %s10, 4
    %s17 = sphi 0, %s29
    %s18 = sphi 0, %s25
    %s19 = sphi 0, %s17
    %s20 = sphi 0, %s18
    %s21 = sphi 0, %s19
    %s22 = sphi 0, %s20
    %s36 = sphi 0, %s38
    %s39 = sphi 0, %s36
    %s40 = sphi 0, %s39
    %s56 = sphi 0, %s40
    %s60 = sphi 0, %s60
    %s62 = sphi 0, %s60
    %s63 = sphi 0, %s62
    %s77 = sphi 0, %s63
    %s81 = sphi 0, %s81
    %s83 = sphi 0, %s81
    %s84 = sphi 0, %s83
    %s98 = sphi 0, %s84
    %s102 = sphi 0, %s102
    %s104 = sphi 0, %s102
    %s105 = sphi 0, %s104
    %s119 = sphi 0, %s105
    %s127 = sphi 0, %s129
    %s130 = sphi 0, %s127
    %s131 = sphi 0, %s130
    %s147 = sphi 0, %s131
  $region4: #{block_forward.3} parent=0 // loop_header_branch
    %13 = sbr.rel (%p11) target = $region8
  $region5: #{block_forward.3} parent=0 // loop_body
    %s15 = ssub.s32 %s10, 1
    %s16 = ssub.s32 %s10, 2
    %s23 = sadd.s32 1, %s18
    %p24 = scmp.ge.s32.totalorder %s23, 1
    %s25 = scalar_select %p24, 0, %s23
    %s26 = sadd.s32 1, %s17
    %s27 = scalar_select %p24, %s26, %s17
    %p28 = scmp.ge.s32.totalorder %s27, 2
    %s29 = scalar_select %p28, 0, %s27
    %s30 = ssub.s32 1, %s17
    %s31 = smul.u32 %s18, %s30
    %s32 = ssub.s32 1, %s29
    %s33 = smul.u32 %s25, %s32
    %s34 = ssub.s32 %s31, %s33
    %p35 = scmp.eq.s32.totalorder %s34, 0
    %s37 = sadd.s32 %s36, 1
    %s38 = scalar_select %p35, %s36, %s37
    %p41 = pneg %p35
    %p42 = scmp.eq.s32.totalorder %s10, 1
    %p43 = por %p41, %p42
    %p44 = scmp.ne.s32.totalorder %s36, %s39
    %p45 = scmp.eq.s32.totalorder %s10, 0
    %p46 = por %p44, %p45
    %p47 = scmp.ne.s32.totalorder %s36, %s39
    %p48 = scmp.eq.s32.totalorder %s15, 1
    %p49 = por %p47, %p48
    %p50 = scmp.ne.s32.totalorder %s39, %s40
    %p51 = scmp.eq.s32.totalorder %s15, 0
    %p52 = por %p50, %p51
    %p53 = scmp.ne.s32.totalorder %s39, %s40
    %p54 = scmp.eq.s32.totalorder %s16, 1
    %p55 = por %p53, %p54
    %p57 = scmp.ne.s32.totalorder %s40, %s56
    %p58 = scmp.eq.s32.totalorder %s16, 0
    %p59 = por %p57, %p58
    %s61 = sadd.s32 %s60, 1
    %p64 = scmp.eq.s32.totalorder %s10, 1
    %p65 = scmp.ne.s32.totalorder %s60, %s62
    %p66 = scmp.eq.s32.totalorder %s10, 0
    %p67 = por %p65, %p66
    %p68 = scmp.ne.s32.totalorder %s60, %s62
    %p69 = scmp.eq.s32.totalorder %s15, 1
    %p70 = por %p68, %p69
    %p71 = scmp.ne.s32.totalorder %s62, %s63
    %p72 = scmp.eq.s32.totalorder %s15, 0
    %p73 = por %p71, %p72
    %p74 = scmp.ne.s32.totalorder %s62, %s63
    %p75 = scmp.eq.s32.totalorder %s16, 1
    %p76 = por %p74, %p75
    %p78 = scmp.ne.s32.totalorder %s63, %s77
    %p79 = scmp.eq.s32.totalorder %s16, 0
    %p80 = por %p78, %p79
    %s82 = sadd.s32 %s81, 1
    %p85 = scmp.eq.s32.totalorder %s10, 1
    %p86 = scmp.ne.s32.totalorder %s81, %s83
    %p87 = scmp.eq.s32.totalorder %s10, 0
    %p88 = por %p86, %p87
    %p89 = scmp.ne.s32.totalorder %s81, %s83
    %p90 = scmp.eq.s32.totalorder %s15, 1
    %p91 = por %p89, %p90
    %p92 = scmp.ne.s32.totalorder %s83, %s84
    %p93 = scmp.eq.s32.totalorder %s15, 0
    %p94 = por %p92, %p93
    %p95 = scmp.ne.s32.totalorder %s83, %s84
    %p96 = scmp.eq.s32.totalorder %s16, 1
    %p97 = por %p95, %p96
    %p99 = scmp.ne.s32.totalorder %s84, %s98
    %p100 = scmp.eq.s32.totalorder %s16, 0
    %p101 = por %p99, %p100
    %s103 = sadd.s32 %s102, 1
    %p106 = scmp.eq.s32.totalorder %s10, 1
    %p107 = scmp.ne.s32.totalorder %s102, %s104
    %p108 = scmp.eq.s32.totalorder %s10, 0
    %p109 = por %p107, %p108
    %p110 = scmp.ne.s32.totalorder %s102, %s104
    %p111 = scmp.eq.s32.totalorder %s15, 1
    %p112 = por %p110, %p111
    %p113 = scmp.ne.s32.totalorder %s104, %s105
    %p114 = scmp.eq.s32.totalorder %s15, 0
    %p115 = por %p113, %p114
    %p116 = scmp.ne.s32.totalorder %s104, %s105
    %p117 = scmp.eq.s32.totalorder %s16, 1
    %p118 = por %p116, %p117
    %p120 = scmp.ne.s32.totalorder %s105, %s119
    %p121 = scmp.eq.s32.totalorder %s16, 0
    %p122 = por %p120, %p121
    %s123 = smul.u32 %s18, %s17
    %s124 = smul.u32 %s25, %s29
    %s125 = ssub.s32 %s123, %s124
    %p126 = scmp.eq.s32.totalorder %s125, 0
    %s128 = sadd.s32 %s127, 1
    %s129 = scalar_select %p126, %s127, %s128
    %p132 = pneg %p126
    %p133 = scmp.eq.s32.totalorder %s10, 1
    %p134 = por %p132, %p133
    %p135 = scmp.ne.s32.totalorder %s127, %s130
    %p136 = scmp.eq.s32.totalorder %s10, 0
    %p137 = por %p135, %p136
    %p138 = scmp.ne.s32.totalorder %s127, %s130
    %p139 = scmp.eq.s32.totalorder %s15, 1
    %p140 = por %p138, %p139
    %p141 = scmp.ne.s32.totalorder %s130, %s131
    %p142 = scmp.eq.s32.totalorder %s15, 0
    %p143 = por %p141, %p142
    %p144 = scmp.ne.s32.totalorder %s130, %s131
    %p145 = scmp.eq.s32.totalorder %s16, 1
    %p146 = por %p144, %p145
    %p148 = scmp.ne.s32.totalorder %s131, %s147
    %p149 = scmp.eq.s32.totalorder %s16, 0
    %p150 = por %p148, %p149
    %p151 = scmp.le.s32.totalorder 1, %s10
    %p152 = scmp.lt.s32.totalorder %s10, 3
    %p153 = pnand %p151, %p152
    %p154 = pneg %p153
    // Predicated region
    $region9: #{block_forward.3} parent=5 // pred_check
      _
    $region10: #{block_forward.3} parent=5 // pred_check_branch
      %156 = sbr.rel (%p153) target = $region12
    $region11: #{block_forward.3} parent=5 // pred_region
      %s157 = ssub.s32 %s10, 1
      // Predicated region
      $region13: #{block_forward.3} parent=11 // pred_check
        %p158 = pneg %p73
      $region14: #{block_forward.3} parent=11 // pred_check_branch
        %160 = sbr.rel (%p158) target = $region16
      $region15: #{block_forward.3} parent=11 // pred_region
        _
      $region16: #{block_forward.3} parent=11 // pred_fallthru
        _
      // Predicated region
      $region17: #{block_forward.3} parent=11 // pred_check
        %p161 = pneg %p94
      $region18: #{block_forward.3} parent=11 // pred_check_branch
        %163 = sbr.rel (%p161) target = $region20
      $region19: #{block_forward.3} parent=11 // pred_region
        _
      $region20: #{block_forward.3} parent=11 // pred_fallthru
        _
      // Predicated region
      $region21: #{block_forward.3} parent=11 // pred_check
        %p164 = pneg %p115
      $region22: #{block_forward.3} parent=11 // pred_check_branch
        %166 = sbr.rel (%p164) target = $region24
      $region23: #{block_forward.3} parent=11 // pred_region
        _
      $region24: #{block_forward.3} parent=11 // pred_fallthru
        _
    $region12: #{block_forward.3} parent=5 // pred_fallthru
      _
    %p167 = scmp.lt.s32.totalorder %s10, 2
    // Predicated region
    $region25: #{block_forward.3} parent=5 // pred_check
      %p168 = pneg %p167
    $region26: #{block_forward.3} parent=5 // pred_check_branch
      %170 = sbr.rel (%p168) target = $region28
    $region27: #{block_forward.3} parent=5 // pred_region
      // Predicated region
      $region29: #{block_forward.3} parent=27 // pred_check
        %p171 = pneg %p46
      $region30: #{block_forward.3} parent=27 // pred_check_branch
        %173 = sbr.rel (%p171) target = $region32
      $region31: #{block_forward.3} parent=27 // pred_region
        %s174 = ssub.s32 1, %s17
        %s175 = smul.u32 %s18, %s174
        %s176 = smul.u32 64, %s175
        %p177 = scmp.lt.s32.totalorder %s176, 63
        %s178 = scalar_select %p177, %s176, 63
        %s179 = smul.addr %s178, 4
        %s180 = scalar_lea.vmem %s0, %s179
        %s181 = ssub.s32 1, %s17
        %s182 = smul.u32 %s18, %s181
        %s183 = smul.u32 64, %s182
      $region32: #{block_forward.3} parent=27 // pred_fallthru
        _
    $region28: #{block_forward.3} parent=5 // pred_fallthru
      _
    %p184 = scmp.le.s32.totalorder 1, %s10
    %p185 = scmp.lt.s32.totalorder %s10, 3
    %p186 = pnand %p184, %p185
    %p187 = pneg %p186
    // Predicated region
    $region33: #{block_forward.3} parent=5 // pred_check
      _
    $region34: #{block_forward.3} parent=5 // pred_check_branch
      %189 = sbr.rel (%p186) target = $region36
    $region35: #{block_forward.3} parent=5 // pred_region
      %s190 = ssub.s32 %s10, 1
      %s191 = ssub.s32 1, %s19
      %s192 = smul.u32 %s20, %s191
      %s193 = smul.u32 64, %s192
      %p194 = scmp.lt.s32.totalorder %s193, 63
      %s195 = scalar_select %p194, %s193, 63
      %s196 = smul.addr %s195, 4
      %s197 = scalar_lea.vmem %s0, %s196
      %p198 = pneg %p52
      %p199 = pneg %p49
      %p200 = pneg %p73
      %p201 = pneg %p70
      %p202 = pneg %p94
      %p203 = pneg %p91
      %p204 = pneg %p115
      %p205 = pneg %p112
      %p206 = pneg %p143
      %p207 = pneg %p140
      %s208 = smul.u32 %s20, %s19
      %s209 = smul.u32 64, %s208
      %p210 = scmp.lt.s32.totalorder %s209, 63
      %s211 = scalar_select %p210, %s209, 63
      %s212 = smul.addr %s211, 4
      %s213 = scalar_lea.vmem %s4, %s212
      %s214 = ssub.s32 1, %s19
      %s215 = smul.u32 %s20, %s214
      %s216 = smul.u32 64, %s215
      %p217 = scmp.lt.s32.totalorder %s216, 63
      %s218 = scalar_select %p217, %s216, 63
      %s219 = smul.addr %s218, 4
      %s220 = scalar_lea.vmem %s0, %s219
      %s221 = ssub.s32 1, %s19
      %s222 = smul.u32 %s20, %s221
      %s223 = smul.u32 64, %s222
      %s224 = smul.u32 %s20, %s19
      %s225 = smul.u32 64, %s224
      %p226 = scmp.lt.s32.totalorder %s225, 63
      %s227 = scalar_select %p226, %s225, 63
      %s228 = smul.addr %s227, 4
      %s229 = scalar_lea.vmem %s4, %s228
      %s230 = smul.u32 %s20, %s19
      %s231 = smul.u32 64, %s230
      %p233 = scmp.eq.s32.totalorder %s19, 0
      // Predicated region
      $region37: #{block_forward.3} parent=35 // pred_check
        %p234 = pneg %p233
      $region38: #{block_forward.3} parent=35 // pred_check_branch
        %236 = sbr.rel (%p234) target = $region40
      $region39: #{block_forward.3} parent=35 // pred_region
        %p237 = scmp.eq.s32.totalorder %s20, 0
        // Predicated region
        $region41: #{block_forward.3} parent=39 // pred_check
          %p238 = pneg %p237
        $region42: #{block_forward.3} parent=39 // pred_check_branch
          %240 = sbr.rel (%p238) target = $region44
        $region43: #{block_forward.3} parent=39 // pred_region
          %241 = vst [vmem:[#allocation3] sm:$0x1] 0.0
          %242 = vst [vmem:[#allocation4] sm:$0x1] 0.0
        $region44: #{block_forward.3} parent=39 // pred_fallthru
          _
        %v243 = vld [vmem:[%s220] sm:$0xf]
        %v244 = vld [vmem:[%s220 + $0x4] sm:$0xf]
        %v245 = vld [vmem:[%s220 + $0x8] sm:$0xf]
        %v246 = vld [vmem:[%s220 + $0xc] sm:$0xf]
        %v247 = vld [vmem:[%s220 + $0x10] sm:$0xf]
        %v248 = vld [vmem:[%s220 + $0x14] sm:$0xf]
        %v249 = vld [vmem:[%s220 + $0x18] sm:$0xf]
        %v250 = vld [vmem:[%s220 + $0x1c] sm:$0xf]
        %v251 = vld [vmem:[%s220 + $0x20] sm:$0xf]
        %v252 = vld [vmem:[%s220 + $0x24] sm:$0xf]
        %v253 = vld [vmem:[%s220 + $0x28] sm:$0xf]
        %v254 = vld [vmem:[%s220 + $0x2c] sm:$0xf]
        %v255 = vld [vmem:[%s220 + $0x30] sm:$0xf]
        %v256 = vld [vmem:[%s220 + $0x34] sm:$0xf]
        %v257 = vld [vmem:[%s220 + $0x38] sm:$0xf]
        %v258 = vld [vmem:[%s220 + $0x3c] sm:$0xf]
        %v259 = vld [vmem:[%s220 + $0x40] sm:$0xf]
        %v260 = vld [vmem:[%s220 + $0x44] sm:$0xf]
        %v261 = vld [vmem:[%s220 + $0x48] sm:$0xf]
        %v262 = vld [vmem:[%s220 + $0x4c] sm:$0xf]
        %v263 = vld [vmem:[%s220 + $0x50] sm:$0xf]
        %v264 = vld [vmem:[%s220 + $0x54] sm:$0xf]
        %v265 = vld [vmem:[%s220 + $0x58] sm:$0xf]
        %v266 = vld [vmem:[%s220 + $0x5c] sm:$0xf]
        %v267 = vld [vmem:[%s220 + $0x60] sm:$0xf]
        %v268 = vld [vmem:[%s220 + $0x64] sm:$0xf]
        %v269 = vld [vmem:[%s220 + $0x68] sm:$0xf]
        %v270 = vld [vmem:[%s220 + $0x6c] sm:$0xf]
        %v271 = vld [vmem:[%s220 + $0x70] sm:$0xf]
        %v272 = vld [vmem:[%s220 + $0x74] sm:$0xf]
        %v273 = vld [vmem:[%s220 + $0x78] sm:$0xf]
        %v274 = vld [vmem:[%s220 + $0x7c] sm:$0xf]
        %v275 = vld [vmem:[%s220 + $0x80] sm:$0xf]
        %v276 = vld [vmem:[%s220 + $0x84] sm:$0xf]
        %v277 = vld [vmem:[%s220 + $0x88] sm:$0xf]
        %v278 = vld [vmem:[%s220 + $0x8c] sm:$0xf]
        %v279 = vld [vmem:[%s220 + $0x90] sm:$0xf]
        %v280 = vld [vmem:[%s220 + $0x94] sm:$0xf]
        %v281 = vld [vmem:[%s220 + $0x98] sm:$0xf]
        %v282 = vld [vmem:[%s220 + $0x9c] sm:$0xf]
        %v283 = vld [vmem:[%s220 + $0xa0] sm:$0xf]
        %v284 = vld [vmem:[%s220 + $0xa4] sm:$0xf]
        %v285 = vld [vmem:[%s220 + $0xa8] sm:$0xf]
        %v286 = vld [vmem:[%s220 + $0xac] sm:$0xf]
        %v287 = vld [vmem:[%s220 + $0xb0] sm:$0xf]
        %v288 = vld [vmem:[%s220 + $0xb4] sm:$0xf]
        %v289 = vld [vmem:[%s220 + $0xb8] sm:$0xf]
        %v290 = vld [vmem:[%s220 + $0xbc] sm:$0xf]
        %v291 = vld [vmem:[%s220 + $0xc0] sm:$0xf]
        %v292 = vld [vmem:[%s220 + $0xc4] sm:$0xf]
        %v293 = vld [vmem:[%s220 + $0xc8] sm:$0xf]
        %v294 = vld [vmem:[%s220 + $0xcc] sm:$0xf]
        %v295 = vld [vmem:[%s220 + $0xd0] sm:$0xf]
        %v296 = vld [vmem:[%s220 + $0xd4] sm:$0xf]
        %v297 = vld [vmem:[%s220 + $0xd8] sm:$0xf]
        %v298 = vld [vmem:[%s220 + $0xdc] sm:$0xf]
        %v299 = vld [vmem:[%s220 + $0xe0] sm:$0xf]
        %v300 = vld [vmem:[%s220 + $0xe4] sm:$0xf]
        %v301 = vld [vmem:[%s220 + $0xe8] sm:$0xf]
        %v302 = vld [vmem:[%s220 + $0xec] sm:$0xf]
        %v303 = vld [vmem:[%s220 + $0xf0] sm:$0xf]
        %v304 = vld [vmem:[%s220 + $0xf4] sm:$0xf]
        %v305 = vld [vmem:[%s220 + $0xf8] sm:$0xf]
        %v306 = vld [vmem:[%s220 + $0xfc] sm:$0xf]
        %v307 = vld [vmem:[%s1] sm:$0xf]
        %v308 = vld [vmem:[%s1 + $0x4] sm:$0xf]
        %v309 = vld [vmem:[%s1 + $0x8] sm:$0xf]
        %v310 = vld [vmem:[%s1 + $0xc] sm:$0xf]
        %v311 = vld [vmem:[%s1 + $0x10] sm:$0xf]
        %v312 = vld [vmem:[%s1 + $0x14] sm:$0xf]
        %v313 = vld [vmem:[%s1 + $0x18] sm:$0xf]
        %v314 = vld [vmem:[%s1 + $0x1c] sm:$0xf]
        %v315 = vld [vmem:[%s1 + $0x20] sm:$0xf]
        %v380 = vunpack.c.l.b16 %v243
        %v381 = vunpack.c.l.b16 %v244
        %v382 = vunpack.c.l.b16 %v245
        %v383 = vunpack.c.l.b16 %v246
        %v384 = vunpack.c.l.b16 %v247
        %v385 = vunpack.c.l.b16 %v248
        %v386 = vunpack.c.l.b16 %v249
        %v387 = vunpack.c.l.b16 %v250
        %v388 = vunpack.c.l.b16 %v251
        %v389 = vunpack.c.l.b16 %v252
        %v390 = vunpack.c.l.b16 %v253
        %v391 = vunpack.c.l.b16 %v254
        %v392 = vunpack.c.l.b16 %v255
        %v393 = vunpack.c.l.b16 %v256
        %v394 = vunpack.c.l.b16 %v257
        %v395 = vunpack.c.l.b16 %v258
        %v396 = vunpack.c.l.b16 %v259
        %v397 = vunpack.c.l.b16 %v260
        %v398 = vunpack.c.l.b16 %v261
        %v399 = vunpack.c.l.b16 %v262
        %v400 = vunpack.c.l.b16 %v263
        %v401 = vunpack.c.l.b16 %v264
        %v402 = vunpack.c.l.b16 %v265
        %v403 = vunpack.c.l.b16 %v266
        %v404 = vunpack.c.l.b16 %v267
        %v405 = vunpack.c.l.b16 %v268
        %v406 = vunpack.c.l.b16 %v269
        %v407 = vunpack.c.l.b16 %v270
        %v408 = vunpack.c.l.b16 %v271
        %v409 = vunpack.c.l.b16 %v272
        %v410 = vunpack.c.l.b16 %v273
        %v411 = vunpack.c.l.b16 %v274
        %v412 = vunpack.c.l.b16 %v275
        %v413 = vunpack.c.l.b16 %v276
        %v414 = vunpack.c.l.b16 %v277
        %v415 = vunpack.c.l.b16 %v278
        %v416 = vunpack.c.l.b16 %v279
        %v417 = vunpack.c.l.b16 %v280
        %v418 = vunpack.c.l.b16 %v281
        %v419 = vunpack.c.l.b16 %v282
        %v420 = vunpack.c.l.b16 %v283
        %v421 = vunpack.c.l.b16 %v284
        %v422 = vunpack.c.l.b16 %v285
        %v423 = vunpack.c.l.b16 %v286
        %v424 = vunpack.c.l.b16 %v287
        %v425 = vunpack.c.l.b16 %v288
        %v426 = vunpack.c.l.b16 %v289
        %v427 = vunpack.c.l.b16 %v290
        %v428 = vunpack.c.l.b16 %v291
        %v429 = vunpack.c.l.b16 %v292
        %v430 = vunpack.c.l.b16 %v293
        %v431 = vunpack.c.l.b16 %v294
        %v432 = vunpack.c.l.b16 %v295
        %v433 = vunpack.c.l.b16 %v296
        %v434 = vunpack.c.l.b16 %v297
        %v435 = vunpack.c.l.b16 %v298
        %v436 = vunpack.c.l.b16 %v299
        %v437 = vunpack.c.l.b16 %v300
        %v438 = vunpack.c.l.b16 %v301
        %v439 = vunpack.c.l.b16 %v302
        %v440 = vunpack.c.l.b16 %v303
        %v441 = vunpack.c.l.b16 %v304
        %v442 = vunpack.c.l.b16 %v305
        %v443 = vunpack.c.l.b16 %v306
        %v444 = vpack.c.b16 %v381, %v380
        %v445 = vpack.c.b16 %v383, %v382
        %v446 = vpack.c.b16 %v385, %v384
        %v447 = vpack.c.b16 %v387, %v386
        %v448 = vpack.c.b16 %v389, %v388
        %v449 = vpack.c.b16 %v391, %v390
        %v450 = vpack.c.b16 %v393, %v392
        %v451 = vpack.c.b16 %v395, %v394
        %v452 = vpack.c.b16 %v397, %v396
        %v453 = vpack.c.b16 %v399, %v398
        %v454 = vpack.c.b16 %v401, %v400
        %v455 = vpack.c.b16 %v403, %v402
        %v456 = vpack.c.b16 %v405, %v404
        %v457 = vpack.c.b16 %v407, %v406
        %v458 = vpack.c.b16 %v409, %v408
        %v459 = vpack.c.b16 %v411, %v410
        %v460 = vpack.c.b16 %v413, %v412
        %v461 = vpack.c.b16 %v415, %v414
        %v462 = vpack.c.b16 %v417, %v416
        %v463 = vpack.c.b16 %v419, %v418
        %v464 = vpack.c.b16 %v421, %v420
        %v465 = vpack.c.b16 %v423, %v422
        %v466 = vpack.c.b16 %v425, %v424
        %v467 = vpack.c.b16 %v427, %v426
        %v468 = vpack.c.b16 %v429, %v428
        %v469 = vpack.c.b16 %v431, %v430
        %v470 = vpack.c.b16 %v433, %v432
        %v471 = vpack.c.b16 %v435, %v434
        %v472 = vpack.c.b16 %v437, %v436
        %v473 = vpack.c.b16 %v439, %v438
        %v474 = vpack.c.b16 %v441, %v440
        %v475 = vpack.c.b16 %v443, %v442
        %v485 = vunpack.c.l.b16 %v307
        %v486 = vunpack.c.l.b16 %v308
        %v487 = vunpack.c.l.b16 %v309
        %v488 = vunpack.c.l.b16 %v310
        %v489 = vunpack.c.l.b16 %v311
        %v490 = vunpack.c.l.b16 %v312
        %v491 = vunpack.c.l.b16 %v313
        %v492 = vunpack.c.l.b16 %v314
        %v493 = vunpack.c.l.b16 %v315
        %v494 = vpack.c.b16 %v486, %v485
        %v495 = vpack.c.b16 %v488, %v487
        %v496 = vpack.c.b16 %v490, %v489
        %v497 = vpack.c.b16 %v492, %v491
        %v498 = vpack.c.b16 %v493, %v493
        %vm503 = vcmask 588800
        %v505 = vsel %vm503, %v444, 0
        %v508 = vsel %vm503, %v445, 0
        %v511 = vsel %vm503, %v446, 0
        %v514 = vsel %vm503, %v447, 0
        %v517 = vsel %vm503, %v448, 0
        %v520 = vsel %vm503, %v449, 0
        %v523 = vsel %vm503, %v450, 0
        %v526 = vsel %vm503, %v451, 0
        %v529 = vsel %vm503, %v452, 0
        %v532 = vsel %vm503, %v453, 0
        %v535 = vsel %vm503, %v454, 0
        %v538 = vsel %vm503, %v455, 0
        %v541 = vsel %vm503, %v456, 0
        %v544 = vsel %vm503, %v457, 0
        %v547 = vsel %vm503, %v458, 0
        %v550 = vsel %vm503, %v459, 0
        %v553 = vsel %vm503, %v460, 0
        %v556 = vsel %vm503, %v461, 0
        %v559 = vsel %vm503, %v462, 0
        %v562 = vsel %vm503, %v463, 0
        %v565 = vsel %vm503, %v464, 0
        %v568 = vsel %vm503, %v465, 0
        %v571 = vsel %vm503, %v466, 0
        %v574 = vsel %vm503, %v467, 0
        %v577 = vsel %vm503, %v468, 0
        %v580 = vsel %vm503, %v469, 0
        %v583 = vsel %vm503, %v470, 0
        %v586 = vsel %vm503, %v471, 0
        %v589 = vsel %vm503, %v472, 0
        %v592 = vsel %vm503, %v473, 0
        %v595 = vsel %vm503, %v474, 0
        %v598 = vsel %vm503, %v475, 0
        %vm600 = vcmask 1043456
        %v602 = vsel %vm600, %v498, 0
        %604 = vmatprep.subr.bf16.mxu0 0
        %605 = vmatpush1.bf16.msra.mxu0 %v494
        %606 = vmatprep.subr.bf16.mxu0 0
        %607 = vmatpush1.bf16.msra.mxu0 %v495
        %608 = vmatprep.subr.bf16.mxu0 0
        %609 = vmatpush1.bf16.msra.mxu0 %v496
        %610 = vmatprep.subr.bf16.mxu0 0
        %611 = vmatpush1.bf16.msra.mxu0 %v497
        %612 = vmatprep.subr.bf16.mxu0 0
        %613 = vmatpush1.bf16.msra.mxu0 %v602
        %614 = vmatprep.subr.bf16.mxu0 0
        %615 = vmatpush1.bf16.msra.mxu0 0
        %616 = vmatprep.subr.bf16.mxu0 0
        %617 = vmatpush1.bf16.msra.mxu0 0
        %618 = vmatprep.subr.bf16.mxu0 0
        %619 = vmatpush1.bf16.msra.mxu0 0
        %620 = vmatprep.subr.bf16.mxu0 0
        %621 = vmatpush1.bf16.msra.mxu0 0
        %622 = vmatprep.subr.bf16.mxu0 0
        %623 = vmatpush1.bf16.msra.mxu0 0
        %624 = vmatprep.subr.bf16.mxu0 0
        %625 = vmatpush1.bf16.msra.mxu0 0
        %626 = vmatprep.subr.bf16.mxu0 0
        %627 = vmatpush1.bf16.msra.mxu0 0
        %628 = vmatprep.subr.bf16.mxu0 0
        %629 = vmatpush1.bf16.msra.mxu0 0
        %630 = vmatprep.subr.bf16.mxu0 0
        %631 = vmatpush1.bf16.msra.mxu0 0
        %632 = vmatprep.subr.bf16.mxu0 0
        %633 = vmatpush1.bf16.msra.mxu0 0
        %634 = vmatprep.subr.bf16.mxu0 0
        %635 = vmatpush1.bf16.msra.mxu0 0
        %636 = vmatprep.mubr.bf16.mxu0 0
        %637 = vmatmul.mubr.bf16.gmra.mrb[0].mxu0 %v505
        %v638 = vpop.f32.mrb[0].mxu0
        %v639 = vadd.f32 0.0, %v638
        %v640 = vpop.f32.mrb[0].mxu0
        %v641 = vpop.f32.mrb[0].mxu0
        %v642 = vadd.f32 0.0, %v641
        %v643 = vpop.f32.mrb[0].mxu0
        %644 = vmatprep.mubr.bf16.mxu0 0
        %645 = vmatmul.mubr.bf16.gmra.mrb[0].mxu0 %v508
        %v646 = vpop.f32.mrb[0].mxu0
        %v647 = vadd.f32 0.0, %v646
        %v648 = vpop.f32.mrb[0].mxu0
        %v649 = vpop.f32.mrb[0].mxu0
        %v650 = vadd.f32 0.0, %v649
        %v651 = vpop.f32.mrb[0].mxu0
        %652 = vmatprep.mubr.bf16.mxu0 0
        %653 = vmatmul.mubr.bf16.gmra.mrb[0].mxu0 %v511
        %v654 = vpop.f32.mrb[0].mxu0
        %v655 = vadd.f32 0.0, %v654
        %v656 = vpop.f32.mrb[0].mxu0
        %v657 = vpop.f32.mrb[0].mxu0
        %v658 = vadd.f32 0.0, %v657
        %v659 = vpop.f32.mrb[0].mxu0
        %660 = vmatprep.mubr.bf16.mxu0 0
        %661 = vmatmul.mubr.bf16.gmra.mrb[0].mxu0 %v514
        %v662 = vpop.f32.mrb[0].mxu0
        %v663 = vadd.f32 0.0, %v662
        %v664 = vpop.f32.mrb[0].mxu0
        %v665 = vpop.f32.mrb[0].mxu0
        %v666 = vadd.f32 0.0, %v665
        %v667 = vpop.f32.mrb[0].mxu0
        %668 = vmatprep.mubr.bf16.mxu0 0
        %669 = vmatmul.mubr.bf16.gmra.mrb[0].mxu0 %v517
        %v670 = vpop.f32.mrb[0].mxu0
        %v671 = vadd.f32 0.0, %v670
        %v672 = vpop.f32.mrb[0].mxu0
        %v673 = vpop.f32.mrb[0].mxu0
        %v674 = vadd.f32 0.0, %v673
        %v675 = vpop.f32.mrb[0].mxu0
        %676 = vmatprep.mubr.bf16.mxu0 0
        %677 = vmatmul.mubr.bf16.gmra.mrb[0].mxu0 %v520
        %v678 = vpop.f32.mrb[0].mxu0
        %v679 = vadd.f32 0.0, %v678
        %v680 = vpop.f32.mrb[0].mxu0
        %v681 = vpop.f32.mrb[0].mxu0
        %v682 = vadd.f32 0.0, %v681
        %v683 = vpop.f32.mrb[0].mxu0
        %684 = vmatprep.mubr.bf16.mxu0 0
        %685 = vmatmul.mubr.bf16.gmra.mrb[0].mxu0 %v523
        %v686 = vpop.f32.mrb[0].mxu0
        %v687 = vadd.f32 0.0, %v686
        %v688 = vpop.f32.mrb[0].mxu0
        %v689 = vpop.f32.mrb[0].mxu0
        %v690 = vadd.f32 0.0, %v689
        %v691 = vpop.f32.mrb[0].mxu0
        %692 = vmatprep.mubr.bf16.mxu0 0
        %693 = vmatmul.mubr.bf16.gmra.mrb[0].mxu0 %v526
        %v694 = vpop.f32.mrb[0].mxu0
        %v695 = vadd.f32 0.0, %v694
        %v696 = vpop.f32.mrb[0].mxu0
        %v697 = vpop.f32.mrb[0].mxu0
        %v698 = vadd.f32 0.0, %v697
        %v699 = vpop.f32.mrb[0].mxu0
        %700 = vmatprep.mubr.bf16.mxu0 0
        %701 = vmatmul.mubr.bf16.gmra.mrb[0].mxu0 %v529
        %v702 = vpop.f32.mrb[0].mxu0
        %v703 = vadd.f32 0.0, %v702
        %v704 = vpop.f32.mrb[0].mxu0
        %v705 = vpop.f32.mrb[0].mxu0
        %v706 = vadd.f32 0.0, %v705
        %v707 = vpop.f32.mrb[0].mxu0
        %708 = vmatprep.mubr.bf16.mxu0 0
        %709 = vmatmul.mubr.bf16.gmra.mrb[0].mxu0 %v532
        %v710 = vpop.f32.mrb[0].mxu0
        %v711 = vadd.f32 0.0, %v710
        %v712 = vpop.f32.mrb[0].mxu0
        %v713 = vpop.f32.mrb[0].mxu0
        %v714 = vadd.f32 0.0, %v713
        %v715 = vpop.f32.mrb[0].mxu0
        %716 = vmatprep.mubr.bf16.mxu0 0
        %717 = vmatmul.mubr.bf16.gmra.mrb[0].mxu0 %v535
        %v718 = vpop.f32.mrb[0].mxu0
        %v719 = vadd.f32 0.0, %v718
        %v720 = vpop.f32.mrb[0].mxu0
        %v721 = vpop.f32.mrb[0].mxu0
        %v722 = vadd.f32 0.0, %v721
        %v723 = vpop.f32.mrb[0].mxu0
        %724 = vmatprep.mubr.bf16.mxu0 0
        %725 = vmatmul.mubr.bf16.gmra.mrb[0].mxu0 %v538
        %v726 = vpop.f32.mrb[0].mxu0
        %v727 = vadd.f32 0.0, %v726
        %v728 = vpop.f32.mrb[0].mxu0
        %v729 = vpop.f32.mrb[0].mxu0
        %v730 = vadd.f32 0.0, %v729
        %v731 = vpop.f32.mrb[0].mxu0
        %732 = vmatprep.mubr.bf16.mxu0 0
        %733 = vmatmul.mubr.bf16.gmra.mrb[0].mxu0 %v541
        %v734 = vpop.f32.mrb[0].mxu0
        %v735 = vadd.f32 0.0, %v734
        %v736 = vpop.f32.mrb[0].mxu0
        %v737 = vpop.f32.mrb[0].mxu0
        %v738 = vadd.f32 0.0, %v737
        %v739 = vpop.f32.mrb[0].mxu0
        %740 = vmatprep.mubr.bf16.mxu0 0
        %741 = vmatmul.mubr.bf16.gmra.mrb[0].mxu0 %v544
        %v742 = vpop.f32.mrb[0].mxu0
        %v743 = vadd.f32 0.0, %v742
        %v744 = vpop.f32.mrb[0].mxu0
        %v745 = vpop.f32.mrb[0].mxu0
        %v746 = vadd.f32 0.0, %v745
        %v747 = vpop.f32.mrb[0].mxu0
        %748 = vmatprep.mubr.bf16.mxu0 0
        %749 = vmatmul.mubr.bf16.gmra.mrb[0].mxu0 %v547
        %v750 = vpop.f32.mrb[0].mxu0
        %v751 = vadd.f32 0.0, %v750
        %v752 = vpop.f32.mrb[0].mxu0
        %v753 = vpop.f32.mrb[0].mxu0
        %v754 = vadd.f32 0.0, %v753
        %v755 = vpop.f32.mrb[0].mxu0
        %756 = vmatprep.mubr.bf16.mxu0 0
        %757 = vmatmul.mubr.bf16.gmra.mrb[0].mxu0 %v550
        %v758 = vpop.f32.mrb[0].mxu0
        %v759 = vadd.f32 0.0, %v758
        %v760 = vpop.f32.mrb[0].mxu0
        %v761 = vpop.f32.mrb[0].mxu0
        %v762 = vadd.f32 0.0, %v761
        %v763 = vpop.f32.mrb[0].mxu0
        %764 = vmatprep.mubr.bf16.mxu0 0
        %765 = vmatmul.mubr.bf16.gmra.mrb[0].mxu0 %v553
        %v766 = vpop.f32.mrb[0].mxu0
        %v767 = vadd.f32 0.0, %v766
        %v768 = vpop.f32.mrb[0].mxu0
        %v769 = vpop.f32.mrb[0].mxu0
        %v770 = vadd.f32 0.0, %v769
        %v771 = vpop.f32.mrb[0].mxu0
        %772 = vmatprep.mubr.bf16.mxu0 0
        %773 = vmatmul.mubr.bf16.gmra.mrb[0].mxu0 %v556
        %v774 = vpop.f32.mrb[0].mxu0
        %v775 = vadd.f32 0.0, %v774
        %v776 = vpop.f32.mrb[0].mxu0
        %v777 = vpop.f32.mrb[0].mxu0
        %v778 = vadd.f32 0.0, %v777
        %v779 = vpop.f32.mrb[0].mxu0
        %780 = vmatprep.mubr.bf16.mxu0 0
        %781 = vmatmul.mubr.bf16.gmra.mrb[0].mxu0 %v559
        %v782 = vpop.f32.mrb[0].mxu0
        %v783 = vadd.f32 0.0, %v782
        %v784 = vpop.f32.mrb[0].mxu0
        %v785 = vpop.f32.mrb[0].mxu0
        %v786 = vadd.f32 0.0, %v785
        %v787 = vpop.f32.mrb[0].mxu0
        %788 = vmatprep.mubr.bf16.mxu0 0
        %789 = vmatmul.mubr.bf16.gmra.mrb[0].mxu0 %v562
        %v790 = vpop.f32.mrb[0].mxu0
        %v791 = vadd.f32 0.0, %v790
        %v792 = vpop.f32.mrb[0].mxu0
        %v793 = vpop.f32.mrb[0].mxu0
        %v794 = vadd.f32 0.0, %v793
        %v795 = vpop.f32.mrb[0].mxu0
        %796 = vmatprep.mubr.bf16.mxu0 0
        %797 = vmatmul.mubr.bf16.gmra.mrb[0].mxu0 %v565
        %v798 = vpop.f32.mrb[0].mxu0
        %v799 = vadd.f32 0.0, %v798
        %v800 = vpop.f32.mrb[0].mxu0
        %v801 = vpop.f32.mrb[0].mxu0
        %v802 = vadd.f32 0.0, %v801
        %v803 = vpop.f32.mrb[0].mxu0
        %804 = vmatprep.mubr.bf16.mxu0 0
        %805 = vmatmul.mubr.bf16.gmra.mrb[0].mxu0 %v568
        %v806 = vpop.f32.mrb[0].mxu0
        %v807 = vadd.f32 0.0, %v806
        %v808 = vpop.f32.mrb[0].mxu0
        %v809 = vpop.f32.mrb[0].mxu0
        %v810 = vadd.f32 0.0, %v809
        %v811 = vpop.f32.mrb[0].mxu0
        %812 = vmatprep.mubr.bf16.mxu0 0
        %813 = vmatmul.mubr.bf16.gmra.mrb[0].mxu0 %v571
        %v814 = vpop.f32.mrb[0].mxu0
        %v815 = vadd.f32 0.0, %v814
        %v816 = vpop.f32.mrb[0].mxu0
        %v817 = vpop.f32.mrb[0].mxu0
        %v818 = vadd.f32 0.0, %v817
        %v819 = vpop.f32.mrb[0].mxu0
        %820 = vmatprep.mubr.bf16.mxu0 0
        %821 = vmatmul.mubr.bf16.gmra.mrb[0].mxu0 %v574
        %v822 = vpop.f32.mrb[0].mxu0
        %v823 = vadd.f32 0.0, %v822
        %v824 = vpop.f32.mrb[0].mxu0
        %v825 = vpop.f32.mrb[0].mxu0
        %v826 = vadd.f32 0.0, %v825
        %v827 = vpop.f32.mrb[0].mxu0
        %828 = vmatprep.mubr.bf16.mxu0 0
        %829 = vmatmul.mubr.bf16.gmra.mrb[0].mxu0 %v577
        %v830 = vpop.f32.mrb[0].mxu0
        %v831 = vadd.f32 0.0, %v830
        %v832 = vpop.f32.mrb[0].mxu0
        %v833 = vpop.f32.mrb[0].mxu0
        %v834 = vadd.f32 0.0, %v833
        %v835 = vpop.f32.mrb[0].mxu0
        %836 = vmatprep.mubr.bf16.mxu0 0
        %837 = vmatmul.mubr.bf16.gmra.mrb[0].mxu0 %v580
        %v838 = vpop.f32.mrb[0].mxu0
        %v839 = vadd.f32 0.0, %v838
        %v840 = vpop.f32.mrb[0].mxu0
        %v841 = vpop.f32.mrb[0].mxu0
        %v842 = vadd.f32 0.0, %v841
        %v843 = vpop.f32.mrb[0].mxu0
        %844 = vmatprep.mubr.bf16.mxu0 0
        %845 = vmatmul.mubr.bf16.gmra.mrb[0].mxu0 %v583
        %v846 = vpop.f32.mrb[0].mxu0
        %v847 = vadd.f32 0.0, %v846
        %v848 = vpop.f32.mrb[0].mxu0
        %v849 = vpop.f32.mrb[0].mxu0
        %v850 = vadd.f32 0.0, %v849
        %v851 = vpop.f32.mrb[0].mxu0
        %852 = vmatprep.mubr.bf16.mxu0 0
        %853 = vmatmul.mubr.bf16.gmra.mrb[0].mxu0 %v586
        %v854 = vpop.f32.mrb[0].mxu0
        %v855 = vadd.f32 0.0, %v854
        %v856 = vpop.f32.mrb[0].mxu0
        %v857 = vpop.f32.mrb[0].mxu0
        %v858 = vadd.f32 0.0, %v857
        %v859 = vpop.f32.mrb[0].mxu0
        %860 = vmatprep.mubr.bf16.mxu0 0
        %861 = vmatmul.mubr.bf16.gmra.mrb[0].mxu0 %v589
        %v862 = vpop.f32.mrb[0].mxu0
        %v863 = vadd.f32 0.0, %v862
        %v864 = vpop.f32.mrb[0].mxu0
        %v865 = vpop.f32.mrb[0].mxu0
        %v866 = vadd.f32 0.0, %v865
        %v867 = vpop.f32.mrb[0].mxu0
        %868 = vmatprep.mubr.bf16.mxu0 0
        %869 = vmatmul.mubr.bf16.gmra.mrb[0].mxu0 %v592
        %v870 = vpop.f32.mrb[0].mxu0
        %v871 = vadd.f32 0.0, %v870
        %v872 = vpop.f32.mrb[0].mxu0
        %v873 = vpop.f32.mrb[0].mxu0
        %v874 = vadd.f32 0.0, %v873
        %v875 = vpop.f32.mrb[0].mxu0
        %876 = vmatprep.mubr.bf16.mxu0 0
        %877 = vmatmul.mubr.bf16.gmra.mrb[0].mxu0 %v595
        %v878 = vpop.f32.mrb[0].mxu0
        %v879 = vadd.f32 0.0, %v878
        %v880 = vpop.f32.mrb[0].mxu0
        %v881 = vpop.f32.mrb[0].mxu0
        %v882 = vadd.f32 0.0, %v881
        %v883 = vpop.f32.mrb[0].mxu0
        %884 = vmatprep.mubr.bf16.mxu0 0
        %885 = vmatmul.mubr.bf16.gmra.mrb[0].mxu0 %v598
        %v886 = vpop.f32.mrb[0].mxu0
        %v887 = vadd.f32 0.0, %v886
        %v888 = vpop.f32.mrb[0].mxu0
        %v889 = vpop.f32.mrb[0].mxu0
        %v890 = vadd.f32 0.0, %v889
        %v891 = vpop.f32.mrb[0].mxu0
        %892 = vdwg.mxu0
        %v893 = vpack.c.bf16 %v642, %v639
        %v894 = vpack.c.bf16 %v650, %v647
        %v895 = vpack.c.bf16 %v658, %v655
        %v896 = vpack.c.bf16 %v666, %v663
        %v897 = vpack.c.bf16 %v674, %v671
        %v898 = vpack.c.bf16 %v682, %v679
        %v899 = vpack.c.bf16 %v690, %v687
        %v900 = vpack.c.bf16 %v698, %v695
        %v901 = vpack.c.bf16 %v706, %v703
        %v902 = vpack.c.bf16 %v714, %v711
        %v903 = vpack.c.bf16 %v722, %v719
        %v904 = vpack.c.bf16 %v730, %v727
        %v905 = vpack.c.bf16 %v738, %v735
        %v906 = vpack.c.bf16 %v746, %v743
        %v907 = vpack.c.bf16 %v754, %v751
        %v908 = vpack.c.bf16 %v762, %v759
        %v909 = vpack.c.bf16 %v770, %v767
        %v910 = vpack.c.bf16 %v778, %v775
        %v911 = vpack.c.bf16 %v786, %v783
        %v912 = vpack.c.bf16 %v794, %v791
        %v913 = vpack.c.bf16 %v802, %v799
        %v914 = vpack.c.bf16 %v810, %v807
        %v915 = vpack.c.bf16 %v818, %v815
        %v916 = vpack.c.bf16 %v826, %v823
        %v917 = vpack.c.bf16 %v834, %v831
        %v918 = vpack.c.bf16 %v842, %v839
        %v919 = vpack.c.bf16 %v850, %v847
        %v920 = vpack.c.bf16 %v858, %v855
        %v921 = vpack.c.bf16 %v866, %v863
        %v922 = vpack.c.bf16 %v874, %v871
        %v923 = vpack.c.bf16 %v882, %v879
        %v924 = vpack.c.bf16 %v890, %v887
        %s925 = smul.u32 %s20, 32
        %s926 = smul.addr %s925, 8
        %s927 = scalar_lea.vmem [#allocation2], %s926
        %928 = vst [vmem:[%s927] sm:$0xff] %v893
        %929 = vst [vmem:[%s927 + $0x8] sm:$0xff] %v894
        %930 = vst [vmem:[%s927 + $0x10] sm:$0xff] %v895
        %931 = vst [vmem:[%s927 + $0x18] sm:$0xff] %v896
        %932 = vst [vmem:[%s927 + $0x20] sm:$0xff] %v897
        %933 = vst [vmem:[%s927 + $0x28] sm:$0xff] %v898
        %934 = vst [vmem:[%s927 + $0x30] sm:$0xff] %v899
        %935 = vst [vmem:[%s927 + $0x38] sm:$0xff] %v900
        %936 = vst [vmem:[%s927 + $0x40] sm:$0xff] %v901
        %937 = vst [vmem:[%s927 + $0x48] sm:$0xff] %v902
        %938 = vst [vmem:[%s927 + $0x50] sm:$0xff] %v903
        %939 = vst [vmem:[%s927 + $0x58] sm:$0xff] %v904
        %940 = vst [vmem:[%s927 + $0x60] sm:$0xff] %v905
        %941 = vst [vmem:[%s927 + $0x68] sm:$0xff] %v906
        %942 = vst [vmem:[%s927 + $0x70] sm:$0xff] %v907
        %943 = vst [vmem:[%s927 + $0x78] sm:$0xff] %v908
        %944 = vst [vmem:[%s927 + $0x80] sm:$0xff] %v909
        %945 = vst [vmem:[%s927 + $0x88] sm:$0xff] %v910
        %946 = vst [vmem:[%s927 + $0x90] sm:$0xff] %v911
        %947 = vst [vmem:[%s927 + $0x98] sm:$0xff] %v912
        %948 = vst [vmem:[%s927 + $0xa0] sm:$0xff] %v913
        %949 = vst [vmem:[%s927 + $0xa8] sm:$0xff] %v914
        %950 = vst [vmem:[%s927 + $0xb0] sm:$0xff] %v915
        %951 = vst [vmem:[%s927 + $0xb8] sm:$0xff] %v916
        %952 = vst [vmem:[%s927 + $0xc0] sm:$0xff] %v917
        %953 = vst [vmem:[%s927 + $0xc8] sm:$0xff] %v918
        %954 = vst [vmem:[%s927 + $0xd0] sm:$0xff] %v919
        %955 = vst [vmem:[%s927 + $0xd8] sm:$0xff] %v920
        %956 = vst [vmem:[%s927 + $0xe0] sm:$0xff] %v921
        %957 = vst [vmem:[%s927 + $0xe8] sm:$0xff] %v922
        %958 = vst [vmem:[%s927 + $0xf0] sm:$0xff] %v923
        %959 = vst [vmem:[%s927 + $0xf8] sm:$0xff] %v924
        %v960 = vld [vmem:[#allocation3] sm:$0x1]
        %961 = vmatprep.subr.mxu0 0.0
        %962 = vmatpush1.msra.mxu0 %v639
        %963 = vmatprep.subr.mxu0 0.0
        %964 = vmatpush1.msra.mxu0 %v642
        %965 = vmatprep.subr.mxu0 0.0
        %966 = vmatpush1.msra.mxu0 %v647
        %967 = vmatprep.subr.mxu0 0.0
        %968 = vmatpush1.msra.mxu0 %v650
        %969 = vmatprep.subr.mxu0 0.0
        %970 = vmatpush1.msra.mxu0 %v655
        %971 = vmatprep.subr.mxu0 0.0
        %972 = vmatpush1.msra.mxu0 %v658
        %973 = vmatprep.subr.mxu0 0.0
        %974 = vmatpush1.msra.mxu0 %v663
        %975 = vmatprep.subr.mxu0 0.0
        %976 = vmatpush1.msra.mxu0 %v666
        %977 = vmatprep.subr.mxu0 0.0
        %978 = vmatpush1.msra.mxu0 %v671
        %979 = vmatprep.subr.mxu0 0.0
        %980 = vmatpush1.msra.mxu0 %v674
        %981 = vmatprep.subr.mxu0 0.0
        %982 = vmatpush1.msra.mxu0 %v679
        %983 = vmatprep.subr.mxu0 0.0
        %984 = vmatpush1.msra.mxu0 %v682
        %985 = vmatprep.subr.mxu0 0.0
        %986 = vmatpush1.msra.mxu0 %v687
        %987 = vmatprep.subr.mxu0 0.0
        %988 = vmatpush1.msra.mxu0 %v690
        %989 = vmatprep.subr.mxu0 0.0
        %990 = vmatpush1.msra.mxu0 %v695
        %991 = vmatprep.subr.mxu0 0.0
        %992 = vmatpush1.msra.mxu0 %v698
        %993 = vmatprep.subr.mxu0 0.0
        %994 = vmatpush1.msra.mxu0 %v703
        %995 = vmatprep.subr.mxu0 0.0
        %996 = vmatpush1.msra.mxu0 %v706
        %997 = vmatprep.subr.mxu0 0.0
        %998 = vmatpush1.msra.mxu0 %v711
        %999 = vmatprep.subr.mxu0 0.0
        %1000 = vmatpush1.msra.mxu0 %v714
        %1001 = vmatprep.subr.mxu0 0.0
        %1002 = vmatpush1.msra.mxu0 %v719
        %1003 = vmatprep.subr.mxu0 0.0
        %1004 = vmatpush1.msra.mxu0 %v722
        %1005 = vmatprep.subr.mxu0 0.0
        %1006 = vmatpush1.msra.mxu0 %v727
        %1007 = vmatprep.subr.mxu0 0.0
        %1008 = vmatpush1.msra.mxu0 %v730
        %1009 = vmatprep.subr.mxu0 0.0
        %1010 = vmatpush1.msra.mxu0 %v735
        %1011 = vmatprep.subr.mxu0 0.0
        %1012 = vmatpush1.msra.mxu0 %v738
        %1013 = vmatprep.subr.mxu0 0.0
        %1014 = vmatpush1.msra.mxu0 %v743
        %1015 = vmatprep.subr.mxu0 0.0
        %1016 = vmatpush1.msra.mxu0 %v746
        %1017 = vmatprep.subr.mxu0 0.0
        %1018 = vmatpush1.msra.mxu0 %v751
        %1019 = vmatprep.subr.mxu0 0.0
        %1020 = vmatpush1.msra.mxu0 %v754
        %1021 = vmatprep.subr.mxu0 0.0
        %1022 = vmatpush1.msra.mxu0 %v759
        %1023 = vmatprep.subr.mxu0 0.0
        %1024 = vmatpush1.msra.mxu0 %v762
        %1025 = vmatprep.mubr.f32.mxu0 1.0
        %1026 = vmatmul.mubr.f32.gmra.mrb[0].mxu0 1.0
        %v1027 = vpop.f32.mrb[0].mxu0
        %v1028 = vadd.f32 0.0, %v1027
        %v1029 = vpop.f32.mrb[0].mxu0
        %1030 = vdwg.mxu0
        %1031 = vmatprep.subr.mxu0 0.0
        %1032 = vmatpush1.msra.mxu0 %v767
        %1033 = vmatprep.subr.mxu0 0.0
        %1034 = vmatpush1.msra.mxu0 %v770
        %1035 = vmatprep.subr.mxu0 0.0
        %1036 = vmatpush1.msra.mxu0 %v775
        %1037 = vmatprep.subr.mxu0 0.0
        %1038 = vmatpush1.msra.mxu0 %v778
        %1039 = vmatprep.subr.mxu0 0.0
        %1040 = vmatpush1.msra.mxu0 %v783
        %1041 = vmatprep.subr.mxu0 0.0
        %1042 = vmatpush1.msra.mxu0 %v786
        %1043 = vmatprep.subr.mxu0 0.0
        %1044 = vmatpush1.msra.mxu0 %v791
        %1045 = vmatprep.subr.mxu0 0.0
        %1046 = vmatpush1.msra.mxu0 %v794
        %1047 = vmatprep.subr.mxu0 0.0
        %1048 = vmatpush1.msra.mxu0 %v799
        %1049 = vmatprep.subr.mxu0 0.0
        %1050 = vmatpush1.msra.mxu0 %v802
        %1051 = vmatprep.subr.mxu0 0.0
        %1052 = vmatpush1.msra.mxu0 %v807
        %1053 = vmatprep.subr.mxu0 0.0
        %1054 = vmatpush1.msra.mxu0 %v810
        %1055 = vmatprep.subr.mxu0 0.0
        %1056 = vmatpush1.msra.mxu0 %v815
        %1057 = vmatprep.subr.mxu0 0.0
        %1058 = vmatpush1.msra.mxu0 %v818
        %1059 = vmatprep.subr.mxu0 0.0
        %1060 = vmatpush1.msra.mxu0 %v823
        %1061 = vmatprep.subr.mxu0 0.0
        %1062 = vmatpush1.msra.mxu0 %v826
        %1063 = vmatprep.subr.mxu0 0.0
        %1064 = vmatpush1.msra.mxu0 %v831
        %1065 = vmatprep.subr.mxu0 0.0
        %1066 = vmatpush1.msra.mxu0 %v834
        %1067 = vmatprep.subr.mxu0 0.0
        %1068 = vmatpush1.msra.mxu0 %v839
        %1069 = vmatprep.subr.mxu0 0.0
        %1070 = vmatpush1.msra.mxu0 %v842
        %1071 = vmatprep.subr.mxu0 0.0
        %1072 = vmatpush1.msra.mxu0 %v847
        %1073 = vmatprep.subr.mxu0 0.0
        %1074 = vmatpush1.msra.mxu0 %v850
        %1075 = vmatprep.subr.mxu0 0.0
        %1076 = vmatpush1.msra.mxu0 %v855
        %1077 = vmatprep.subr.mxu0 0.0
        %1078 = vmatpush1.msra.mxu0 %v858
        %1079 = vmatprep.subr.mxu0 0.0
        %1080 = vmatpush1.msra.mxu0 %v863
        %1081 = vmatprep.subr.mxu0 0.0
        %1082 = vmatpush1.msra.mxu0 %v866
        %1083 = vmatprep.subr.mxu0 0.0
        %1084 = vmatpush1.msra.mxu0 %v871
        %1085 = vmatprep.subr.mxu0 0.0
        %1086 = vmatpush1.msra.mxu0 %v874
        %1087 = vmatprep.subr.mxu0 0.0
        %1088 = vmatpush1.msra.mxu0 %v879
        %1089 = vmatprep.subr.mxu0 0.0
        %1090 = vmatpush1.msra.mxu0 %v882
        %1091 = vmatprep.subr.mxu0 0.0
        %1092 = vmatpush1.msra.mxu0 %v887
        %1093 = vmatprep.subr.mxu0 0.0
        %1094 = vmatpush1.msra.mxu0 %v890
        %1095 = vmatprep.mubr.f32.mxu0 1.0
        %1096 = vmatmul.mubr.f32.gmra.mrb[0].mxu0 1.0
        %v1097 = vpop.f32.mrb[0].mxu0
        %v1098 = vadd.f32 %v1028, %v1097
        %v1099 = vpop.f32.mrb[0].mxu0
        %1100 = vdwg.mxu0
        %v1101 = vadd.f32 %v960, %v1098
        %1102 = vst [vmem:[#allocation3] sm:$0x1] %v1101
        %v1103 = vld [vmem:[#allocation4] sm:$0x1]
        %v1104 = vmul.f32 %v639, %v639
        %v1105 = vmul.f32 %v642, %v642
        %v1106 = vmul.f32 %v647, %v647
        %v1107 = vmul.f32 %v650, %v650
        %v1108 = vmul.f32 %v655, %v655
        %v1109 = vmul.f32 %v658, %v658
        %v1110 = vmul.f32 %v663, %v663
        %v1111 = vmul.f32 %v666, %v666
        %v1112 = vmul.f32 %v671, %v671
        %v1113 = vmul.f32 %v674, %v674
        %v1114 = vmul.f32 %v679, %v679
        %v1115 = vmul.f32 %v682, %v682
        %v1116 = vmul.f32 %v687, %v687
        %v1117 = vmul.f32 %v690, %v690
        %v1118 = vmul.f32 %v695, %v695
        %v1119 = vmul.f32 %v698, %v698
        %v1120 = vmul.f32 %v703, %v703
        %v1121 = vmul.f32 %v706, %v706
        %v1122 = vmul.f32 %v711, %v711
        %v1123 = vmul.f32 %v714, %v714
        %v1124 = vmul.f32 %v719, %v719
        %v1125 = vmul.f32 %v722, %v722
        %v1126 = vmul.f32 %v727, %v727
        %v1127 = vmul.f32 %v730, %v730
        %v1128 = vmul.f32 %v735, %v735
        %v1129 = vmul.f32 %v738, %v738
        %v1130 = vmul.f32 %v743, %v743
        %v1131 = vmul.f32 %v746, %v746
        %v1132 = vmul.f32 %v751, %v751
        %v1133 = vmul.f32 %v754, %v754
        %v1134 = vmul.f32 %v759, %v759
        %v1135 = vmul.f32 %v762, %v762
        %v1136 = vmul.f32 %v767, %v767
        %v1137 = vmul.f32 %v770, %v770
        %v1138 = vmul.f32 %v775, %v775
        %v1139 = vmul.f32 %v778, %v778
        %v1140 = vmul.f32 %v783, %v783
        %v1141 = vmul.f32 %v786, %v786
        %v1142 = vmul.f32 %v791, %v791
        %v1143 = vmul.f32 %v794, %v794
        %v1144 = vmul.f32 %v799, %v799
        %v1145 = vmul.f32 %v802, %v802
        %v1146 = vmul.f32 %v807, %v807
        %v1147 = vmul.f32 %v810, %v810
        %v1148 = vmul.f32 %v815, %v815
        %v1149 = vmul.f32 %v818, %v818
        %v1150 = vmul.f32 %v823, %v823
        %v1151 = vmul.f32 %v826, %v826
        %v1152 = vmul.f32 %v831, %v831
        %v1153 = vmul.f32 %v834, %v834
        %v1154 = vmul.f32 %v839, %v839
        %v1155 = vmul.f32 %v842, %v842
        %v1156 = vmul.f32 %v847, %v847
        %v1157 = vmul.f32 %v850, %v850
        %v1158 = vmul.f32 %v855, %v855
        %v1159 = vmul.f32 %v858, %v858
        %v1160 = vmul.f32 %v863, %v863
        %v1161 = vmul.f32 %v866, %v866
        %v1162 = vmul.f32 %v871, %v871
        %v1163 = vmul.f32 %v874, %v874
        %v1164 = vmul.f32 %v879, %v879
        %v1165 = vmul.f32 %v882, %v882
        %v1166 = vmul.f32 %v887, %v887
        %v1167 = vmul.f32 %v890, %v890
        %1168 = vmatprep.subr.mxu0 0.0
        %1169 = vmatpush1.msra.mxu0 %v1104
        %1170 = vmatprep.subr.mxu0 0.0
        %1171 = vmatpush1.msra.mxu0 %v1105
        %1172 = vmatprep.subr.mxu0 0.0
        %1173 = vmatpush1.msra.mxu0 %v1106
        %1174 = vmatprep.subr.mxu0 0.0
        %1175 = vmatpush1.msra.mxu0 %v1107
        %1176 = vmatprep.subr.mxu0 0.0
        %1177 = vmatpush1.msra.mxu0 %v1108
        %1178 = vmatprep.subr.mxu0 0.0
        %1179 = vmatpush1.msra.mxu0 %v1109
        %1180 = vmatprep.subr.mxu0 0.0
        %1181 = vmatpush1.msra.mxu0 %v1110
        %1182 = vmatprep.subr.mxu0 0.0
        %1183 = vmatpush1.msra.mxu0 %v1111
        %1184 = vmatprep.subr.mxu0 0.0
        %1185 = vmatpush1.msra.mxu0 %v1112
        %1186 = vmatprep.subr.mxu0 0.0
        %1187 = vmatpush1.msra.mxu0 %v1113
        %1188 = vmatprep.subr.mxu0 0.0
        %1189 = vmatpush1.msra.mxu0 %v1114
        %1190 = vmatprep.subr.mxu0 0.0
        %1191 = vmatpush1.msra.mxu0 %v1115
        %1192 = vmatprep.subr.mxu0 0.0
        %1193 = vmatpush1.msra.mxu0 %v1116
        %1194 = vmatprep.subr.mxu0 0.0
        %1195 = vmatpush1.msra.mxu0 %v1117
        %1196 = vmatprep.subr.mxu0 0.0
        %1197 = vmatpush1.msra.mxu0 %v1118
        %1198 = vmatprep.subr.mxu0 0.0
        %1199 = vmatpush1.msra.mxu0 %v1119
        %1200 = vmatprep.subr.mxu0 0.0
        %1201 = vmatpush1.msra.mxu0 %v1120
        %1202 = vmatprep.subr.mxu0 0.0
        %1203 = vmatpush1.msra.mxu0 %v1121
        %1204 = vmatprep.subr.mxu0 0.0
        %1205 = vmatpush1.msra.mxu0 %v1122
        %1206 = vmatprep.subr.mxu0 0.0
        %1207 = vmatpush1.msra.mxu0 %v1123
        %1208 = vmatprep.subr.mxu0 0.0
        %1209 = vmatpush1.msra.mxu0 %v1124
        %1210 = vmatprep.subr.mxu0 0.0
        %1211 = vmatpush1.msra.mxu0 %v1125
        %1212 = vmatprep.subr.mxu0 0.0
        %1213 = vmatpush1.msra.mxu0 %v1126
        %1214 = vmatprep.subr.mxu0 0.0
        %1215 = vmatpush1.msra.mxu0 %v1127
        %1216 = vmatprep.subr.mxu0 0.0
        %1217 = vmatpush1.msra.mxu0 %v1128
        %1218 = vmatprep.subr.mxu0 0.0
        %1219 = vmatpush1.msra.mxu0 %v1129
        %1220 = vmatprep.subr.mxu0 0.0
        %1221 = vmatpush1.msra.mxu0 %v1130
        %1222 = vmatprep.subr.mxu0 0.0
        %1223 = vmatpush1.msra.mxu0 %v1131
        %1224 = vmatprep.subr.mxu0 0.0
        %1225 = vmatpush1.msra.mxu0 %v1132
        %1226 = vmatprep.subr.mxu0 0.0
        %1227 = vmatpush1.msra.mxu0 %v1133
        %1228 = vmatprep.subr.mxu0 0.0
        %1229 = vmatpush1.msra.mxu0 %v1134
        %1230 = vmatprep.subr.mxu0 0.0
        %1231 = vmatpush1.msra.mxu0 %v1135
        %1232 = vmatprep.mubr.f32.mxu0 1.0
        %1233 = vmatmul.mubr.f32.gmra.mrb[0].mxu0 1.0
        %v1234 = vpop.f32.mrb[0].mxu0
        %v1235 = vadd.f32 0.0, %v1234
        %v1236 = vpop.f32.mrb[0].mxu0
        %1237 = vdwg.mxu0
        %1238 = vmatprep.subr.mxu0 0.0
        %1239 = vmatpush1.msra.mxu0 %v1136
        %1240 = vmatprep.subr.mxu0 0.0
        %1241 = vmatpush1.msra.mxu0 %v1137
        %1242 = vmatprep.subr.mxu0 0.0
        %1243 = vmatpush1.msra.mxu0 %v1138
        %1244 = vmatprep.subr.mxu0 0.0
        %1245 = vmatpush1.msra.mxu0 %v1139
        %1246 = vmatprep.subr.mxu0 0.0
        %1247 = vmatpush1.msra.mxu0 %v1140
        %1248 = vmatprep.subr.mxu0 0.0
        %1249 = vmatpush1.msra.mxu0 %v1141
        %1250 = vmatprep.subr.mxu0 0.0
        %1251 = vmatpush1.msra.mxu0 %v1142
        %1252 = vmatprep.subr.mxu0 0.0
        %1253 = vmatpush1.msra.mxu0 %v1143
        %1254 = vmatprep.subr.mxu0 0.0
        %1255 = vmatpush1.msra.mxu0 %v1144
        %1256 = vmatprep.subr.mxu0 0.0
        %1257 = vmatpush1.msra.mxu0 %v1145
        %1258 = vmatprep.subr.mxu0 0.0
        %1259 = vmatpush1.msra.mxu0 %v1146
        %1260 = vmatprep.subr.mxu0 0.0
        %1261 = vmatpush1.msra.mxu0 %v1147
        %1262 = vmatprep.subr.mxu0 0.0
        %1263 = vmatpush1.msra.mxu0 %v1148
        %1264 = vmatprep.subr.mxu0 0.0
        %1265 = vmatpush1.msra.mxu0 %v1149
        %1266 = vmatprep.subr.mxu0 0.0
        %1267 = vmatpush1.msra.mxu0 %v1150
        %1268 = vmatprep.subr.mxu0 0.0
        %1269 = vmatpush1.msra.mxu0 %v1151
        %1270 = vmatprep.subr.mxu0 0.0
        %1271 = vmatpush1.msra.mxu0 %v1152
        %1272 = vmatprep.subr.mxu0 0.0
        %1273 = vmatpush1.msra.mxu0 %v1153
        %1274 = vmatprep.subr.mxu0 0.0
        %1275 = vmatpush1.msra.mxu0 %v1154
        %1276 = vmatprep.subr.mxu0 0.0
        %1277 = vmatpush1.msra.mxu0 %v1155
        %1278 = vmatprep.subr.mxu0 0.0
        %1279 = vmatpush1.msra.mxu0 %v1156
        %1280 = vmatprep.subr.mxu0 0.0
        %1281 = vmatpush1.msra.mxu0 %v1157
        %1282 = vmatprep.subr.mxu0 0.0
        %1283 = vmatpush1.msra.mxu0 %v1158
        %1284 = vmatprep.subr.mxu0 0.0
        %1285 = vmatpush1.msra.mxu0 %v1159
        %1286 = vmatprep.subr.mxu0 0.0
        %1287 = vmatpush1.msra.mxu0 %v1160
        %1288 = vmatprep.subr.mxu0 0.0
        %1289 = vmatpush1.msra.mxu0 %v1161
        %1290 = vmatprep.subr.mxu0 0.0
        %1291 = vmatpush1.msra.mxu0 %v1162
        %1292 = vmatprep.subr.mxu0 0.0
        %1293 = vmatpush1.msra.mxu0 %v1163
        %1294 = vmatprep.subr.mxu0 0.0
        %1295 = vmatpush1.msra.mxu0 %v1164
        %1296 = vmatprep.subr.mxu0 0.0
        %1297 = vmatpush1.msra.mxu0 %v1165
        %1298 = vmatprep.subr.mxu0 0.0
        %1299 = vmatpush1.msra.mxu0 %v1166
        %1300 = vmatprep.subr.mxu0 0.0
        %1301 = vmatpush1.msra.mxu0 %v1167
        %1302 = vmatprep.mubr.f32.mxu0 1.0
        %1303 = vmatmul.mubr.f32.gmra.mrb[0].mxu0 1.0
        %v1304 = vpop.f32.mrb[0].mxu0
        %v1305 = vadd.f32 %v1235, %v1304
        %v1306 = vpop.f32.mrb[0].mxu0
        %1307 = vdwg.mxu0
        %v1308 = vadd.f32 %v1103, %v1305
        %1309 = vst [vmem:[#allocation4] sm:$0x1] %v1308
      $region40: #{block_forward.3} parent=35 // pred_fallthru
        _
      %p1310 = scmp.eq.s32.totalorder %s19, 1
      // Predicated region
      $region45: #{block_forward.3} parent=35 // pred_check
        %p1311 = pneg %p1310
      $region46: #{block_forward.3} parent=35 // pred_check_branch
        %1313 = sbr.rel (%p1311) target = $region48
      $region47: #{block_forward.3} parent=35 // pred_region
        %p1314 = scmp.eq.s32.totalorder %s20, 0
        // Predicated region
        $region49: #{block_forward.3} parent=47 // pred_check
          %p1315 = pneg %p1314
        $region50: #{block_forward.3} parent=47 // pred_check_branch
          %1317 = sbr.rel (%p1315) target = $region52
        $region51: #{block_forward.3} parent=47 // pred_region
          %v1318 = vld [vmem:[#allocation3] sm:$0x1]
          %v1319 = vmul.f32 %v1318, 0.001953125
          %v1320 = vld [vmem:[#allocation4] sm:$0x1]
          %v1321 = vmul.f32 %v1320, 0.001953125
          %v1322 = vmul.f32 %v1319, %v1319
          %v1323 = vsub.f32 %v1321, %v1322
          %v1324 = vmax.f32 %v1323, 0.0
          %v1325 = vld [vmem:[%s2] sm:$0x1]
          %v1326 = vadd.f32 %v1324, 1e-05
          %v1327 = vrsqrt.pop %v1326
          %v1328 = vmul.f32 %v1325, %v1327
          %1329 = vst [vmem:[#allocation5] sm:$0x1] %v1328
          %v1330 = vld [vmem:[%s3] sm:$0x1]
          %v1331 = vmul.f32 %v1319, %v1328
          %v1332 = vsub.f32 %v1330, %v1331
          %1333 = vst [vmem:[#allocation6] sm:$0x1] %v1332
        $region52: #{block_forward.3} parent=47 // pred_fallthru
          _
        %s1334 = smul.u32 %s20, 32
        %s1335 = smul.addr %s1334, 8
        %s1336 = scalar_lea.vmem [#allocation2], %s1335
        %v1337 = vld [vmem:[%s1336] sm:$0xff]
        %v1338 = vld [vmem:[%s1336 + $0x8] sm:$0xff]
        %v1339 = vld [vmem:[%s1336 + $0x10] sm:$0xff]
        %v1340 = vld [vmem:[%s1336 + $0x18] sm:$0xff]
        %v1341 = vld [vmem:[%s1336 + $0x20] sm:$0xff]
        %v1342 = vld [vmem:[%s1336 + $0x28] sm:$0xff]
        %v1343 = vld [vmem:[%s1336 + $0x30] sm:$0xff]
        %v1344 = vld [vmem:[%s1336 + $0x38] sm:$0xff]
        %v1345 = vld [vmem:[%s1336 + $0x40] sm:$0xff]
        %v1346 = vld [vmem:[%s1336 + $0x48] sm:$0xff]
        %v1347 = vld [vmem:[%s1336 + $0x50] sm:$0xff]
        %v1348 = vld [vmem:[%s1336 + $0x58] sm:$0xff]
        %v1349 = vld [vmem:[%s1336 + $0x60] sm:$0xff]
        %v1350 = vld [vmem:[%s1336 + $0x68] sm:$0xff]
        %v1351 = vld [vmem:[%s1336 + $0x70] sm:$0xff]
        %v1352 = vld [vmem:[%s1336 + $0x78] sm:$0xff]
        %v1353 = vld [vmem:[%s1336 + $0x80] sm:$0xff]
        %v1354 = vld [vmem:[%s1336 + $0x88] sm:$0xff]
        %v1355 = vld [vmem:[%s1336 + $0x90] sm:$0xff]
        %v1356 = vld [vmem:[%s1336 + $0x98] sm:$0xff]
        %v1357 = vld [vmem:[%s1336 + $0xa0] sm:$0xff]
        %v1358 = vld [vmem:[%s1336 + $0xa8] sm:$0xff]
        %v1359 = vld [vmem:[%s1336 + $0xb0] sm:$0xff]
        %v1360 = vld [vmem:[%s1336 + $0xb8] sm:$0xff]
        %v1361 = vld [vmem:[%s1336 + $0xc0] sm:$0xff]
        %v1362 = vld [vmem:[%s1336 + $0xc8] sm:$0xff]
        %v1363 = vld [vmem:[%s1336 + $0xd0] sm:$0xff]
        %v1364 = vld [vmem:[%s1336 + $0xd8] sm:$0xff]
        %v1365 = vld [vmem:[%s1336 + $0xe0] sm:$0xff]
        %v1366 = vld [vmem:[%s1336 + $0xe8] sm:$0xff]
        %v1367 = vld [vmem:[%s1336 + $0xf0] sm:$0xff]
        %v1368 = vld [vmem:[%s1336 + $0xf8] sm:$0xff]
        %v1369 = vunpack.c.l.bf16 %v1337
        %v1370 = vunpack.c.h.bf16 %v1337
        %v1371 = vunpack.c.l.bf16 %v1338
        %v1372 = vunpack.c.h.bf16 %v1338
        %v1373 = vunpack.c.l.bf16 %v1339
        %v1374 = vunpack.c.h.bf16 %v1339
        %v1375 = vunpack.c.l.bf16 %v1340
        %v1376 = vunpack.c.h.bf16 %v1340
        %v1377 = vunpack.c.l.bf16 %v1341
        %v1378 = vunpack.c.h.bf16 %v1341
        %v1379 = vunpack.c.l.bf16 %v1342
        %v1380 = vunpack.c.h.bf16 %v1342
        %v1381 = vunpack.c.l.bf16 %v1343
        %v1382 = vunpack.c.h.bf16 %v1343
        %v1383 = vunpack.c.l.bf16 %v1344
        %v1384 = vunpack.c.h.bf16 %v1344
        %v1385 = vunpack.c.l.bf16 %v1345
        %v1386 = vunpack.c.h.bf16 %v1345
        %v1387 = vunpack.c.l.bf16 %v1346
        %v1388 = vunpack.c.h.bf16 %v1346
        %v1389 = vunpack.c.l.bf16 %v1347
        %v1390 = vunpack.c.h.bf16 %v1347
        %v1391 = vunpack.c.l.bf16 %v1348
        %v1392 = vunpack.c.h.bf16 %v1348
        %v1393 = vunpack.c.l.bf16 %v1349
        %v1394 = vunpack.c.h.bf16 %v1349
        %v1395 = vunpack.c.l.bf16 %v1350
        %v1396 = vunpack.c.h.bf16 %v1350
        %v1397 = vunpack.c.l.bf16 %v1351
        %v1398 = vunpack.c.h.bf16 %v1351
        %v1399 = vunpack.c.l.bf16 %v1352
        %v1400 = vunpack.c.h.bf16 %v1352
        %v1401 = vunpack.c.l.bf16 %v1353
        %v1402 = vunpack.c.h.bf16 %v1353
        %v1403 = vunpack.c.l.bf16 %v1354
        %v1404 = vunpack.c.h.bf16 %v1354
        %v1405 = vunpack.c.l.bf16 %v1355
        %v1406 = vunpack.c.h.bf16 %v1355
        %v1407 = vunpack.c.l.bf16 %v1356
        %v1408 = vunpack.c.h.bf16 %v1356
        %v1409 = vunpack.c.l.bf16 %v1357
        %v1410 = vunpack.c.h.bf16 %v1357
        %v1411 = vunpack.c.l.bf16 %v1358
        %v1412 = vunpack.c.h.bf16 %v1358
        %v1413 = vunpack.c.l.bf16 %v1359
        %v1414 = vunpack.c.h.bf16 %v1359
        %v1415 = vunpack.c.l.bf16 %v1360
        %v1416 = vunpack.c.h.bf16 %v1360
        %v1417 = vunpack.c.l.bf16 %v1361
        %v1418 = vunpack.c.h.bf16 %v1361
        %v1419 = vunpack.c.l.bf16 %v1362
        %v1420 = vunpack.c.h.bf16 %v1362
        %v1421 = vunpack.c.l.bf16 %v1363
        %v1422 = vunpack.c.h.bf16 %v1363
        %v1423 = vunpack.c.l.bf16 %v1364
        %v1424 = vunpack.c.h.bf16 %v1364
        %v1425 = vunpack.c.l.bf16 %v1365
        %v1426 = vunpack.c.h.bf16 %v1365
        %v1427 = vunpack.c.l.bf16 %v1366
        %v1428 = vunpack.c.h.bf16 %v1366
        %v1429 = vunpack.c.l.bf16 %v1367
        %v1430 = vunpack.c.h.bf16 %v1367
        %v1431 = vunpack.c.l.bf16 %v1368
        %v1432 = vunpack.c.h.bf16 %v1368
        %v1433 = vld [vmem:[#allocation5] sm:$0x1]
        %v1435 = vlaneseq
        %v1436 = vshrl.u32 %v1435, 7
        %v1437 = vsub.s32 0, %v1436
        %v1438 = vrot.slane %v1433, %v1437
        %v1440 = vmul.f32 %v1369, %v1438
        %v1441 = vmul.f32 %v1370, %v1438
        %v1442 = vmul.f32 %v1371, %v1438
        %v1443 = vmul.f32 %v1372, %v1438
        %v1444 = vmul.f32 %v1373, %v1438
        %v1445 = vmul.f32 %v1374, %v1438
        %v1446 = vmul.f32 %v1375, %v1438
        %v1447 = vmul.f32 %v1376, %v1438
        %v1448 = vmul.f32 %v1377, %v1438
        %v1449 = vmul.f32 %v1378, %v1438
        %v1450 = vmul.f32 %v1379, %v1438
        %v1451 = vmul.f32 %v1380, %v1438
        %v1452 = vmul.f32 %v1381, %v1438
        %v1453 = vmul.f32 %v1382, %v1438
        %v1454 = vmul.f32 %v1383, %v1438
        %v1455 = vmul.f32 %v1384, %v1438
        %v1456 = vmul.f32 %v1385, %v1438
        %v1457 = vmul.f32 %v1386, %v1438
        %v1458 = vmul.f32 %v1387, %v1438
        %v1459 = vmul.f32 %v1388, %v1438
        %v1460 = vmul.f32 %v1389, %v1438
        %v1461 = vmul.f32 %v1390, %v1438
        %v1462 = vmul.f32 %v1391, %v1438
        %v1463 = vmul.f32 %v1392, %v1438
        %v1464 = vmul.f32 %v1393, %v1438
        %v1465 = vmul.f32 %v1394, %v1438
        %v1466 = vmul.f32 %v1395, %v1438
        %v1467 = vmul.f32 %v1396, %v1438
        %v1468 = vmul.f32 %v1397, %v1438
        %v1469 = vmul.f32 %v1398, %v1438
        %v1470 = vmul.f32 %v1399, %v1438
        %v1471 = vmul.f32 %v1400, %v1438
        %v1472 = vmul.f32 %v1401, %v1438
        %v1473 = vmul.f32 %v1402, %v1438
        %v1474 = vmul.f32 %v1403, %v1438
        %v1475 = vmul.f32 %v1404, %v1438
        %v1476 = vmul.f32 %v1405, %v1438
        %v1477 = vmul.f32 %v1406, %v1438
        %v1478 = vmul.f32 %v1407, %v1438
        %v1479 = vmul.f32 %v1408, %v1438
        %v1480 = vmul.f32 %v1409, %v1438
        %v1481 = vmul.f32 %v1410, %v1438
        %v1482 = vmul.f32 %v1411, %v1438
        %v1483 = vmul.f32 %v1412, %v1438
        %v1484 = vmul.f32 %v1413, %v1438
        %v1485 = vmul.f32 %v1414, %v1438
        %v1486 = vmul.f32 %v1415, %v1438
        %v1487 = vmul.f32 %v1416, %v1438
        %v1488 = vmul.f32 %v1417, %v1438
        %v1489 = vmul.f32 %v1418, %v1438
        %v1490 = vmul.f32 %v1419, %v1438
        %v1491 = vmul.f32 %v1420, %v1438
        %v1492 = vmul.f32 %v1421, %v1438
        %v1493 = vmul.f32 %v1422, %v1438
        %v1494 = vmul.f32 %v1423, %v1438
        %v1495 = vmul.f32 %v1424, %v1438
        %v1496 = vmul.f32 %v1425, %v1438
        %v1497 = vmul.f32 %v1426, %v1438
        %v1498 = vmul.f32 %v1427, %v1438
        %v1499 = vmul.f32 %v1428, %v1438
        %v1500 = vmul.f32 %v1429, %v1438
        %v1501 = vmul.f32 %v1430, %v1438
        %v1502 = vmul.f32 %v1431, %v1438
        %v1503 = vmul.f32 %v1432, %v1438
        %v1504 = vld [vmem:[#allocation6] sm:$0x1]
        %v1506 = vlaneseq
        %v1507 = vshrl.u32 %v1506, 7
        %v1508 = vsub.s32 0, %v1507
        %v1509 = vrot.slane %v1504, %v1508
        %v1511 = vadd.f32 %v1440, %v1509
        %v1512 = vadd.f32 %v1441, %v1509
        %v1513 = vadd.f32 %v1442, %v1509
        %v1514 = vadd.f32 %v1443, %v1509
        %v1515 = vadd.f32 %v1444, %v1509
        %v1516 = vadd.f32 %v1445, %v1509
        %v1517 = vadd.f32 %v1446, %v1509
        %v1518 = vadd.f32 %v1447, %v1509
        %v1519 = vadd.f32 %v1448, %v1509
        %v1520 = vadd.f32 %v1449, %v1509
        %v1521 = vadd.f32 %v1450, %v1509
        %v1522 = vadd.f32 %v1451, %v1509
        %v1523 = vadd.f32 %v1452, %v1509
        %v1524 = vadd.f32 %v1453, %v1509
        %v1525 = vadd.f32 %v1454, %v1509
        %v1526 = vadd.f32 %v1455, %v1509
        %v1527 = vadd.f32 %v1456, %v1509
        %v1528 = vadd.f32 %v1457, %v1509
        %v1529 = vadd.f32 %v1458, %v1509
        %v1530 = vadd.f32 %v1459, %v1509
        %v1531 = vadd.f32 %v1460, %v1509
        %v1532 = vadd.f32 %v1461, %v1509
        %v1533 = vadd.f32 %v1462, %v1509
        %v1534 = vadd.f32 %v1463, %v1509
        %v1535 = vadd.f32 %v1464, %v1509
        %v1536 = vadd.f32 %v1465, %v1509
        %v1537 = vadd.f32 %v1466, %v1509
        %v1538 = vadd.f32 %v1467, %v1509
        %v1539 = vadd.f32 %v1468, %v1509
        %v1540 = vadd.f32 %v1469, %v1509
        %v1541 = vadd.f32 %v1470, %v1509
        %v1542 = vadd.f32 %v1471, %v1509
        %v1543 = vadd.f32 %v1472, %v1509
        %v1544 = vadd.f32 %v1473, %v1509
        %v1545 = vadd.f32 %v1474, %v1509
        %v1546 = vadd.f32 %v1475, %v1509
        %v1547 = vadd.f32 %v1476, %v1509
        %v1548 = vadd.f32 %v1477, %v1509
        %v1549 = vadd.f32 %v1478, %v1509
        %v1550 = vadd.f32 %v1479, %v1509
        %v1551 = vadd.f32 %v1480, %v1509
        %v1552 = vadd.f32 %v1481, %v1509
        %v1553 = vadd.f32 %v1482, %v1509
        %v1554 = vadd.f32 %v1483, %v1509
        %v1555 = vadd.f32 %v1484, %v1509
        %v1556 = vadd.f32 %v1485, %v1509
        %v1557 = vadd.f32 %v1486, %v1509
        %v1558 = vadd.f32 %v1487, %v1509
        %v1559 = vadd.f32 %v1488, %v1509
        %v1560 = vadd.f32 %v1489, %v1509
        %v1561 = vadd.f32 %v1490, %v1509
        %v1562 = vadd.f32 %v1491, %v1509
        %v1563 = vadd.f32 %v1492, %v1509
        %v1564 = vadd.f32 %v1493, %v1509
        %v1565 = vadd.f32 %v1494, %v1509
        %v1566 = vadd.f32 %v1495, %v1509
        %v1567 = vadd.f32 %v1496, %v1509
        %v1568 = vadd.f32 %v1497, %v1509
        %v1569 = vadd.f32 %v1498, %v1509
        %v1570 = vadd.f32 %v1499, %v1509
        %v1571 = vadd.f32 %v1500, %v1509
        %v1572 = vadd.f32 %v1501, %v1509
        %v1573 = vadd.f32 %v1502, %v1509
        %v1574 = vadd.f32 %v1503, %v1509
        %v1575 = vmax.f32 %v1511, 0.0
        %v1576 = vmax.f32 %v1512, 0.0
        %v1577 = vmax.f32 %v1513, 0.0
        %v1578 = vmax.f32 %v1514, 0.0
        %v1579 = vmax.f32 %v1515, 0.0
        %v1580 = vmax.f32 %v1516, 0.0
        %v1581 = vmax.f32 %v1517, 0.0
        %v1582 = vmax.f32 %v1518, 0.0
        %v1583 = vmax.f32 %v1519, 0.0
        %v1584 = vmax.f32 %v1520, 0.0
        %v1585 = vmax.f32 %v1521, 0.0
        %v1586 = vmax.f32 %v1522, 0.0
        %v1587 = vmax.f32 %v1523, 0.0
        %v1588 = vmax.f32 %v1524, 0.0
        %v1589 = vmax.f32 %v1525, 0.0
        %v1590 = vmax.f32 %v1526, 0.0
        %v1591 = vmax.f32 %v1527, 0.0
        %v1592 = vmax.f32 %v1528, 0.0
        %v1593 = vmax.f32 %v1529, 0.0
        %v1594 = vmax.f32 %v1530, 0.0
        %v1595 = vmax.f32 %v1531, 0.0
        %v1596 = vmax.f32 %v1532, 0.0
        %v1597 = vmax.f32 %v1533, 0.0
        %v1598 = vmax.f32 %v1534, 0.0
        %v1599 = vmax.f32 %v1535, 0.0
        %v1600 = vmax.f32 %v1536, 0.0
        %v1601 = vmax.f32 %v1537, 0.0
        %v1602 = vmax.f32 %v1538, 0.0
        %v1603 = vmax.f32 %v1539, 0.0
        %v1604 = vmax.f32 %v1540, 0.0
        %v1605 = vmax.f32 %v1541, 0.0
        %v1606 = vmax.f32 %v1542, 0.0
        %v1607 = vmax.f32 %v1543, 0.0
        %v1608 = vmax.f32 %v1544, 0.0
        %v1609 = vmax.f32 %v1545, 0.0
        %v1610 = vmax.f32 %v1546, 0.0
        %v1611 = vmax.f32 %v1547, 0.0
        %v1612 = vmax.f32 %v1548, 0.0
        %v1613 = vmax.f32 %v1549, 0.0
        %v1614 = vmax.f32 %v1550, 0.0
        %v1615 = vmax.f32 %v1551, 0.0
        %v1616 = vmax.f32 %v1552, 0.0
        %v1617 = vmax.f32 %v1553, 0.0
        %v1618 = vmax.f32 %v1554, 0.0
        %v1619 = vmax.f32 %v1555, 0.0
        %v1620 = vmax.f32 %v1556, 0.0
        %v1621 = vmax.f32 %v1557, 0.0
        %v1622 = vmax.f32 %v1558, 0.0
        %v1623 = vmax.f32 %v1559, 0.0
        %v1624 = vmax.f32 %v1560, 0.0
        %v1625 = vmax.f32 %v1561, 0.0
        %v1626 = vmax.f32 %v1562, 0.0
        %v1627 = vmax.f32 %v1563, 0.0
        %v1628 = vmax.f32 %v1564, 0.0
        %v1629 = vmax.f32 %v1565, 0.0
        %v1630 = vmax.f32 %v1566, 0.0
        %v1631 = vmax.f32 %v1567, 0.0
        %v1632 = vmax.f32 %v1568, 0.0
        %v1633 = vmax.f32 %v1569, 0.0
        %v1634 = vmax.f32 %v1570, 0.0
        %v1635 = vmax.f32 %v1571, 0.0
        %v1636 = vmax.f32 %v1572, 0.0
        %v1637 = vmax.f32 %v1573, 0.0
        %v1638 = vmax.f32 %v1574, 0.0
        %v1639 = vpack.c.bf16 %v1576, %v1575
        %v1640 = vpack.c.bf16 %v1578, %v1577
        %v1641 = vpack.c.bf16 %v1580, %v1579
        %v1642 = vpack.c.bf16 %v1582, %v1581
        %v1643 = vpack.c.bf16 %v1584, %v1583
        %v1644 = vpack.c.bf16 %v1586, %v1585
        %v1645 = vpack.c.bf16 %v1588, %v1587
        %v1646 = vpack.c.bf16 %v1590, %v1589
        %v1647 = vpack.c.bf16 %v1592, %v1591
        %v1648 = vpack.c.bf16 %v1594, %v1593
        %v1649 = vpack.c.bf16 %v1596, %v1595
        %v1650 = vpack.c.bf16 %v1598, %v1597
        %v1651 = vpack.c.bf16 %v1600, %v1599
        %v1652 = vpack.c.bf16 %v1602, %v1601
        %v1653 = vpack.c.bf16 %v1604, %v1603
        %v1654 = vpack.c.bf16 %v1606, %v1605
        %v1655 = vpack.c.bf16 %v1608, %v1607
        %v1656 = vpack.c.bf16 %v1610, %v1609
        %v1657 = vpack.c.bf16 %v1612, %v1611
        %v1658 = vpack.c.bf16 %v1614, %v1613
        %v1659 = vpack.c.bf16 %v1616, %v1615
        %v1660 = vpack.c.bf16 %v1618, %v1617
        %v1661 = vpack.c.bf16 %v1620, %v1619
        %v1662 = vpack.c.bf16 %v1622, %v1621
        %v1663 = vpack.c.bf16 %v1624, %v1623
        %v1664 = vpack.c.bf16 %v1626, %v1625
        %v1665 = vpack.c.bf16 %v1628, %v1627
        %v1666 = vpack.c.bf16 %v1630, %v1629
        %v1667 = vpack.c.bf16 %v1632, %v1631
        %v1668 = vpack.c.bf16 %v1634, %v1633
        %v1669 = vpack.c.bf16 %v1636, %v1635
        %v1670 = vpack.c.bf16 %v1638, %v1637
        %v1703 = vunpack.c.l.b16 %v1639
        %v1704 = vunpack.c.h.b16 %v1639
        %v1705 = vunpack.c.l.b16 %v1640
        %v1706 = vunpack.c.h.b16 %v1640
        %v1707 = vunpack.c.l.b16 %v1641
        %v1708 = vunpack.c.h.b16 %v1641
        %v1709 = vunpack.c.l.b16 %v1642
        %v1710 = vunpack.c.h.b16 %v1642
        %v1711 = vunpack.c.l.b16 %v1643
        %v1712 = vunpack.c.h.b16 %v1643
        %v1713 = vunpack.c.l.b16 %v1644
        %v1714 = vunpack.c.h.b16 %v1644
        %v1715 = vunpack.c.l.b16 %v1645
        %v1716 = vunpack.c.h.b16 %v1645
        %v1717 = vunpack.c.l.b16 %v1646
        %v1718 = vunpack.c.h.b16 %v1646
        %v1719 = vunpack.c.l.b16 %v1647
        %v1720 = vunpack.c.h.b16 %v1647
        %v1721 = vunpack.c.l.b16 %v1648
        %v1722 = vunpack.c.h.b16 %v1648
        %v1723 = vunpack.c.l.b16 %v1649
        %v1724 = vunpack.c.h.b16 %v1649
        %v1725 = vunpack.c.l.b16 %v1650
        %v1726 = vunpack.c.h.b16 %v1650
        %v1727 = vunpack.c.l.b16 %v1651
        %v1728 = vunpack.c.h.b16 %v1651
        %v1729 = vunpack.c.l.b16 %v1652
        %v1730 = vunpack.c.h.b16 %v1652
        %v1731 = vunpack.c.l.b16 %v1653
        %v1732 = vunpack.c.h.b16 %v1653
        %v1733 = vunpack.c.l.b16 %v1654
        %v1734 = vunpack.c.h.b16 %v1654
        %v1735 = vunpack.c.l.b16 %v1655
        %v1736 = vunpack.c.h.b16 %v1655
        %v1737 = vunpack.c.l.b16 %v1656
        %v1738 = vunpack.c.h.b16 %v1656
        %v1739 = vunpack.c.l.b16 %v1657
        %v1740 = vunpack.c.h.b16 %v1657
        %v1741 = vunpack.c.l.b16 %v1658
        %v1742 = vunpack.c.h.b16 %v1658
        %v1743 = vunpack.c.l.b16 %v1659
        %v1744 = vunpack.c.h.b16 %v1659
        %v1745 = vunpack.c.l.b16 %v1660
        %v1746 = vunpack.c.h.b16 %v1660
        %v1747 = vunpack.c.l.b16 %v1661
        %v1748 = vunpack.c.h.b16 %v1661
        %v1749 = vunpack.c.l.b16 %v1662
        %v1750 = vunpack.c.h.b16 %v1662
        %v1751 = vunpack.c.l.b16 %v1663
        %v1752 = vunpack.c.h.b16 %v1663
        %v1753 = vunpack.c.l.b16 %v1664
        %v1754 = vunpack.c.h.b16 %v1664
        %v1755 = vunpack.c.l.b16 %v1665
        %v1756 = vunpack.c.h.b16 %v1665
        %v1757 = vunpack.c.l.b16 %v1666
        %v1758 = vunpack.c.h.b16 %v1666
        %v1759 = vunpack.c.l.b16 %v1667
        %v1760 = vunpack.c.h.b16 %v1667
        %v1761 = vunpack.c.l.b16 %v1668
        %v1762 = vunpack.c.h.b16 %v1668
        %v1763 = vunpack.c.l.b16 %v1669
        %v1764 = vunpack.c.h.b16 %v1669
        %v1765 = vunpack.c.l.b16 %v1670
        %v1766 = vunpack.c.h.b16 %v1670
        %v1767 = vpack.c.b16 %v1703, %v1703
        %v1768 = vpack.c.b16 %v1704, %v1704
        %v1769 = vpack.c.b16 %v1705, %v1705
        %v1770 = vpack.c.b16 %v1706, %v1706
        %v1771 = vpack.c.b16 %v1707, %v1707
        %v1772 = vpack.c.b16 %v1708, %v1708
        %v1773 = vpack.c.b16 %v1709, %v1709
        %v1774 = vpack.c.b16 %v1710, %v1710
        %v1775 = vpack.c.b16 %v1711, %v1711
        %v1776 = vpack.c.b16 %v1712, %v1712
        %v1777 = vpack.c.b16 %v1713, %v1713
        %v1778 = vpack.c.b16 %v1714, %v1714
        %v1779 = vpack.c.b16 %v1715, %v1715
        %v1780 = vpack.c.b16 %v1716, %v1716
        %v1781 = vpack.c.b16 %v1717, %v1717
        %v1782 = vpack.c.b16 %v1718, %v1718
        %v1783 = vpack.c.b16 %v1719, %v1719
        %v1784 = vpack.c.b16 %v1720, %v1720
        %v1785 = vpack.c.b16 %v1721, %v1721
        %v1786 = vpack.c.b16 %v1722, %v1722
        %v1787 = vpack.c.b16 %v1723, %v1723
        %v1788 = vpack.c.b16 %v1724, %v1724
        %v1789 = vpack.c.b16 %v1725, %v1725
        %v1790 = vpack.c.b16 %v1726, %v1726
        %v1791 = vpack.c.b16 %v1727, %v1727
        %v1792 = vpack.c.b16 %v1728, %v1728
        %v1793 = vpack.c.b16 %v1729, %v1729
        %v1794 = vpack.c.b16 %v1730, %v1730
        %v1795 = vpack.c.b16 %v1731, %v1731
        %v1796 = vpack.c.b16 %v1732, %v1732
        %v1797 = vpack.c.b16 %v1733, %v1733
        %v1798 = vpack.c.b16 %v1734, %v1734
        %v1799 = vpack.c.b16 %v1735, %v1735
        %v1800 = vpack.c.b16 %v1736, %v1736
        %v1801 = vpack.c.b16 %v1737, %v1737
        %v1802 = vpack.c.b16 %v1738, %v1738
        %v1803 = vpack.c.b16 %v1739, %v1739
        %v1804 = vpack.c.b16 %v1740, %v1740
        %v1805 = vpack.c.b16 %v1741, %v1741
        %v1806 = vpack.c.b16 %v1742, %v1742
        %v1807 = vpack.c.b16 %v1743, %v1743
        %v1808 = vpack.c.b16 %v1744, %v1744
        %v1809 = vpack.c.b16 %v1745, %v1745
        %v1810 = vpack.c.b16 %v1746, %v1746
        %v1811 = vpack.c.b16 %v1747, %v1747
        %v1812 = vpack.c.b16 %v1748, %v1748
        %v1813 = vpack.c.b16 %v1749, %v1749
        %v1814 = vpack.c.b16 %v1750, %v1750
        %v1815 = vpack.c.b16 %v1751, %v1751
        %v1816 = vpack.c.b16 %v1752, %v1752
        %v1817 = vpack.c.b16 %v1753, %v1753
        %v1818 = vpack.c.b16 %v1754, %v1754
        %v1819 = vpack.c.b16 %v1755, %v1755
        %v1820 = vpack.c.b16 %v1756, %v1756
        %v1821 = vpack.c.b16 %v1757, %v1757
        %v1822 = vpack.c.b16 %v1758, %v1758
        %v1823 = vpack.c.b16 %v1759, %v1759
        %v1824 = vpack.c.b16 %v1760, %v1760
        %v1825 = vpack.c.b16 %v1761, %v1761
        %v1826 = vpack.c.b16 %v1762, %v1762
        %v1827 = vpack.c.b16 %v1763, %v1763
        %v1828 = vpack.c.b16 %v1764, %v1764
        %v1829 = vpack.c.b16 %v1765, %v1765
        %v1830 = vpack.c.b16 %v1766, %v1766
        %1895 = vst [vmem:[%s229] sm:$0xf] %v1767
        %1896 = vst [vmem:[%s229 + $0x4] sm:$0xf] %v1768
        %1897 = vst [vmem:[%s229 + $0x8] sm:$0xf] %v1769
        %1898 = vst [vmem:[%s229 + $0xc] sm:$0xf] %v1770
        %1899 = vst [vmem:[%s229 + $0x10] sm:$0xf] %v1771
        %1900 = vst [vmem:[%s229 + $0x14] sm:$0xf] %v1772
        %1901 = vst [vmem:[%s229 + $0x18] sm:$0xf] %v1773
        %1902 = vst [vmem:[%s229 + $0x1c] sm:$0xf] %v1774
        %1903 = vst [vmem:[%s229 + $0x20] sm:$0xf] %v1775
        %1904 = vst [vmem:[%s229 + $0x24] sm:$0xf] %v1776
        %1905 = vst [vmem:[%s229 + $0x28] sm:$0xf] %v1777
        %1906 = vst [vmem:[%s229 + $0x2c] sm:$0xf] %v1778
        %1907 = vst [vmem:[%s229 + $0x30] sm:$0xf] %v1779
        %1908 = vst [vmem:[%s229 + $0x34] sm:$0xf] %v1780
        %1909 = vst [vmem:[%s229 + $0x38] sm:$0xf] %v1781
        %1910 = vst [vmem:[%s229 + $0x3c] sm:$0xf] %v1782
        %1911 = vst [vmem:[%s229 + $0x40] sm:$0xf] %v1783
        %1912 = vst [vmem:[%s229 + $0x44] sm:$0xf] %v1784
        %1913 = vst [vmem:[%s229 + $0x48] sm:$0xf] %v1785
        %1914 = vst [vmem:[%s229 + $0x4c] sm:$0xf] %v1786
        %1915 = vst [vmem:[%s229 + $0x50] sm:$0xf] %v1787
        %1916 = vst [vmem:[%s229 + $0x54] sm:$0xf] %v1788
        %1917 = vst [vmem:[%s229 + $0x58] sm:$0xf] %v1789
        %1918 = vst [vmem:[%s229 + $0x5c] sm:$0xf] %v1790
        %1919 = vst [vmem:[%s229 + $0x60] sm:$0xf] %v1791
        %1920 = vst [vmem:[%s229 + $0x64] sm:$0xf] %v1792
        %1921 = vst [vmem:[%s229 + $0x68] sm:$0xf] %v1793
        %1922 = vst [vmem:[%s229 + $0x6c] sm:$0xf] %v1794
        %1923 = vst [vmem:[%s229 + $0x70] sm:$0xf] %v1795
        %1924 = vst [vmem:[%s229 + $0x74] sm:$0xf] %v1796
        %1925 = vst [vmem:[%s229 + $0x78] sm:$0xf] %v1797
        %1926 = vst [vmem:[%s229 + $0x7c] sm:$0xf] %v1798
        %1927 = vst [vmem:[%s229 + $0x80] sm:$0xf] %v1799
        %1928 = vst [vmem:[%s229 + $0x84] sm:$0xf] %v1800
        %1929 = vst [vmem:[%s229 + $0x88] sm:$0xf] %v1801
        %1930 = vst [vmem:[%s229 + $0x8c] sm:$0xf] %v1802
        %1931 = vst [vmem:[%s229 + $0x90] sm:$0xf] %v1803
        %1932 = vst [vmem:[%s229 + $0x94] sm:$0xf] %v1804
        %1933 = vst [vmem:[%s229 + $0x98] sm:$0xf] %v1805
        %1934 = vst [vmem:[%s229 + $0x9c] sm:$0xf] %v1806
        %1935 = vst [vmem:[%s229 + $0xa0] sm:$0xf] %v1807
        %1936 = vst [vmem:[%s229 + $0xa4] sm:$0xf] %v1808
        %1937 = vst [vmem:[%s229 + $0xa8] sm:$0xf] %v1809
        %1938 = vst [vmem:[%s229 + $0xac] sm:$0xf] %v1810
        %1939 = vst [vmem:[%s229 + $0xb0] sm:$0xf] %v1811
        %1940 = vst [vmem:[%s229 + $0xb4] sm:$0xf] %v1812
        %1941 = vst [vmem:[%s229 + $0xb8] sm:$0xf] %v1813
        %1942 = vst [vmem:[%s229 + $0xbc] sm:$0xf] %v1814
        %1943 = vst [vmem:[%s229 + $0xc0] sm:$0xf] %v1815
        %1944 = vst [vmem:[%s229 + $0xc4] sm:$0xf] %v1816
        %1945 = vst [vmem:[%s229 + $0xc8] sm:$0xf] %v1817
        %1946 = vst [vmem:[%s229 + $0xcc] sm:$0xf] %v1818
        %1947 = vst [vmem:[%s229 + $0xd0] sm:$0xf] %v1819
        %1948 = vst [vmem:[%s229 + $0xd4] sm:$0xf] %v1820
        %1949 = vst [vmem:[%s229 + $0xd8] sm:$0xf] %v1821
        %1950 = vst [vmem:[%s229 + $0xdc] sm:$0xf] %v1822
        %1951 = vst [vmem:[%s229 + $0xe0] sm:$0xf] %v1823
        %1952 = vst [vmem:[%s229 + $0xe4] sm:$0xf] %v1824
        %1953 = vst [vmem:[%s229 + $0xe8] sm:$0xf] %v1825
        %1954 = vst [vmem:[%s229 + $0xec] sm:$0xf] %v1826
        %1955 = vst [vmem:[%s229 + $0xf0] sm:$0xf] %v1827
        %1956 = vst [vmem:[%s229 + $0xf4] sm:$0xf] %v1828
        %1957 = vst [vmem:[%s229 + $0xf8] sm:$0xf] %v1829
        %1958 = vst [vmem:[%s229 + $0xfc] sm:$0xf] %v1830
      $region48: #{block_forward.3} parent=35 // pred_fallthru
        _
      %s1959 = smul.u32 %s20, %s19
      %s1960 = smul.u32 64, %s1959
      %p1961 = scmp.lt.s32.totalorder %s1960, 63
      %s1962 = scalar_select %p1961, %s1960, 63
      %s1963 = smul.addr %s1962, 4
      %s1964 = scalar_lea.vmem %s4, %s1963
      // Predicated region
      $region53: #{block_forward.3} parent=35 // pred_check
        %p1965 = pneg %p140
      $region54: #{block_forward.3} parent=35 // pred_check_branch
        %1967 = sbr.rel (%p1965) target = $region56
      $region55: #{block_forward.3} parent=35 // pred_region
        %s1968 = smul.u32 %s20, %s19
        %s1969 = smul.u32 64, %s1968
      $region56: #{block_forward.3} parent=35 // pred_fallthru
        _
    $region36: #{block_forward.3} parent=5 // pred_fallthru
      _
    %p1970 = scmp.le.s32.totalorder 2, %s10
    // Predicated region
    $region57: #{block_forward.3} parent=5 // pred_check
      %p1971 = pneg %p1970
    $region58: #{block_forward.3} parent=5 // pred_check_branch
      %1973 = sbr.rel (%p1971) target = $region60
    $region59: #{block_forward.3} parent=5 // pred_region
      %s1974 = ssub.s32 %s10, 2
      // Predicated region
      $region61: #{block_forward.3} parent=59 // pred_check
        %p1975 = pneg %p146
      $region62: #{block_forward.3} parent=59 // pred_check_branch
        %1977 = sbr.rel (%p1975) target = $region64
      $region63: #{block_forward.3} parent=59 // pred_region
        %s1978 = smul.u32 %s22, %s21
        %s1979 = smul.u32 64, %s1978
        %p1980 = scmp.lt.s32.totalorder %s1979, 63
        %s1981 = scalar_select %p1980, %s1979, 63
        %s1982 = smul.addr %s1981, 4
        %s1983 = scalar_lea.vmem %s4, %s1982
      $region64: #{block_forward.3} parent=59 // pred_fallthru
        _
    $region60: #{block_forward.3} parent=5 // pred_fallthru
      _
  $region6: #{block_forward.3} parent=0 // loop_footer
    %s14 = sadd.s32 1, %s10
  $region7: #{block_forward.3} parent=0 // loop_footer_branch
    %9 = sbr.rel target = $region3
  $region8: #{block_forward.3} parent=0 // loop_exit
    _

</llo_original>
